<compile_context>
chip_gen: v7x
topology: tpu7x:2x2x1
jax: 0.10.0
libtpu: 0.0.40
codegen_flags: <defaults>
</compile_context>

<pallas_src>
import jax
import jax.numpy as jnp
from jax import lax
from jax.experimental import pallas as pl
from jax.experimental.pallas import tpu as pltpu

HSIZE = 32          # hidden_size (PyTorch default 300, shrunk for the demo)
SEQ = 8             # sequence length
VOCAB = 2 * HSIZE   # vocab size must equal 2*hsize for w0+w1+w2 to broadcast
NUM_CLASSES = 5


# ----------------------------------------------------------------------------
# Two independent LSTM recurrences run lock-step, sharing elementwise ops.
#   gxf / gxb : (seq, 4H) input-projected gates (biases already added)
#   whh_f/b   : (H, 4H) VMEM refs
# Returns (hf_seq, hb_seq), each (seq, H), assembled once after the loop.
# PyTorch gate order: i, f, g, o.
# ----------------------------------------------------------------------------
def _paired_lstm(gxf, gxb, whh_f_ref, whh_b_ref, H):
    seq = gxf.shape[0]
    wf = whh_f_ref[...]
    wb = whh_b_ref[...]
    h = jnp.zeros((2, H), jnp.float32)
    c = jnp.zeros((2, H), jnp.float32)
    rows = []
    for t in range(seq):                         # static -> fully unrolled
        gf = gxf[t:t + 1, :] + jnp.dot(h[0:1, :], wf,
                                       preferred_element_type=jnp.float32)
        gb = gxb[t:t + 1, :] + jnp.dot(h[1:2, :], wb,
                                       preferred_element_type=jnp.float32)
        gates = jnp.concatenate([gf, gb], axis=0)        # (2, 4H) one vreg
        sg = jax.nn.sigmoid(gates)                       # covers i, f, o
        tg = jnp.tanh(gates[:, 2 * H:3 * H])             # g
        c = sg[:, H:2 * H] * c + sg[:, 0:H] * tg
        h = sg[:, 3 * H:4 * H] * jnp.tanh(c)
        rows.append(h)
    hf = jnp.concatenate([r[0:1, :] for r in rows], axis=0)   # (seq, H)
    hb = jnp.concatenate([r[1:2, :] for r in rows], axis=0)   # (seq, H)
    return hf, hb


# ----------------------------------------------------------------------------
# Single LSTM recurrence (top LSTM); returns mean_t h_t as (1, H).
# ----------------------------------------------------------------------------
def _top_lstm_mean(gx, whh_ref, H):
    seq = gx.shape[0]
    w = whh_ref[...]
    h = jnp.zeros((1, H), jnp.float32)
    c = jnp.zeros((1, H), jnp.float32)
    acc = jnp.zeros((1, H), jnp.float32)
    for t in range(seq):
        gates = gx[t:t + 1, :] + jnp.dot(h, w,
                                         preferred_element_type=jnp.float32)
        sg = jax.nn.sigmoid(gates)
        tg = jnp.tanh(gates[:, 2 * H:3 * H])
        c = sg[:, H:2 * H] * c + sg[:, 0:H] * tg
        h = sg[:, 3 * H:4 * H] * jnp.tanh(c)
        acc = acc + h
    return acc * (1.0 / seq)


# ----------------------------------------------------------------------------
# Fused kernel: embedding gather + both Elmo branches + folded mixing +
#               top LSTM + classification head.
# ----------------------------------------------------------------------------
def elmo_classifier_kernel(
        mix_ref, xf_ref, xb_ref,                   # SMEM: (3,) f32, (seq,) i32 x2
        x_ref, emb_ref,                            # (seq,H), (V,H)
        wih_f1_ref, whh_f1_ref, b_f1_ref,          # fwd branch, LSTM layer 1
        wih_b1_ref, whh_b1_ref, b_b1_ref,          # bwd branch, LSTM layer 1
        wih_f2_ref, whh_f2_ref, b_f2_ref,          # fwd branch, LSTM layer 2
        wih_b2_ref, whh_b2_ref, b_b2_ref,          # bwd branch, LSTM layer 2
        a_ref, cb_ref, wsum_ref,                   # folded cls/mix/top weights
        whh_top_ref, b_top_ref,                    # top LSTM recurrence
        headw_ref, headb_ref,                      # cls_head (H, 5)
        out_ref):                                  # (1, 5)
    seq, H = x_ref.shape

    # Softmaxed mixing weights as SMEM scalars.
    s0 = mix_ref[0]
    s1 = mix_ref[1]
    s2 = mix_ref[2]

    # In-kernel embedding gather: 8 dynamic-start row loads per branch.
    emb_f = jnp.concatenate(
        [emb_ref[pl.ds(xf_ref[t], 1), :] for t in range(seq)], axis=0)
    emb_b = jnp.concatenate(
        [emb_ref[pl.ds(xb_ref[t], 1), :] for t in range(seq)], axis=0)

    # Layer 1: batched input projections, then paired recurrence.
    gx1f = (jnp.dot(emb_f, wih_f1_ref[...],
                    preferred_element_type=jnp.float32) + b_f1_ref[...])
    gx1b = (jnp.dot(emb_b, wih_b1_ref[...],
                    preferred_element_type=jnp.float32) + b_b1_ref[...])
    h1f, h1b = _paired_lstm(gx1f, gx1b, whh_f1_ref, whh_b1_ref, H)

    # Layer 2.
    gx2f = (jnp.dot(h1f, wih_f2_ref[...],
                    preferred_element_type=jnp.float32) + b_f2_ref[...])
    gx2b = (jnp.dot(h1b, wih_b2_ref[...],
                    preferred_element_type=jnp.float32) + b_b2_ref[...])
    h2f, h2b = _paired_lstm(gx2f, gx2b, whh_f2_ref, whh_b2_ref, H)

    # Folded top-LSTM input projection:
    #   gx_top = s0*(x@wsum) + s1*(h2f@A) + s2*(h2b@A) + (s1+s2)*cb + b_top
    # which equals (s0*cat([x,x]) + s1*w1 + s2*w2) @ W_ih_top + b_top.
    gx_top = (s0 * jnp.dot(x_ref[...], wsum_ref[...],
                           preferred_element_type=jnp.float32)
              + s1 * jnp.dot(h2f, a_ref[...],
                             preferred_element_type=jnp.float32)
              + s2 * jnp.dot(h2b, a_ref[...],
                             preferred_element_type=jnp.float32)
              + (s1 + s2) * cb_ref[...]
              + b_top_ref[...])

    mean_o = _top_lstm_mean(gx_top, whh_top_ref, H)      # torch.mean(o, dim=0)
    out_ref[...] = (jnp.dot(mean_o, headw_ref[...],
                            preferred_element_type=jnp.float32)
                    + headb_ref[...])                    # (1, 5)


# ----------------------------------------------------------------------------
# pallas_call wrapper: full Elmo_classifier.forward(x, x_f, x_b)
# ----------------------------------------------------------------------------
@jax.jit
def elmo_classifier_forward(params, x, x_f, x_b):
    seq, H = x.shape
    n_cls = params["head_b"].shape[-1]

    # 3-element softmax of the mixing params (tiny; consumed as SMEM scalars).
    mix_sm = jax.nn.softmax(params["mix"])               # (3,)

    # Weight-only precompute for the classifier/mixing fold (HIGHEST precision).
    wih_top = params["lstm_top"]["wih_t"]                # (2H, 4H)
    hi = lax.Precision.HIGHEST
    a_fold = jnp.dot(params["cls_w_t"], wih_top, precision=hi)    # (H, 4H)
    cb_fold = jnp.dot(params["cls_b"], wih_top, precision=hi)     # (1, 4H)
    wsum = wih_top[0:H, :] + wih_top[H:2 * H, :]                  # (H, 4H)

    vmem = pl.BlockSpec(memory_space=pltpu.MemorySpace.VMEM)
    smem = pl.BlockSpec(memory_space=pltpu.MemorySpace.SMEM)

    # TODO(synk): for multi-sequence workloads add a leading batch grid axis
    # with dimension_semantics=("parallel",) (reaches v7x's second TensorCore).
    out = pl.pallas_call(
        elmo_classifier_kernel,
        out_shape=jax.ShapeDtypeStruct((1, n_cls), jnp.float32),
        in_specs=[smem, smem, smem] + [vmem] * 21,
        out_specs=vmem,
    )(mix_sm, x_f.astype(jnp.int32), x_b.astype(jnp.int32),
      x, params["embedding"],
      params["lstm_f1"]["wih_t"], params["lstm_f1"]["whh_t"], params["lstm_f1"]["b"],
      params["lstm_b1"]["wih_t"], params["lstm_b1"]["whh_t"], params["lstm_b1"]["b"],
      params["lstm_f2"]["wih_t"], params["lstm_f2"]["whh_t"], params["lstm_f2"]["b"],
      params["lstm_b2"]["wih_t"], params["lstm_b2"]["whh_t"], params["lstm_b2"]["b"],
      a_fold, cb_fold, wsum,
      params["lstm_top"]["whh_t"], params["lstm_top"]["b"],
      params["head_w_t"], params["head_b"])
    return out[0]                                        # (5,)


# ----------------------------------------------------------------------------
# Pure-JAX reference (unfolded math, HIGHEST precision) for a tolerance check
# ----------------------------------------------------------------------------
def _dot_hi(a, b):
    return jnp.dot(a, b, precision=lax.Precision.HIGHEST)


def _lstm_ref(xs, p):
    H = p["whh_t"].shape[0]

    def step(carry, x_t):
        h, c = carry
        gates = _dot_hi(x_t, p["wih_t"]) + _dot_hi(h, p["whh_t"]) + p["b"][0]
        i = jax.nn.sigmoid(gates[0:H])
        f = jax.nn.sigmoid(gates[H:2 * H])
        g = jnp.tanh(gates[2 * H:3 * H])
        o = jax.nn.sigmoid(gates[3 * H:4 * H])
        c = f * c + i * g
        h = o * jnp.tanh(c)
        return (h, c), h

    (_, _), hs = lax.scan(step, (jnp.zeros(H), jnp.zeros(H)), xs)
    return hs


def elmo_classifier_reference(params, x, x_f, x_b):
    emb = params["embedding"]
    ef, eb = emb[x_f], emb[x_b]
    h_f2 = _lstm_ref(_lstm_ref(ef, params["lstm_f1"]), params["lstm_f2"])
    h_b2 = _lstm_ref(_lstm_ref(eb, params["lstm_b1"]), params["lstm_b2"])
    w1 = _dot_hi(h_f2, params["cls_w_t"]) + params["cls_b"][0]
    w2 = _dot_hi(h_b2, params["cls_w_t"]) + params["cls_b"][0]
    w0 = jnp.concatenate([x, x], axis=1)
    s = jax.nn.softmax(params["mix"])
    w = s[0] * w0 + s[1] * w1 + s[2] * w2
    o = _lstm_ref(w, params["lstm_top"])
    return _dot_hi(o.mean(axis=0), params["head_w_t"]) + params["head_b"][0]


# ----------------------------------------------------------------------------
# Deterministic parameter init (stands in for torch.load of the checkpoint)
# ----------------------------------------------------------------------------
def _uniform(key, shape, lo, hi):
    return jax.random.uniform(key, shape, jnp.float32, lo, hi)


def _lstm_params(key, in_dim, H):
    k1, k2, k3, k4 = jax.random.split(key, 4)
    bound = H ** -0.5
    wih = _uniform(k1, (4 * H, in_dim), -bound, bound)
    whh = _uniform(k2, (4 * H, H), -bound, bound)
    bih = _uniform(k3, (4 * H,), -bound, bound)
    bhh = _uniform(k4, (4 * H,), -bound, bound)
    return dict(wih_t=wih.T, whh_t=whh.T, b=(bih + bhh)[None, :])


def init_params(key, H=HSIZE, V=VOCAB, n_cls=NUM_CLASSES):
    ks = jax.random.split(key, 10)
    emb = _uniform(ks[0], (V, H), -0.5, 0.5)
    emb = emb.at[0].set(0.0)                       # padding_idx = <PAD> = 0
    bound = H ** -0.5
    return dict(
        embedding=emb,
        lstm_f1=_lstm_params(ks[1], H, H),
        lstm_b1=_lstm_params(ks[2], H, H),
        lstm_f2=_lstm_params(ks[3], H, H),
        lstm_b2=_lstm_params(ks[4], H, H),
        cls_w_t=_uniform(ks[5], (V, H), -bound, bound).T,       # Linear(H, V)
        cls_b=_uniform(ks[6], (V,), -bound, bound)[None, :],
        mix=_uniform(ks[7], (3,), 0.5, 1.5),                    # params ~ U(0.5,1.5)
        lstm_top=_lstm_params(ks[8], 2 * H, H),                 # LSTM(2H, H)
        head_w_t=_uniform(ks[9], (n_cls, H), -bound, bound).T,  # Linear(H, 5)
        head_b=jnp.zeros((1, n_cls), jnp.float32),
    )


if __name__ == "__main__":
    key = jax.random.PRNGKey(0)
    k_par, k_x, k_f, k_b = jax.random.split(key, 4)

    params = init_params(k_par)
    x = jax.random.normal(k_x, (SEQ, HSIZE), jnp.float32)          # embeddings
    x_f = jax.random.randint(k_f, (SEQ,), 1, VOCAB, jnp.int32)     # fwd token ids
    # TODO(synk): the backward branch assumes the caller supplies an already
    # reversed token stream (as the original PyTorch usage does).
    x_b = jax.random.randint(k_b, (SEQ,), 1, VOCAB, jnp.int32)     # bwd token ids

    out = elmo_classifier_forward(params, x, x_f, x_b)
    out = jax.block_until_ready(out)

    assert out.shape == (NUM_CLASSES,)
    assert bool(jnp.all(jnp.isfinite(out)))

    ref = elmo_classifier_reference(params, x, x_f, x_b)
    max_err = float(jnp.max(jnp.abs(out - ref)))
    assert max_err < 5e-2, f"kernel/ref mismatch, max abs err = {max_err}"

    # TODO(synk): torch.load(model_path) checkpoint restore replaced by
    # deterministic in-script initialization (synthetic kernel).
    print("KERNEL_OK")
</pallas_src>

<mosaic_0001>
module attributes {stable_mosaic.version = 11 : i64} {
  func.func @elmo_classifier_kernel(%arg0: memref<3xf32, #tpu.memory_space<smem>>, %arg1: memref<8xi32, #tpu.memory_space<smem>>, %arg2: memref<8xi32, #tpu.memory_space<smem>>, %arg3: memref<8x32xf32, #tpu.memory_space<vmem>>, %arg4: memref<64x32xf32, #tpu.memory_space<vmem>>, %arg5: memref<32x128xf32, #tpu.memory_space<vmem>>, %arg6: memref<32x128xf32, #tpu.memory_space<vmem>>, %arg7: memref<1x128xf32, #tpu.memory_space<vmem>>, %arg8: memref<32x128xf32, #tpu.memory_space<vmem>>, %arg9: memref<32x128xf32, #tpu.memory_space<vmem>>, %arg10: memref<1x128xf32, #tpu.memory_space<vmem>>, %arg11: memref<32x128xf32, #tpu.memory_space<vmem>>, %arg12: memref<32x128xf32, #tpu.memory_space<vmem>>, %arg13: memref<1x128xf32, #tpu.memory_space<vmem>>, %arg14: memref<32x128xf32, #tpu.memory_space<vmem>>, %arg15: memref<32x128xf32, #tpu.memory_space<vmem>>, %arg16: memref<1x128xf32, #tpu.memory_space<vmem>>, %arg17: memref<32x128xf32, #tpu.memory_space<vmem>>, %arg18: memref<1x128xf32, #tpu.memory_space<vmem>>, %arg19: memref<32x128xf32, #tpu.memory_space<vmem>>, %arg20: memref<32x128xf32, #tpu.memory_space<vmem>>, %arg21: memref<1x128xf32, #tpu.memory_space<vmem>>, %arg22: memref<32x5xf32, #tpu.memory_space<vmem>>, %arg23: memref<1x5xf32, #tpu.memory_space<vmem>>, %arg24: memref<1x5xf32, #tpu.memory_space<vmem>>) attributes {dimension_semantics = [], scalar_prefetch = 0 : i64, scratch_operands = 0 : i64, tpu.core_type = #tpu.core_type<tc>} {
    %c0 = arith.constant 0 : index
    %0 = memref.load %arg0[%c0] : memref<3xf32, #tpu.memory_space<smem>>
    %c1 = arith.constant 1 : index
    %1 = memref.load %arg0[%c1] : memref<3xf32, #tpu.memory_space<smem>>
    %c2 = arith.constant 2 : index
    %2 = memref.load %arg0[%c2] : memref<3xf32, #tpu.memory_space<smem>>
    %c0_0 = arith.constant 0 : index
    %3 = memref.load %arg1[%c0_0] : memref<8xi32, #tpu.memory_space<smem>>
    %4 = arith.index_cast %3 : i32 to index
    %c0_1 = arith.constant 0 : index
    %5 = vector.load %arg4[%4, %c0_1] : memref<64x32xf32, #tpu.memory_space<vmem>>, vector<1x32xf32>
    %c1_2 = arith.constant 1 : index
    %6 = memref.load %arg1[%c1_2] : memref<8xi32, #tpu.memory_space<smem>>
    %7 = arith.index_cast %6 : i32 to index
    %c0_3 = arith.constant 0 : index
    %8 = vector.load %arg4[%7, %c0_3] : memref<64x32xf32, #tpu.memory_space<vmem>>, vector<1x32xf32>
    %c2_4 = arith.constant 2 : index
    %9 = memref.load %arg1[%c2_4] : memref<8xi32, #tpu.memory_space<smem>>
    %10 = arith.index_cast %9 : i32 to index
    %c0_5 = arith.constant 0 : index
    %11 = vector.load %arg4[%10, %c0_5] : memref<64x32xf32, #tpu.memory_space<vmem>>, vector<1x32xf32>
    %c3 = arith.constant 3 : index
    %12 = memref.load %arg1[%c3] : memref<8xi32, #tpu.memory_space<smem>>
    %13 = arith.index_cast %12 : i32 to index
    %c0_6 = arith.constant 0 : index
    %14 = vector.load %arg4[%13, %c0_6] : memref<64x32xf32, #tpu.memory_space<vmem>>, vector<1x32xf32>
    %c4 = arith.constant 4 : index
    %15 = memref.load %arg1[%c4] : memref<8xi32, #tpu.memory_space<smem>>
    %16 = arith.index_cast %15 : i32 to index
    %c0_7 = arith.constant 0 : index
    %17 = vector.load %arg4[%16, %c0_7] : memref<64x32xf32, #tpu.memory_space<vmem>>, vector<1x32xf32>
    %c5 = arith.constant 5 : index
    %18 = memref.load %arg1[%c5] : memref<8xi32, #tpu.memory_space<smem>>
    %19 = arith.index_cast %18 : i32 to index
    %c0_8 = arith.constant 0 : index
    %20 = vector.load %arg4[%19, %c0_8] : memref<64x32xf32, #tpu.memory_space<vmem>>, vector<1x32xf32>
    %c6 = arith.constant 6 : index
    %21 = memref.load %arg1[%c6] : memref<8xi32, #tpu.memory_space<smem>>
    %22 = arith.index_cast %21 : i32 to index
    %c0_9 = arith.constant 0 : index
    %23 = vector.load %arg4[%22, %c0_9] : memref<64x32xf32, #tpu.memory_space<vmem>>, vector<1x32xf32>
    %c7 = arith.constant 7 : index
    %24 = memref.load %arg1[%c7] : memref<8xi32, #tpu.memory_space<smem>>
    %25 = arith.index_cast %24 : i32 to index
    %c0_10 = arith.constant 0 : index
    %26 = vector.load %arg4[%25, %c0_10] : memref<64x32xf32, #tpu.memory_space<vmem>>, vector<1x32xf32>
    %27 = tpu.concatenate %5, %8, %11, %14, %17, %20, %23, %26 in 0 : vector<1x32xf32>, vector<1x32xf32>, vector<1x32xf32>, vector<1x32xf32>, vector<1x32xf32>, vector<1x32xf32>, vector<1x32xf32>, vector<1x32xf32> -> vector<8x32xf32>
    %c0_11 = arith.constant 0 : index
    %28 = memref.load %arg2[%c0_11] : memref<8xi32, #tpu.memory_space<smem>>
    %29 = arith.index_cast %28 : i32 to index
    %c0_12 = arith.constant 0 : index
    %30 = vector.load %arg4[%29, %c0_12] : memref<64x32xf32, #tpu.memory_space<vmem>>, vector<1x32xf32>
    %c1_13 = arith.constant 1 : index
    %31 = memref.load %arg2[%c1_13] : memref<8xi32, #tpu.memory_space<smem>>
    %32 = arith.index_cast %31 : i32 to index
    %c0_14 = arith.constant 0 : index
    %33 = vector.load %arg4[%32, %c0_14] : memref<64x32xf32, #tpu.memory_space<vmem>>, vector<1x32xf32>
    %c2_15 = arith.constant 2 : index
    %34 = memref.load %arg2[%c2_15] : memref<8xi32, #tpu.memory_space<smem>>
    %35 = arith.index_cast %34 : i32 to index
    %c0_16 = arith.constant 0 : index
    %36 = vector.load %arg4[%35, %c0_16] : memref<64x32xf32, #tpu.memory_space<vmem>>, vector<1x32xf32>
    %c3_17 = arith.constant 3 : index
    %37 = memref.load %arg2[%c3_17] : memref<8xi32, #tpu.memory_space<smem>>
    %38 = arith.index_cast %37 : i32 to index
    %c0_18 = arith.constant 0 : index
    %39 = vector.load %arg4[%38, %c0_18] : memref<64x32xf32, #tpu.memory_space<vmem>>, vector<1x32xf32>
    %c4_19 = arith.constant 4 : index
    %40 = memref.load %arg2[%c4_19] : memref<8xi32, #tpu.memory_space<smem>>
    %41 = arith.index_cast %40 : i32 to index
    %c0_20 = arith.constant 0 : index
    %42 = vector.load %arg4[%41, %c0_20] : memref<64x32xf32, #tpu.memory_space<vmem>>, vector<1x32xf32>
    %c5_21 = arith.constant 5 : index
    %43 = memref.load %arg2[%c5_21] : memref<8xi32, #tpu.memory_space<smem>>
    %44 = arith.index_cast %43 : i32 to index
    %c0_22 = arith.constant 0 : index
    %45 = vector.load %arg4[%44, %c0_22] : memref<64x32xf32, #tpu.memory_space<vmem>>, vector<1x32xf32>
    %c6_23 = arith.constant 6 : index
    %46 = memref.load %arg2[%c6_23] : memref<8xi32, #tpu.memory_space<smem>>
    %47 = arith.index_cast %46 : i32 to index
    %c0_24 = arith.constant 0 : index
    %48 = vector.load %arg4[%47, %c0_24] : memref<64x32xf32, #tpu.memory_space<vmem>>, vector<1x32xf32>
    %c7_25 = arith.constant 7 : index
    %49 = memref.load %arg2[%c7_25] : memref<8xi32, #tpu.memory_space<smem>>
    %50 = arith.index_cast %49 : i32 to index
    %c0_26 = arith.constant 0 : index
    %51 = vector.load %arg4[%50, %c0_26] : memref<64x32xf32, #tpu.memory_space<vmem>>, vector<1x32xf32>
    %52 = tpu.concatenate %30, %33, %36, %39, %42, %45, %48, %51 in 0 : vector<1x32xf32>, vector<1x32xf32>, vector<1x32xf32>, vector<1x32xf32>, vector<1x32xf32>, vector<1x32xf32>, vector<1x32xf32>, vector<1x32xf32> -> vector<8x32xf32>
    %c0_27 = arith.constant 0 : index
    %c0_28 = arith.constant 0 : index
    %53 = vector.load %arg5[%c0_27, %c0_28] : memref<32x128xf32, #tpu.memory_space<vmem>>, vector<32x128xf32>
    %cst = arith.constant dense<0.000000e+00> : vector<8x128xf32>
    %54 = tpu.matmul %27, %53, %cst {dimension_numbers = #tpu.dot_dimension_numbers<[1], [0], [0], [1], [0, 0, 1, 1], [], []>} : vector<8x32xf32>, vector<32x128xf32>, vector<8x128xf32> -> vector<8x128xf32>
    %c0_29 = arith.constant 0 : index
    %c0_30 = arith.constant 0 : index
    %55 = vector.load %arg7[%c0_29, %c0_30] : memref<1x128xf32, #tpu.memory_space<vmem>>, vector<1x128xf32>
    %56 = vector.broadcast %55 : vector<1x128xf32> to vector<8x128xf32>
    %57 = arith.addf %54, %56 : vector<8x128xf32>
    %c0_31 = arith.constant 0 : index
    %c0_32 = arith.constant 0 : index
    %58 = vector.load %arg8[%c0_31, %c0_32] : memref<32x128xf32, #tpu.memory_space<vmem>>, vector<32x128xf32>
    %cst_33 = arith.constant dense<0.000000e+00> : vector<8x128xf32>
    %59 = tpu.matmul %52, %58, %cst_33 {dimension_numbers = #tpu.dot_dimension_numbers<[1], [0], [0], [1], [0, 0, 1, 1], [], []>} : vector<8x32xf32>, vector<32x128xf32>, vector<8x128xf32> -> vector<8x128xf32>
    %c0_34 = arith.constant 0 : index
    %c0_35 = arith.constant 0 : index
    %60 = vector.load %arg10[%c0_34, %c0_35] : memref<1x128xf32, #tpu.memory_space<vmem>>, vector<1x128xf32>
    %61 = vector.broadcast %60 : vector<1x128xf32> to vector<8x128xf32>
    %62 = arith.addf %59, %61 : vector<8x128xf32>
    %c0_36 = arith.constant 0 : index
    %c0_37 = arith.constant 0 : index
    %63 = vector.load %arg6[%c0_36, %c0_37] : memref<32x128xf32, #tpu.memory_space<vmem>>, vector<32x128xf32>
    %c0_38 = arith.constant 0 : index
    %c0_39 = arith.constant 0 : index
    %64 = vector.load %arg9[%c0_38, %c0_39] : memref<32x128xf32, #tpu.memory_space<vmem>>, vector<32x128xf32>
    %cst_40 = arith.constant 0.000000e+00 : f32
    %65 = vector.broadcast %cst_40 : f32 to vector<2x32xf32>
    %cst_41 = arith.constant 0.000000e+00 : f32
    %66 = vector.broadcast %cst_41 : f32 to vector<2x32xf32>
    %67 = vector.extract_strided_slice %57 {offsets = [0, 0], sizes = [1, 128], strides = [1, 1]} : vector<8x128xf32> to vector<1x128xf32>
    %68 = vector.extract_strided_slice %65 {offsets = [0, 0], sizes = [1, 32], strides = [1, 1]} : vector<2x32xf32> to vector<1x32xf32>
    %cst_42 = arith.constant dense<0.000000e+00> : vector<1x128xf32>
    %69 = tpu.matmul %68, %63, %cst_42 {dimension_numbers = #tpu.dot_dimension_numbers<[1], [0], [0], [1], [0, 0, 1, 1], [], []>} : vector<1x32xf32>, vector<32x128xf32>, vector<1x128xf32> -> vector<1x128xf32>
    %70 = arith.addf %67, %69 : vector<1x128xf32>
    %71 = vector.extract_strided_slice %62 {offsets = [0, 0], sizes = [1, 128], strides = [1, 1]} : vector<8x128xf32> to vector<1x128xf32>
    %72 = vector.extract_strided_slice %65 {offsets = [1, 0], sizes = [1, 32], strides = [1, 1]} : vector<2x32xf32> to vector<1x32xf32>
    %cst_43 = arith.constant dense<0.000000e+00> : vector<1x128xf32>
    %73 = tpu.matmul %72, %64, %cst_43 {dimension_numbers = #tpu.dot_dimension_numbers<[1], [0], [0], [1], [0, 0, 1, 1], [], []>} : vector<1x32xf32>, vector<32x128xf32>, vector<1x128xf32> -> vector<1x128xf32>
    %74 = arith.addf %71, %73 : vector<1x128xf32>
    %75 = tpu.concatenate %70, %74 in 0 : vector<1x128xf32>, vector<1x128xf32> -> vector<2x128xf32>
    %76 = arith.negf %75 : vector<2x128xf32>
    %77 = math.exp %76 : vector<2x128xf32>
    %cst_44 = arith.constant 1.000000e+00 : f32
    %78 = vector.broadcast %cst_44 : f32 to vector<2x128xf32>
    %79 = arith.addf %78, %77 : vector<2x128xf32>
    %80 = arith.divf %78, %79 : vector<2x128xf32>
    %81 = vector.extract_strided_slice %75 {offsets = [0, 64], sizes = [2, 32], strides = [1, 1]} : vector<2x128xf32> to vector<2x32xf32>
    %82 = math.tanh %81 : vector<2x32xf32>
    %83 = vector.extract_strided_slice %80 {offsets = [0, 32], sizes = [2, 32], strides = [1, 1]} : vector<2x128xf32> to vector<2x32xf32>
    %84 = arith.mulf %83, %66 : vector<2x32xf32>
    %85 = vector.extract_strided_slice %80 {offsets = [0, 0], sizes = [2, 32], strides = [1, 1]} : vector<2x128xf32> to vector<2x32xf32>
    %86 = arith.mulf %85, %82 : vector<2x32xf32>
    %87 = arith.addf %84, %86 : vector<2x32xf32>
    %88 = vector.extract_strided_slice %80 {offsets = [0, 96], sizes = [2, 32], strides = [1, 1]} : vector<2x128xf32> to vector<2x32xf32>
    %89 = math.tanh %87 : vector<2x32xf32>
    %90 = arith.mulf %88, %89 : vector<2x32xf32>
    %91 = vector.extract_strided_slice %57 {offsets = [1, 0], sizes = [1, 128], strides = [1, 1]} : vector<8x128xf32> to vector<1x128xf32>
    %92 = vector.extract_strided_slice %90 {offsets = [0, 0], sizes = [1, 32], strides = [1, 1]} : vector<2x32xf32> to vector<1x32xf32>
    %cst_45 = arith.constant dense<0.000000e+00> : vector<1x128xf32>
    %93 = tpu.matmul %92, %63, %cst_45 {dimension_numbers = #tpu.dot_dimension_numbers<[1], [0], [0], [1], [0, 0, 1, 1], [], []>} : vector<1x32xf32>, vector<32x128xf32>, vector<1x128xf32> -> vector<1x128xf32>
    %94 = arith.addf %91, %93 : vector<1x128xf32>
    %95 = vector.extract_strided_slice %62 {offsets = [1, 0], sizes = [1, 128], strides = [1, 1]} : vector<8x128xf32> to vector<1x128xf32>
    %96 = vector.extract_strided_slice %90 {offsets = [1, 0], sizes = [1, 32], strides = [1, 1]} : vector<2x32xf32> to vector<1x32xf32>
    %cst_46 = arith.constant dense<0.000000e+00> : vector<1x128xf32>
    %97 = tpu.matmul %96, %64, %cst_46 {dimension_numbers = #tpu.dot_dimension_numbers<[1], [0], [0], [1], [0, 0, 1, 1], [], []>} : vector<1x32xf32>, vector<32x128xf32>, vector<1x128xf32> -> vector<1x128xf32>
    %98 = arith.addf %95, %97 : vector<1x128xf32>
    %99 = tpu.concatenate %94, %98 in 0 : vector<1x128xf32>, vector<1x128xf32> -> vector<2x128xf32>
    %100 = arith.negf %99 : vector<2x128xf32>
    %101 = math.exp %100 : vector<2x128xf32>
    %cst_47 = arith.constant 1.000000e+00 : f32
    %102 = vector.broadcast %cst_47 : f32 to vector<2x128xf32>
    %103 = arith.addf %102, %101 : vector<2x128xf32>
    %104 = arith.divf %102, %103 : vector<2x128xf32>
    %105 = vector.extract_strided_slice %99 {offsets = [0, 64], sizes = [2, 32], strides = [1, 1]} : vector<2x128xf32> to vector<2x32xf32>
    %106 = math.tanh %105 : vector<2x32xf32>
    %107 = vector.extract_strided_slice %104 {offsets = [0, 32], sizes = [2, 32], strides = [1, 1]} : vector<2x128xf32> to vector<2x32xf32>
    %108 = arith.mulf %107, %87 : vector<2x32xf32>
    %109 = vector.extract_strided_slice %104 {offsets = [0, 0], sizes = [2, 32], strides = [1, 1]} : vector<2x128xf32> to vector<2x32xf32>
    %110 = arith.mulf %109, %106 : vector<2x32xf32>
    %111 = arith.addf %108, %110 : vector<2x32xf32>
    %112 = vector.extract_strided_slice %104 {offsets = [0, 96], sizes = [2, 32], strides = [1, 1]} : vector<2x128xf32> to vector<2x32xf32>
    %113 = math.tanh %111 : vector<2x32xf32>
    %114 = arith.mulf %112, %113 : vector<2x32xf32>
    %115 = vector.extract_strided_slice %57 {offsets = [2, 0], sizes = [1, 128], strides = [1, 1]} : vector<8x128xf32> to vector<1x128xf32>
    %116 = vector.extract_strided_slice %114 {offsets = [0, 0], sizes = [1, 32], strides = [1, 1]} : vector<2x32xf32> to vector<1x32xf32>
    %cst_48 = arith.constant dense<0.000000e+00> : vector<1x128xf32>
    %117 = tpu.matmul %116, %63, %cst_48 {dimension_numbers = #tpu.dot_dimension_numbers<[1], [0], [0], [1], [0, 0, 1, 1], [], []>} : vector<1x32xf32>, vector<32x128xf32>, vector<1x128xf32> -> vector<1x128xf32>
    %118 = arith.addf %115, %117 : vector<1x128xf32>
    %119 = vector.extract_strided_slice %62 {offsets = [2, 0], sizes = [1, 128], strides = [1, 1]} : vector<8x128xf32> to vector<1x128xf32>
    %120 = vector.extract_strided_slice %114 {offsets = [1, 0], sizes = [1, 32], strides = [1, 1]} : vector<2x32xf32> to vector<1x32xf32>
    %cst_49 = arith.constant dense<0.000000e+00> : vector<1x128xf32>
    %121 = tpu.matmul %120, %64, %cst_49 {dimension_numbers = #tpu.dot_dimension_numbers<[1], [0], [0], [1], [0, 0, 1, 1], [], []>} : vector<1x32xf32>, vector<32x128xf32>, vector<1x128xf32> -> vector<1x128xf32>
    %122 = arith.addf %119, %121 : vector<1x128xf32>
    %123 = tpu.concatenate %118, %122 in 0 : vector<1x128xf32>, vector<1x128xf32> -> vector<2x128xf32>
    %124 = arith.negf %123 : vector<2x128xf32>
    %125 = math.exp %124 : vector<2x128xf32>
    %cst_50 = arith.constant 1.000000e+00 : f32
    %126 = vector.broadcast %cst_50 : f32 to vector<2x128xf32>
    %127 = arith.addf %126, %125 : vector<2x128xf32>
    %128 = arith.divf %126, %127 : vector<2x128xf32>
    %129 = vector.extract_strided_slice %123 {offsets = [0, 64], sizes = [2, 32], strides = [1, 1]} : vector<2x128xf32> to vector<2x32xf32>
    %130 = math.tanh %129 : vector<2x32xf32>
    %131 = vector.extract_strided_slice %128 {offsets = [0, 32], sizes = [2, 32], strides = [1, 1]} : vector<2x128xf32> to vector<2x32xf32>
    %132 = arith.mulf %131, %111 : vector<2x32xf32>
    %133 = vector.extract_strided_slice %128 {offsets = [0, 0], sizes = [2, 32], strides = [1, 1]} : vector<2x128xf32> to vector<2x32xf32>
    %134 = arith.mulf %133, %130 : vector<2x32xf32>
    %135 = arith.addf %132, %134 : vector<2x32xf32>
    %136 = vector.extract_strided_slice %128 {offsets = [0, 96], sizes = [2, 32], strides = [1, 1]} : vector<2x128xf32> to vector<2x32xf32>
    %137 = math.tanh %135 : vector<2x32xf32>
    %138 = arith.mulf %136, %137 : vector<2x32xf32>
    %139 = vector.extract_strided_slice %57 {offsets = [3, 0], sizes = [1, 128], strides = [1, 1]} : vector<8x128xf32> to vector<1x128xf32>
    %140 = vector.extract_strided_slice %138 {offsets = [0, 0], sizes = [1, 32], strides = [1, 1]} : vector<2x32xf32> to vector<1x32xf32>
    %cst_51 = arith.constant dense<0.000000e+00> : vector<1x128xf32>
    %141 = tpu.matmul %140, %63, %cst_51 {dimension_numbers = #tpu.dot_dimension_numbers<[1], [0], [0], [1], [0, 0, 1, 1], [], []>} : vector<1x32xf32>, vector<32x128xf32>, vector<1x128xf32> -> vector<1x128xf32>
    %142 = arith.addf %139, %141 : vector<1x128xf32>
    %143 = vector.extract_strided_slice %62 {offsets = [3, 0], sizes = [1, 128], strides = [1, 1]} : vector<8x128xf32> to vector<1x128xf32>
    %144 = vector.extract_strided_slice %138 {offsets = [1, 0], sizes = [1, 32], strides = [1, 1]} : vector<2x32xf32> to vector<1x32xf32>
    %cst_52 = arith.constant dense<0.000000e+00> : vector<1x128xf32>
    %145 = tpu.matmul %144, %64, %cst_52 {dimension_numbers = #tpu.dot_dimension_numbers<[1], [0], [0], [1], [0, 0, 1, 1], [], []>} : vector<1x32xf32>, vector<32x128xf32>, vector<1x128xf32> -> vector<1x128xf32>
    %146 = arith.addf %143, %145 : vector<1x128xf32>
    %147 = tpu.concatenate %142, %146 in 0 : vector<1x128xf32>, vector<1x128xf32> -> vector<2x128xf32>
    %148 = arith.negf %147 : vector<2x128xf32>
    %149 = math.exp %148 : vector<2x128xf32>
    %cst_53 = arith.constant 1.000000e+00 : f32
    %150 = vector.broadcast %cst_53 : f32 to vector<2x128xf32>
    %151 = arith.addf %150, %149 : vector<2x128xf32>
    %152 = arith.divf %150, %151 : vector<2x128xf32>
    %153 = vector.extract_strided_slice %147 {offsets = [0, 64], sizes = [2, 32], strides = [1, 1]} : vector<2x128xf32> to vector<2x32xf32>
    %154 = math.tanh %153 : vector<2x32xf32>
    %155 = vector.extract_strided_slice %152 {offsets = [0, 32], sizes = [2, 32], strides = [1, 1]} : vector<2x128xf32> to vector<2x32xf32>
    %156 = arith.mulf %155, %135 : vector<2x32xf32>
    %157 = vector.extract_strided_slice %152 {offsets = [0, 0], sizes = [2, 32], strides = [1, 1]} : vector<2x128xf32> to vector<2x32xf32>
    %158 = arith.mulf %157, %154 : vector<2x32xf32>
    %159 = arith.addf %156, %158 : vector<2x32xf32>
    %160 = vector.extract_strided_slice %152 {offsets = [0, 96], sizes = [2, 32], strides = [1, 1]} : vector<2x128xf32> to vector<2x32xf32>
    %161 = math.tanh %159 : vector<2x32xf32>
    %162 = arith.mulf %160, %161 : vector<2x32xf32>
    %163 = vector.extract_strided_slice %57 {offsets = [4, 0], sizes = [1, 128], strides = [1, 1]} : vector<8x128xf32> to vector<1x128xf32>
    %164 = vector.extract_strided_slice %162 {offsets = [0, 0], sizes = [1, 32], strides = [1, 1]} : vector<2x32xf32> to vector<1x32xf32>
    %cst_54 = arith.constant dense<0.000000e+00> : vector<1x128xf32>
    %165 = tpu.matmul %164, %63, %cst_54 {dimension_numbers = #tpu.dot_dimension_numbers<[1], [0], [0], [1], [0, 0, 1, 1], [], []>} : vector<1x32xf32>, vector<32x128xf32>, vector<1x128xf32> -> vector<1x128xf32>
    %166 = arith.addf %163, %165 : vector<1x128xf32>
    %167 = vector.extract_strided_slice %62 {offsets = [4, 0], sizes = [1, 128], strides = [1, 1]} : vector<8x128xf32> to vector<1x128xf32>
    %168 = vector.extract_strided_slice %162 {offsets = [1, 0], sizes = [1, 32], strides = [1, 1]} : vector<2x32xf32> to vector<1x32xf32>
    %cst_55 = arith.constant dense<0.000000e+00> : vector<1x128xf32>
    %169 = tpu.matmul %168, %64, %cst_55 {dimension_numbers = #tpu.dot_dimension_numbers<[1], [0], [0], [1], [0, 0, 1, 1], [], []>} : vector<1x32xf32>, vector<32x128xf32>, vector<1x128xf32> -> vector<1x128xf32>
    %170 = arith.addf %167, %169 : vector<1x128xf32>
    %171 = tpu.concatenate %166, %170 in 0 : vector<1x128xf32>, vector<1x128xf32> -> vector<2x128xf32>
    %172 = arith.negf %171 : vector<2x128xf32>
    %173 = math.exp %172 : vector<2x128xf32>
    %cst_56 = arith.constant 1.000000e+00 : f32
    %174 = vector.broadcast %cst_56 : f32 to vector<2x128xf32>
    %175 = arith.addf %174, %173 : vector<2x128xf32>
    %176 = arith.divf %174, %175 : vector<2x128xf32>
    %177 = vector.extract_strided_slice %171 {offsets = [0, 64], sizes = [2, 32], strides = [1, 1]} : vector<2x128xf32> to vector<2x32xf32>
    %178 = math.tanh %177 : vector<2x32xf32>
    %179 = vector.extract_strided_slice %176 {offsets = [0, 32], sizes = [2, 32], strides = [1, 1]} : vector<2x128xf32> to vector<2x32xf32>
    %180 = arith.mulf %179, %159 : vector<2x32xf32>
    %181 = vector.extract_strided_slice %176 {offsets = [0, 0], sizes = [2, 32], strides = [1, 1]} : vector<2x128xf32> to vector<2x32xf32>
    %182 = arith.mulf %181, %178 : vector<2x32xf32>
    %183 = arith.addf %180, %182 : vector<2x32xf32>
    %184 = vector.extract_strided_slice %176 {offsets = [0, 96], sizes = [2, 32], strides = [1, 1]} : vector<2x128xf32> to vector<2x32xf32>
    %185 = math.tanh %183 : vector<2x32xf32>
    %186 = arith.mulf %184, %185 : vector<2x32xf32>
    %187 = vector.extract_strided_slice %57 {offsets = [5, 0], sizes = [1, 128], strides = [1, 1]} : vector<8x128xf32> to vector<1x128xf32>
    %188 = vector.extract_strided_slice %186 {offsets = [0, 0], sizes = [1, 32], strides = [1, 1]} : vector<2x32xf32> to vector<1x32xf32>
    %cst_57 = arith.constant dense<0.000000e+00> : vector<1x128xf32>
    %189 = tpu.matmul %188, %63, %cst_57 {dimension_numbers = #tpu.dot_dimension_numbers<[1], [0], [0], [1], [0, 0, 1, 1], [], []>} : vector<1x32xf32>, vector<32x128xf32>, vector<1x128xf32> -> vector<1x128xf32>
    %190 = arith.addf %187, %189 : vector<1x128xf32>
    %191 = vector.extract_strided_slice %62 {offsets = [5, 0], sizes = [1, 128], strides = [1, 1]} : vector<8x128xf32> to vector<1x128xf32>
    %192 = vector.extract_strided_slice %186 {offsets = [1, 0], sizes = [1, 32], strides = [1, 1]} : vector<2x32xf32> to vector<1x32xf32>
    %cst_58 = arith.constant dense<0.000000e+00> : vector<1x128xf32>
    %193 = tpu.matmul %192, %64, %cst_58 {dimension_numbers = #tpu.dot_dimension_numbers<[1], [0], [0], [1], [0, 0, 1, 1], [], []>} : vector<1x32xf32>, vector<32x128xf32>, vector<1x128xf32> -> vector<1x128xf32>
    %194 = arith.addf %191, %193 : vector<1x128xf32>
    %195 = tpu.concatenate %190, %194 in 0 : vector<1x128xf32>, vector<1x128xf32> -> vector<2x128xf32>
    %196 = arith.negf %195 : vector<2x128xf32>
    %197 = math.exp %196 : vector<2x128xf32>
    %cst_59 = arith.constant 1.000000e+00 : f32
    %198 = vector.broadcast %cst_59 : f32 to vector<2x128xf32>
    %199 = arith.addf %198, %197 : vector<2x128xf32>
    %200 = arith.divf %198, %199 : vector<2x128xf32>
    %201 = vector.extract_strided_slice %195 {offsets = [0, 64], sizes = [2, 32], strides = [1, 1]} : vector<2x128xf32> to vector<2x32xf32>
    %202 = math.tanh %201 : vector<2x32xf32>
    %203 = vector.extract_strided_slice %200 {offsets = [0, 32], sizes = [2, 32], strides = [1, 1]} : vector<2x128xf32> to vector<2x32xf32>
    %204 = arith.mulf %203, %183 : vector<2x32xf32>
    %205 = vector.extract_strided_slice %200 {offsets = [0, 0], sizes = [2, 32], strides = [1, 1]} : vector<2x128xf32> to vector<2x32xf32>
    %206 = arith.mulf %205, %202 : vector<2x32xf32>
    %207 = arith.addf %204, %206 : vector<2x32xf32>
    %208 = vector.extract_strided_slice %200 {offsets = [0, 96], sizes = [2, 32], strides = [1, 1]} : vector<2x128xf32> to vector<2x32xf32>
    %209 = math.tanh %207 : vector<2x32xf32>
    %210 = arith.mulf %208, %209 : vector<2x32xf32>
    %211 = vector.extract_strided_slice %57 {offsets = [6, 0], sizes = [1, 128], strides = [1, 1]} : vector<8x128xf32> to vector<1x128xf32>
    %212 = vector.extract_strided_slice %210 {offsets = [0, 0], sizes = [1, 32], strides = [1, 1]} : vector<2x32xf32> to vector<1x32xf32>
    %cst_60 = arith.constant dense<0.000000e+00> : vector<1x128xf32>
    %213 = tpu.matmul %212, %63, %cst_60 {dimension_numbers = #tpu.dot_dimension_numbers<[1], [0], [0], [1], [0, 0, 1, 1], [], []>} : vector<1x32xf32>, vector<32x128xf32>, vector<1x128xf32> -> vector<1x128xf32>
    %214 = arith.addf %211, %213 : vector<1x128xf32>
    %215 = vector.extract_strided_slice %62 {offsets = [6, 0], sizes = [1, 128], strides = [1, 1]} : vector<8x128xf32> to vector<1x128xf32>
    %216 = vector.extract_strided_slice %210 {offsets = [1, 0], sizes = [1, 32], strides = [1, 1]} : vector<2x32xf32> to vector<1x32xf32>
    %cst_61 = arith.constant dense<0.000000e+00> : vector<1x128xf32>
    %217 = tpu.matmul %216, %64, %cst_61 {dimension_numbers = #tpu.dot_dimension_numbers<[1], [0], [0], [1], [0, 0, 1, 1], [], []>} : vector<1x32xf32>, vector<32x128xf32>, vector<1x128xf32> -> vector<1x128xf32>
    %218 = arith.addf %215, %217 : vector<1x128xf32>
    %219 = tpu.concatenate %214, %218 in 0 : vector<1x128xf32>, vector<1x128xf32> -> vector<2x128xf32>
    %220 = arith.negf %219 : vector<2x128xf32>
    %221 = math.exp %220 : vector<2x128xf32>
    %cst_62 = arith.constant 1.000000e+00 : f32
    %222 = vector.broadcast %cst_62 : f32 to vector<2x128xf32>
    %223 = arith.addf %222, %221 : vector<2x128xf32>
    %224 = arith.divf %222, %223 : vector<2x128xf32>
    %225 = vector.extract_strided_slice %219 {offsets = [0, 64], sizes = [2, 32], strides = [1, 1]} : vector<2x128xf32> to vector<2x32xf32>
    %226 = math.tanh %225 : vector<2x32xf32>
    %227 = vector.extract_strided_slice %224 {offsets = [0, 32], sizes = [2, 32], strides = [1, 1]} : vector<2x128xf32> to vector<2x32xf32>
    %228 = arith.mulf %227, %207 : vector<2x32xf32>
    %229 = vector.extract_strided_slice %224 {offsets = [0, 0], sizes = [2, 32], strides = [1, 1]} : vector<2x128xf32> to vector<2x32xf32>
    %230 = arith.mulf %229, %226 : vector<2x32xf32>
    %231 = arith.addf %228, %230 : vector<2x32xf32>
    %232 = vector.extract_strided_slice %224 {offsets = [0, 96], sizes = [2, 32], strides = [1, 1]} : vector<2x128xf32> to vector<2x32xf32>
    %233 = math.tanh %231 : vector<2x32xf32>
    %234 = arith.mulf %232, %233 : vector<2x32xf32>
    %235 = vector.extract_strided_slice %57 {offsets = [7, 0], sizes = [1, 128], strides = [1, 1]} : vector<8x128xf32> to vector<1x128xf32>
    %236 = vector.extract_strided_slice %234 {offsets = [0, 0], sizes = [1, 32], strides = [1, 1]} : vector<2x32xf32> to vector<1x32xf32>
    %cst_63 = arith.constant dense<0.000000e+00> : vector<1x128xf32>
    %237 = tpu.matmul %236, %63, %cst_63 {dimension_numbers = #tpu.dot_dimension_numbers<[1], [0], [0], [1], [0, 0, 1, 1], [], []>} : vector<1x32xf32>, vector<32x128xf32>, vector<1x128xf32> -> vector<1x128xf32>
    %238 = arith.addf %235, %237 : vector<1x128xf32>
    %239 = vector.extract_strided_slice %62 {offsets = [7, 0], sizes = [1, 128], strides = [1, 1]} : vector<8x128xf32> to vector<1x128xf32>
    %240 = vector.extract_strided_slice %234 {offsets = [1, 0], sizes = [1, 32], strides = [1, 1]} : vector<2x32xf32> to vector<1x32xf32>
    %cst_64 = arith.constant dense<0.000000e+00> : vector<1x128xf32>
    %241 = tpu.matmul %240, %64, %cst_64 {dimension_numbers = #tpu.dot_dimension_numbers<[1], [0], [0], [1], [0, 0, 1, 1], [], []>} : vector<1x32xf32>, vector<32x128xf32>, vector<1x128xf32> -> vector<1x128xf32>
    %242 = arith.addf %239, %241 : vector<1x128xf32>
    %243 = tpu.concatenate %238, %242 in 0 : vector<1x128xf32>, vector<1x128xf32> -> vector<2x128xf32>
    %244 = arith.negf %243 : vector<2x128xf32>
    %245 = math.exp %244 : vector<2x128xf32>
    %cst_65 = arith.constant 1.000000e+00 : f32
    %246 = vector.broadcast %cst_65 : f32 to vector<2x128xf32>
    %247 = arith.addf %246, %245 : vector<2x128xf32>
    %248 = arith.divf %246, %247 : vector<2x128xf32>
    %249 = vector.extract_strided_slice %243 {offsets = [0, 64], sizes = [2, 32], strides = [1, 1]} : vector<2x128xf32> to vector<2x32xf32>
    %250 = math.tanh %249 : vector<2x32xf32>
    %251 = vector.extract_strided_slice %248 {offsets = [0, 32], sizes = [2, 32], strides = [1, 1]} : vector<2x128xf32> to vector<2x32xf32>
    %252 = arith.mulf %251, %231 : vector<2x32xf32>
    %253 = vector.extract_strided_slice %248 {offsets = [0, 0], sizes = [2, 32], strides = [1, 1]} : vector<2x128xf32> to vector<2x32xf32>
    %254 = arith.mulf %253, %250 : vector<2x32xf32>
    %255 = arith.addf %252, %254 : vector<2x32xf32>
    %256 = vector.extract_strided_slice %248 {offsets = [0, 96], sizes = [2, 32], strides = [1, 1]} : vector<2x128xf32> to vector<2x32xf32>
    %257 = math.tanh %255 : vector<2x32xf32>
    %258 = arith.mulf %256, %257 : vector<2x32xf32>
    %259 = vector.extract_strided_slice %90 {offsets = [0, 0], sizes = [1, 32], strides = [1, 1]} : vector<2x32xf32> to vector<1x32xf32>
    %260 = vector.extract_strided_slice %114 {offsets = [0, 0], sizes = [1, 32], strides = [1, 1]} : vector<2x32xf32> to vector<1x32xf32>
    %261 = vector.extract_strided_slice %138 {offsets = [0, 0], sizes = [1, 32], strides = [1, 1]} : vector<2x32xf32> to vector<1x32xf32>
    %262 = vector.extract_strided_slice %162 {offsets = [0, 0], sizes = [1, 32], strides = [1, 1]} : vector<2x32xf32> to vector<1x32xf32>
    %263 = vector.extract_strided_slice %186 {offsets = [0, 0], sizes = [1, 32], strides = [1, 1]} : vector<2x32xf32> to vector<1x32xf32>
    %264 = vector.extract_strided_slice %210 {offsets = [0, 0], sizes = [1, 32], strides = [1, 1]} : vector<2x32xf32> to vector<1x32xf32>
    %265 = vector.extract_strided_slice %234 {offsets = [0, 0], sizes = [1, 32], strides = [1, 1]} : vector<2x32xf32> to vector<1x32xf32>
    %266 = vector.extract_strided_slice %258 {offsets = [0, 0], sizes = [1, 32], strides = [1, 1]} : vector<2x32xf32> to vector<1x32xf32>
    %267 = tpu.concatenate %259, %260, %261, %262, %263, %264, %265, %266 in 0 : vector<1x32xf32>, vector<1x32xf32>, vector<1x32xf32>, vector<1x32xf32>, vector<1x32xf32>, vector<1x32xf32>, vector<1x32xf32>, vector<1x32xf32> -> vector<8x32xf32>
    %268 = vector.extract_strided_slice %90 {offsets = [1, 0], sizes = [1, 32], strides = [1, 1]} : vector<2x32xf32> to vector<1x32xf32>
    %269 = vector.extract_strided_slice %114 {offsets = [1, 0], sizes = [1, 32], strides = [1, 1]} : vector<2x32xf32> to vector<1x32xf32>
    %270 = vector.extract_strided_slice %138 {offsets = [1, 0], sizes = [1, 32], strides = [1, 1]} : vector<2x32xf32> to vector<1x32xf32>
    %271 = vector.extract_strided_slice %162 {offsets = [1, 0], sizes = [1, 32], strides = [1, 1]} : vector<2x32xf32> to vector<1x32xf32>
    %272 = vector.extract_strided_slice %186 {offsets = [1, 0], sizes = [1, 32], strides = [1, 1]} : vector<2x32xf32> to vector<1x32xf32>
    %273 = vector.extract_strided_slice %210 {offsets = [1, 0], sizes = [1, 32], strides = [1, 1]} : vector<2x32xf32> to vector<1x32xf32>
    %274 = vector.extract_strided_slice %234 {offsets = [1, 0], sizes = [1, 32], strides = [1, 1]} : vector<2x32xf32> to vector<1x32xf32>
    %275 = vector.extract_strided_slice %258 {offsets = [1, 0], sizes = [1, 32], strides = [1, 1]} : vector<2x32xf32> to vector<1x32xf32>
    %276 = tpu.concatenate %268, %269, %270, %271, %272, %273, %274, %275 in 0 : vector<1x32xf32>, vector<1x32xf32>, vector<1x32xf32>, vector<1x32xf32>, vector<1x32xf32>, vector<1x32xf32>, vector<1x32xf32>, vector<1x32xf32> -> vector<8x32xf32>
    %c0_66 = arith.constant 0 : index
    %c0_67 = arith.constant 0 : index
    %277 = vector.load %arg11[%c0_66, %c0_67] : memref<32x128xf32, #tpu.memory_space<vmem>>, vector<32x128xf32>
    %cst_68 = arith.constant dense<0.000000e+00> : vector<8x128xf32>
    %278 = tpu.matmul %267, %277, %cst_68 {dimension_numbers = #tpu.dot_dimension_numbers<[1], [0], [0], [1], [0, 0, 1, 1], [], []>} : vector<8x32xf32>, vector<32x128xf32>, vector<8x128xf32> -> vector<8x128xf32>
    %c0_69 = arith.constant 0 : index
    %c0_70 = arith.constant 0 : index
    %279 = vector.load %arg13[%c0_69, %c0_70] : memref<1x128xf32, #tpu.memory_space<vmem>>, vector<1x128xf32>
    %280 = vector.broadcast %279 : vector<1x128xf32> to vector<8x128xf32>
    %281 = arith.addf %278, %280 : vector<8x128xf32>
    %c0_71 = arith.constant 0 : index
    %c0_72 = arith.constant 0 : index
    %282 = vector.load %arg14[%c0_71, %c0_72] : memref<32x128xf32, #tpu.memory_space<vmem>>, vector<32x128xf32>
    %cst_73 = arith.constant dense<0.000000e+00> : vector<8x128xf32>
    %283 = tpu.matmul %276, %282, %cst_73 {dimension_numbers = #tpu.dot_dimension_numbers<[1], [0], [0], [1], [0, 0, 1, 1], [], []>} : vector<8x32xf32>, vector<32x128xf32>, vector<8x128xf32> -> vector<8x128xf32>
    %c0_74 = arith.constant 0 : index
    %c0_75 = arith.constant 0 : index
    %284 = vector.load %arg16[%c0_74, %c0_75] : memref<1x128xf32, #tpu.memory_space<vmem>>, vector<1x128xf32>
    %285 = vector.broadcast %284 : vector<1x128xf32> to vector<8x128xf32>
    %286 = arith.addf %283, %285 : vector<8x128xf32>
    %c0_76 = arith.constant 0 : index
    %c0_77 = arith.constant 0 : index
    %287 = vector.load %arg12[%c0_76, %c0_77] : memref<32x128xf32, #tpu.memory_space<vmem>>, vector<32x128xf32>
    %c0_78 = arith.constant 0 : index
    %c0_79 = arith.constant 0 : index
    %288 = vector.load %arg15[%c0_78, %c0_79] : memref<32x128xf32, #tpu.memory_space<vmem>>, vector<32x128xf32>
    %cst_80 = arith.constant 0.000000e+00 : f32
    %289 = vector.broadcast %cst_80 : f32 to vector<2x32xf32>
    %cst_81 = arith.constant 0.000000e+00 : f32
    %290 = vector.broadcast %cst_81 : f32 to vector<2x32xf32>
    %291 = vector.extract_strided_slice %281 {offsets = [0, 0], sizes = [1, 128], strides = [1, 1]} : vector<8x128xf32> to vector<1x128xf32>
    %292 = vector.extract_strided_slice %289 {offsets = [0, 0], sizes = [1, 32], strides = [1, 1]} : vector<2x32xf32> to vector<1x32xf32>
    %cst_82 = arith.constant dense<0.000000e+00> : vector<1x128xf32>
    %293 = tpu.matmul %292, %287, %cst_82 {dimension_numbers = #tpu.dot_dimension_numbers<[1], [0], [0], [1], [0, 0, 1, 1], [], []>} : vector<1x32xf32>, vector<32x128xf32>, vector<1x128xf32> -> vector<1x128xf32>
    %294 = arith.addf %291, %293 : vector<1x128xf32>
    %295 = vector.extract_strided_slice %286 {offsets = [0, 0], sizes = [1, 128], strides = [1, 1]} : vector<8x128xf32> to vector<1x128xf32>
    %296 = vector.extract_strided_slice %289 {offsets = [1, 0], sizes = [1, 32], strides = [1, 1]} : vector<2x32xf32> to vector<1x32xf32>
    %cst_83 = arith.constant dense<0.000000e+00> : vector<1x128xf32>
    %297 = tpu.matmul %296, %288, %cst_83 {dimension_numbers = #tpu.dot_dimension_numbers<[1], [0], [0], [1], [0, 0, 1, 1], [], []>} : vector<1x32xf32>, vector<32x128xf32>, vector<1x128xf32> -> vector<1x128xf32>
    %298 = arith.addf %295, %297 : vector<1x128xf32>
    %299 = tpu.concatenate %294, %298 in 0 : vector<1x128xf32>, vector<1x128xf32> -> vector<2x128xf32>
    %300 = arith.negf %299 : vector<2x128xf32>
    %301 = math.exp %300 : vector<2x128xf32>
    %cst_84 = arith.constant 1.000000e+00 : f32
    %302 = vector.broadcast %cst_84 : f32 to vector<2x128xf32>
    %303 = arith.addf %302, %301 : vector<2x128xf32>
    %304 = arith.divf %302, %303 : vector<2x128xf32>
    %305 = vector.extract_strided_slice %299 {offsets = [0, 64], sizes = [2, 32], strides = [1, 1]} : vector<2x128xf32> to vector<2x32xf32>
    %306 = math.tanh %305 : vector<2x32xf32>
    %307 = vector.extract_strided_slice %304 {offsets = [0, 32], sizes = [2, 32], strides = [1, 1]} : vector<2x128xf32> to vector<2x32xf32>
    %308 = arith.mulf %307, %290 : vector<2x32xf32>
    %309 = vector.extract_strided_slice %304 {offsets = [0, 0], sizes = [2, 32], strides = [1, 1]} : vector<2x128xf32> to vector<2x32xf32>
    %310 = arith.mulf %309, %306 : vector<2x32xf32>
    %311 = arith.addf %308, %310 : vector<2x32xf32>
    %312 = vector.extract_strided_slice %304 {offsets = [0, 96], sizes = [2, 32], strides = [1, 1]} : vector<2x128xf32> to vector<2x32xf32>
    %313 = math.tanh %311 : vector<2x32xf32>
    %314 = arith.mulf %312, %313 : vector<2x32xf32>
    %315 = vector.extract_strided_slice %281 {offsets = [1, 0], sizes = [1, 128], strides = [1, 1]} : vector<8x128xf32> to vector<1x128xf32>
    %316 = vector.extract_strided_slice %314 {offsets = [0, 0], sizes = [1, 32], strides = [1, 1]} : vector<2x32xf32> to vector<1x32xf32>
    %cst_85 = arith.constant dense<0.000000e+00> : vector<1x128xf32>
    %317 = tpu.matmul %316, %287, %cst_85 {dimension_numbers = #tpu.dot_dimension_numbers<[1], [0], [0], [1], [0, 0, 1, 1], [], []>} : vector<1x32xf32>, vector<32x128xf32>, vector<1x128xf32> -> vector<1x128xf32>
    %318 = arith.addf %315, %317 : vector<1x128xf32>
    %319 = vector.extract_strided_slice %286 {offsets = [1, 0], sizes = [1, 128], strides = [1, 1]} : vector<8x128xf32> to vector<1x128xf32>
    %320 = vector.extract_strided_slice %314 {offsets = [1, 0], sizes = [1, 32], strides = [1, 1]} : vector<2x32xf32> to vector<1x32xf32>
    %cst_86 = arith.constant dense<0.000000e+00> : vector<1x128xf32>
    %321 = tpu.matmul %320, %288, %cst_86 {dimension_numbers = #tpu.dot_dimension_numbers<[1], [0], [0], [1], [0, 0, 1, 1], [], []>} : vector<1x32xf32>, vector<32x128xf32>, vector<1x128xf32> -> vector<1x128xf32>
    %322 = arith.addf %319, %321 : vector<1x128xf32>
    %323 = tpu.concatenate %318, %322 in 0 : vector<1x128xf32>, vector<1x128xf32> -> vector<2x128xf32>
    %324 = arith.negf %323 : vector<2x128xf32>
    %325 = math.exp %324 : vector<2x128xf32>
    %cst_87 = arith.constant 1.000000e+00 : f32
    %326 = vector.broadcast %cst_87 : f32 to vector<2x128xf32>
    %327 = arith.addf %326, %325 : vector<2x128xf32>
    %328 = arith.divf %326, %327 : vector<2x128xf32>
    %329 = vector.extract_strided_slice %323 {offsets = [0, 64], sizes = [2, 32], strides = [1, 1]} : vector<2x128xf32> to vector<2x32xf32>
    %330 = math.tanh %329 : vector<2x32xf32>
    %331 = vector.extract_strided_slice %328 {offsets = [0, 32], sizes = [2, 32], strides = [1, 1]} : vector<2x128xf32> to vector<2x32xf32>
    %332 = arith.mulf %331, %311 : vector<2x32xf32>
    %333 = vector.extract_strided_slice %328 {offsets = [0, 0], sizes = [2, 32], strides = [1, 1]} : vector<2x128xf32> to vector<2x32xf32>
    %334 = arith.mulf %333, %330 : vector<2x32xf32>
    %335 = arith.addf %332, %334 : vector<2x32xf32>
    %336 = vector.extract_strided_slice %328 {offsets = [0, 96], sizes = [2, 32], strides = [1, 1]} : vector<2x128xf32> to vector<2x32xf32>
    %337 = math.tanh %335 : vector<2x32xf32>
    %338 = arith.mulf %336, %337 : vector<2x32xf32>
    %339 = vector.extract_strided_slice %281 {offsets = [2, 0], sizes = [1, 128], strides = [1, 1]} : vector<8x128xf32> to vector<1x128xf32>
    %340 = vector.extract_strided_slice %338 {offsets = [0, 0], sizes = [1, 32], strides = [1, 1]} : vector<2x32xf32> to vector<1x32xf32>
    %cst_88 = arith.constant dense<0.000000e+00> : vector<1x128xf32>
    %341 = tpu.matmul %340, %287, %cst_88 {dimension_numbers = #tpu.dot_dimension_numbers<[1], [0], [0], [1], [0, 0, 1, 1], [], []>} : vector<1x32xf32>, vector<32x128xf32>, vector<1x128xf32> -> vector<1x128xf32>
    %342 = arith.addf %339, %341 : vector<1x128xf32>
    %343 = vector.extract_strided_slice %286 {offsets = [2, 0], sizes = [1, 128], strides = [1, 1]} : vector<8x128xf32> to vector<1x128xf32>
    %344 = vector.extract_strided_slice %338 {offsets = [1, 0], sizes = [1, 32], strides = [1, 1]} : vector<2x32xf32> to vector<1x32xf32>
    %cst_89 = arith.constant dense<0.000000e+00> : vector<1x128xf32>
    %345 = tpu.matmul %344, %288, %cst_89 {dimension_numbers = #tpu.dot_dimension_numbers<[1], [0], [0], [1], [0, 0, 1, 1], [], []>} : vector<1x32xf32>, vector<32x128xf32>, vector<1x128xf32> -> vector<1x128xf32>
    %346 = arith.addf %343, %345 : vector<1x128xf32>
    %347 = tpu.concatenate %342, %346 in 0 : vector<1x128xf32>, vector<1x128xf32> -> vector<2x128xf32>
    %348 = arith.negf %347 : vector<2x128xf32>
    %349 = math.exp %348 : vector<2x128xf32>
    %cst_90 = arith.constant 1.000000e+00 : f32
    %350 = vector.broadcast %cst_90 : f32 to vector<2x128xf32>
    %351 = arith.addf %350, %349 : vector<2x128xf32>
    %352 = arith.divf %350, %351 : vector<2x128xf32>
    %353 = vector.extract_strided_slice %347 {offsets = [0, 64], sizes = [2, 32], strides = [1, 1]} : vector<2x128xf32> to vector<2x32xf32>
    %354 = math.tanh %353 : vector<2x32xf32>
    %355 = vector.extract_strided_slice %352 {offsets = [0, 32], sizes = [2, 32], strides = [1, 1]} : vector<2x128xf32> to vector<2x32xf32>
    %356 = arith.mulf %355, %335 : vector<2x32xf32>
    %357 = vector.extract_strided_slice %352 {offsets = [0, 0], sizes = [2, 32], strides = [1, 1]} : vector<2x128xf32> to vector<2x32xf32>
    %358 = arith.mulf %357, %354 : vector<2x32xf32>
    %359 = arith.addf %356, %358 : vector<2x32xf32>
    %360 = vector.extract_strided_slice %352 {offsets = [0, 96], sizes = [2, 32], strides = [1, 1]} : vector<2x128xf32> to vector<2x32xf32>
    %361 = math.tanh %359 : vector<2x32xf32>
    %362 = arith.mulf %360, %361 : vector<2x32xf32>
    %363 = vector.extract_strided_slice %281 {offsets = [3, 0], sizes = [1, 128], strides = [1, 1]} : vector<8x128xf32> to vector<1x128xf32>
    %364 = vector.extract_strided_slice %362 {offsets = [0, 0], sizes = [1, 32], strides = [1, 1]} : vector<2x32xf32> to vector<1x32xf32>
    %cst_91 = arith.constant dense<0.000000e+00> : vector<1x128xf32>
    %365 = tpu.matmul %364, %287, %cst_91 {dimension_numbers = #tpu.dot_dimension_numbers<[1], [0], [0], [1], [0, 0, 1, 1], [], []>} : vector<1x32xf32>, vector<32x128xf32>, vector<1x128xf32> -> vector<1x128xf32>
    %366 = arith.addf %363, %365 : vector<1x128xf32>
    %367 = vector.extract_strided_slice %286 {offsets = [3, 0], sizes = [1, 128], strides = [1, 1]} : vector<8x128xf32> to vector<1x128xf32>
    %368 = vector.extract_strided_slice %362 {offsets = [1, 0], sizes = [1, 32], strides = [1, 1]} : vector<2x32xf32> to vector<1x32xf32>
    %cst_92 = arith.constant dense<0.000000e+00> : vector<1x128xf32>
    %369 = tpu.matmul %368, %288, %cst_92 {dimension_numbers = #tpu.dot_dimension_numbers<[1], [0], [0], [1], [0, 0, 1, 1], [], []>} : vector<1x32xf32>, vector<32x128xf32>, vector<1x128xf32> -> vector<1x128xf32>
    %370 = arith.addf %367, %369 : vector<1x128xf32>
    %371 = tpu.concatenate %366, %370 in 0 : vector<1x128xf32>, vector<1x128xf32> -> vector<2x128xf32>
    %372 = arith.negf %371 : vector<2x128xf32>
    %373 = math.exp %372 : vector<2x128xf32>
    %cst_93 = arith.constant 1.000000e+00 : f32
    %374 = vector.broadcast %cst_93 : f32 to vector<2x128xf32>
    %375 = arith.addf %374, %373 : vector<2x128xf32>
    %376 = arith.divf %374, %375 : vector<2x128xf32>
    %377 = vector.extract_strided_slice %371 {offsets = [0, 64], sizes = [2, 32], strides = [1, 1]} : vector<2x128xf32> to vector<2x32xf32>
    %378 = math.tanh %377 : vector<2x32xf32>
    %379 = vector.extract_strided_slice %376 {offsets = [0, 32], sizes = [2, 32], strides = [1, 1]} : vector<2x128xf32> to vector<2x32xf32>
    %380 = arith.mulf %379, %359 : vector<2x32xf32>
    %381 = vector.extract_strided_slice %376 {offsets = [0, 0], sizes = [2, 32], strides = [1, 1]} : vector<2x128xf32> to vector<2x32xf32>
    %382 = arith.mulf %381, %378 : vector<2x32xf32>
    %383 = arith.addf %380, %382 : vector<2x32xf32>
    %384 = vector.extract_strided_slice %376 {offsets = [0, 96], sizes = [2, 32], strides = [1, 1]} : vector<2x128xf32> to vector<2x32xf32>
    %385 = math.tanh %383 : vector<2x32xf32>
    %386 = arith.mulf %384, %385 : vector<2x32xf32>
    %387 = vector.extract_strided_slice %281 {offsets = [4, 0], sizes = [1, 128], strides = [1, 1]} : vector<8x128xf32> to vector<1x128xf32>
    %388 = vector.extract_strided_slice %386 {offsets = [0, 0], sizes = [1, 32], strides = [1, 1]} : vector<2x32xf32> to vector<1x32xf32>
    %cst_94 = arith.constant dense<0.000000e+00> : vector<1x128xf32>
    %389 = tpu.matmul %388, %287, %cst_94 {dimension_numbers = #tpu.dot_dimension_numbers<[1], [0], [0], [1], [0, 0, 1, 1], [], []>} : vector<1x32xf32>, vector<32x128xf32>, vector<1x128xf32> -> vector<1x128xf32>
    %390 = arith.addf %387, %389 : vector<1x128xf32>
    %391 = vector.extract_strided_slice %286 {offsets = [4, 0], sizes = [1, 128], strides = [1, 1]} : vector<8x128xf32> to vector<1x128xf32>
    %392 = vector.extract_strided_slice %386 {offsets = [1, 0], sizes = [1, 32], strides = [1, 1]} : vector<2x32xf32> to vector<1x32xf32>
    %cst_95 = arith.constant dense<0.000000e+00> : vector<1x128xf32>
    %393 = tpu.matmul %392, %288, %cst_95 {dimension_numbers = #tpu.dot_dimension_numbers<[1], [0], [0], [1], [0, 0, 1, 1], [], []>} : vector<1x32xf32>, vector<32x128xf32>, vector<1x128xf32> -> vector<1x128xf32>
    %394 = arith.addf %391, %393 : vector<1x128xf32>
    %395 = tpu.concatenate %390, %394 in 0 : vector<1x128xf32>, vector<1x128xf32> -> vector<2x128xf32>
    %396 = arith.negf %395 : vector<2x128xf32>
    %397 = math.exp %396 : vector<2x128xf32>
    %cst_96 = arith.constant 1.000000e+00 : f32
    %398 = vector.broadcast %cst_96 : f32 to vector<2x128xf32>
    %399 = arith.addf %398, %397 : vector<2x128xf32>
    %400 = arith.divf %398, %399 : vector<2x128xf32>
    %401 = vector.extract_strided_slice %395 {offsets = [0, 64], sizes = [2, 32], strides = [1, 1]} : vector<2x128xf32> to vector<2x32xf32>
    %402 = math.tanh %401 : vector<2x32xf32>
    %403 = vector.extract_strided_slice %400 {offsets = [0, 32], sizes = [2, 32], strides = [1, 1]} : vector<2x128xf32> to vector<2x32xf32>
    %404 = arith.mulf %403, %383 : vector<2x32xf32>
    %405 = vector.extract_strided_slice %400 {offsets = [0, 0], sizes = [2, 32], strides = [1, 1]} : vector<2x128xf32> to vector<2x32xf32>
    %406 = arith.mulf %405, %402 : vector<2x32xf32>
    %407 = arith.addf %404, %406 : vector<2x32xf32>
    %408 = vector.extract_strided_slice %400 {offsets = [0, 96], sizes = [2, 32], strides = [1, 1]} : vector<2x128xf32> to vector<2x32xf32>
    %409 = math.tanh %407 : vector<2x32xf32>
    %410 = arith.mulf %408, %409 : vector<2x32xf32>
    %411 = vector.extract_strided_slice %281 {offsets = [5, 0], sizes = [1, 128], strides = [1, 1]} : vector<8x128xf32> to vector<1x128xf32>
    %412 = vector.extract_strided_slice %410 {offsets = [0, 0], sizes = [1, 32], strides = [1, 1]} : vector<2x32xf32> to vector<1x32xf32>
    %cst_97 = arith.constant dense<0.000000e+00> : vector<1x128xf32>
    %413 = tpu.matmul %412, %287, %cst_97 {dimension_numbers = #tpu.dot_dimension_numbers<[1], [0], [0], [1], [0, 0, 1, 1], [], []>} : vector<1x32xf32>, vector<32x128xf32>, vector<1x128xf32> -> vector<1x128xf32>
    %414 = arith.addf %411, %413 : vector<1x128xf32>
    %415 = vector.extract_strided_slice %286 {offsets = [5, 0], sizes = [1, 128], strides = [1, 1]} : vector<8x128xf32> to vector<1x128xf32>
    %416 = vector.extract_strided_slice %410 {offsets = [1, 0], sizes = [1, 32], strides = [1, 1]} : vector<2x32xf32> to vector<1x32xf32>
    %cst_98 = arith.constant dense<0.000000e+00> : vector<1x128xf32>
    %417 = tpu.matmul %416, %288, %cst_98 {dimension_numbers = #tpu.dot_dimension_numbers<[1], [0], [0], [1], [0, 0, 1, 1], [], []>} : vector<1x32xf32>, vector<32x128xf32>, vector<1x128xf32> -> vector<1x128xf32>
    %418 = arith.addf %415, %417 : vector<1x128xf32>
    %419 = tpu.concatenate %414, %418 in 0 : vector<1x128xf32>, vector<1x128xf32> -> vector<2x128xf32>
    %420 = arith.negf %419 : vector<2x128xf32>
    %421 = math.exp %420 : vector<2x128xf32>
    %cst_99 = arith.constant 1.000000e+00 : f32
    %422 = vector.broadcast %cst_99 : f32 to vector<2x128xf32>
    %423 = arith.addf %422, %421 : vector<2x128xf32>
    %424 = arith.divf %422, %423 : vector<2x128xf32>
    %425 = vector.extract_strided_slice %419 {offsets = [0, 64], sizes = [2, 32], strides = [1, 1]} : vector<2x128xf32> to vector<2x32xf32>
    %426 = math.tanh %425 : vector<2x32xf32>
    %427 = vector.extract_strided_slice %424 {offsets = [0, 32], sizes = [2, 32], strides = [1, 1]} : vector<2x128xf32> to vector<2x32xf32>
    %428 = arith.mulf %427, %407 : vector<2x32xf32>
    %429 = vector.extract_strided_slice %424 {offsets = [0, 0], sizes = [2, 32], strides = [1, 1]} : vector<2x128xf32> to vector<2x32xf32>
    %430 = arith.mulf %429, %426 : vector<2x32xf32>
    %431 = arith.addf %428, %430 : vector<2x32xf32>
    %432 = vector.extract_strided_slice %424 {offsets = [0, 96], sizes = [2, 32], strides = [1, 1]} : vector<2x128xf32> to vector<2x32xf32>
    %433 = math.tanh %431 : vector<2x32xf32>
    %434 = arith.mulf %432, %433 : vector<2x32xf32>
    %435 = vector.extract_strided_slice %281 {offsets = [6, 0], sizes = [1, 128], strides = [1, 1]} : vector<8x128xf32> to vector<1x128xf32>
    %436 = vector.extract_strided_slice %434 {offsets = [0, 0], sizes = [1, 32], strides = [1, 1]} : vector<2x32xf32> to vector<1x32xf32>
    %cst_100 = arith.constant dense<0.000000e+00> : vector<1x128xf32>
    %437 = tpu.matmul %436, %287, %cst_100 {dimension_numbers = #tpu.dot_dimension_numbers<[1], [0], [0], [1], [0, 0, 1, 1], [], []>} : vector<1x32xf32>, vector<32x128xf32>, vector<1x128xf32> -> vector<1x128xf32>
    %438 = arith.addf %435, %437 : vector<1x128xf32>
    %439 = vector.extract_strided_slice %286 {offsets = [6, 0], sizes = [1, 128], strides = [1, 1]} : vector<8x128xf32> to vector<1x128xf32>
    %440 = vector.extract_strided_slice %434 {offsets = [1, 0], sizes = [1, 32], strides = [1, 1]} : vector<2x32xf32> to vector<1x32xf32>
    %cst_101 = arith.constant dense<0.000000e+00> : vector<1x128xf32>
    %441 = tpu.matmul %440, %288, %cst_101 {dimension_numbers = #tpu.dot_dimension_numbers<[1], [0], [0], [1], [0, 0, 1, 1], [], []>} : vector<1x32xf32>, vector<32x128xf32>, vector<1x128xf32> -> vector<1x128xf32>
    %442 = arith.addf %439, %441 : vector<1x128xf32>
    %443 = tpu.concatenate %438, %442 in 0 : vector<1x128xf32>, vector<1x128xf32> -> vector<2x128xf32>
    %444 = arith.negf %443 : vector<2x128xf32>
    %445 = math.exp %444 : vector<2x128xf32>
    %cst_102 = arith.constant 1.000000e+00 : f32
    %446 = vector.broadcast %cst_102 : f32 to vector<2x128xf32>
    %447 = arith.addf %446, %445 : vector<2x128xf32>
    %448 = arith.divf %446, %447 : vector<2x128xf32>
    %449 = vector.extract_strided_slice %443 {offsets = [0, 64], sizes = [2, 32], strides = [1, 1]} : vector<2x128xf32> to vector<2x32xf32>
    %450 = math.tanh %449 : vector<2x32xf32>
    %451 = vector.extract_strided_slice %448 {offsets = [0, 32], sizes = [2, 32], strides = [1, 1]} : vector<2x128xf32> to vector<2x32xf32>
    %452 = arith.mulf %451, %431 : vector<2x32xf32>
    %453 = vector.extract_strided_slice %448 {offsets = [0, 0], sizes = [2, 32], strides = [1, 1]} : vector<2x128xf32> to vector<2x32xf32>
    %454 = arith.mulf %453, %450 : vector<2x32xf32>
    %455 = arith.addf %452, %454 : vector<2x32xf32>
    %456 = vector.extract_strided_slice %448 {offsets = [0, 96], sizes = [2, 32], strides = [1, 1]} : vector<2x128xf32> to vector<2x32xf32>
    %457 = math.tanh %455 : vector<2x32xf32>
    %458 = arith.mulf %456, %457 : vector<2x32xf32>
    %459 = vector.extract_strided_slice %281 {offsets = [7, 0], sizes = [1, 128], strides = [1, 1]} : vector<8x128xf32> to vector<1x128xf32>
    %460 = vector.extract_strided_slice %458 {offsets = [0, 0], sizes = [1, 32], strides = [1, 1]} : vector<2x32xf32> to vector<1x32xf32>
    %cst_103 = arith.constant dense<0.000000e+00> : vector<1x128xf32>
    %461 = tpu.matmul %460, %287, %cst_103 {dimension_numbers = #tpu.dot_dimension_numbers<[1], [0], [0], [1], [0, 0, 1, 1], [], []>} : vector<1x32xf32>, vector<32x128xf32>, vector<1x128xf32> -> vector<1x128xf32>
    %462 = arith.addf %459, %461 : vector<1x128xf32>
    %463 = vector.extract_strided_slice %286 {offsets = [7, 0], sizes = [1, 128], strides = [1, 1]} : vector<8x128xf32> to vector<1x128xf32>
    %464 = vector.extract_strided_slice %458 {offsets = [1, 0], sizes = [1, 32], strides = [1, 1]} : vector<2x32xf32> to vector<1x32xf32>
    %cst_104 = arith.constant dense<0.000000e+00> : vector<1x128xf32>
    %465 = tpu.matmul %464, %288, %cst_104 {dimension_numbers = #tpu.dot_dimension_numbers<[1], [0], [0], [1], [0, 0, 1, 1], [], []>} : vector<1x32xf32>, vector<32x128xf32>, vector<1x128xf32> -> vector<1x128xf32>
    %466 = arith.addf %463, %465 : vector<1x128xf32>
    %467 = tpu.concatenate %462, %466 in 0 : vector<1x128xf32>, vector<1x128xf32> -> vector<2x128xf32>
    %468 = arith.negf %467 : vector<2x128xf32>
    %469 = math.exp %468 : vector<2x128xf32>
    %cst_105 = arith.constant 1.000000e+00 : f32
    %470 = vector.broadcast %cst_105 : f32 to vector<2x128xf32>
    %471 = arith.addf %470, %469 : vector<2x128xf32>
    %472 = arith.divf %470, %471 : vector<2x128xf32>
    %473 = vector.extract_strided_slice %467 {offsets = [0, 64], sizes = [2, 32], strides = [1, 1]} : vector<2x128xf32> to vector<2x32xf32>
    %474 = math.tanh %473 : vector<2x32xf32>
    %475 = vector.extract_strided_slice %472 {offsets = [0, 32], sizes = [2, 32], strides = [1, 1]} : vector<2x128xf32> to vector<2x32xf32>
    %476 = arith.mulf %475, %455 : vector<2x32xf32>
    %477 = vector.extract_strided_slice %472 {offsets = [0, 0], sizes = [2, 32], strides = [1, 1]} : vector<2x128xf32> to vector<2x32xf32>
    %478 = arith.mulf %477, %474 : vector<2x32xf32>
    %479 = arith.addf %476, %478 : vector<2x32xf32>
    %480 = vector.extract_strided_slice %472 {offsets = [0, 96], sizes = [2, 32], strides = [1, 1]} : vector<2x128xf32> to vector<2x32xf32>
    %481 = math.tanh %479 : vector<2x32xf32>
    %482 = arith.mulf %480, %481 : vector<2x32xf32>
    %483 = vector.extract_strided_slice %314 {offsets = [0, 0], sizes = [1, 32], strides = [1, 1]} : vector<2x32xf32> to vector<1x32xf32>
    %484 = vector.extract_strided_slice %338 {offsets = [0, 0], sizes = [1, 32], strides = [1, 1]} : vector<2x32xf32> to vector<1x32xf32>
    %485 = vector.extract_strided_slice %362 {offsets = [0, 0], sizes = [1, 32], strides = [1, 1]} : vector<2x32xf32> to vector<1x32xf32>
    %486 = vector.extract_strided_slice %386 {offsets = [0, 0], sizes = [1, 32], strides = [1, 1]} : vector<2x32xf32> to vector<1x32xf32>
    %487 = vector.extract_strided_slice %410 {offsets = [0, 0], sizes = [1, 32], strides = [1, 1]} : vector<2x32xf32> to vector<1x32xf32>
    %488 = vector.extract_strided_slice %434 {offsets = [0, 0], sizes = [1, 32], strides = [1, 1]} : vector<2x32xf32> to vector<1x32xf32>
    %489 = vector.extract_strided_slice %458 {offsets = [0, 0], sizes = [1, 32], strides = [1, 1]} : vector<2x32xf32> to vector<1x32xf32>
    %490 = vector.extract_strided_slice %482 {offsets = [0, 0], sizes = [1, 32], strides = [1, 1]} : vector<2x32xf32> to vector<1x32xf32>
    %491 = tpu.concatenate %483, %484, %485, %486, %487, %488, %489, %490 in 0 : vector<1x32xf32>, vector<1x32xf32>, vector<1x32xf32>, vector<1x32xf32>, vector<1x32xf32>, vector<1x32xf32>, vector<1x32xf32>, vector<1x32xf32> -> vector<8x32xf32>
    %492 = vector.extract_strided_slice %314 {offsets = [1, 0], sizes = [1, 32], strides = [1, 1]} : vector<2x32xf32> to vector<1x32xf32>
    %493 = vector.extract_strided_slice %338 {offsets = [1, 0], sizes = [1, 32], strides = [1, 1]} : vector<2x32xf32> to vector<1x32xf32>
    %494 = vector.extract_strided_slice %362 {offsets = [1, 0], sizes = [1, 32], strides = [1, 1]} : vector<2x32xf32> to vector<1x32xf32>
    %495 = vector.extract_strided_slice %386 {offsets = [1, 0], sizes = [1, 32], strides = [1, 1]} : vector<2x32xf32> to vector<1x32xf32>
    %496 = vector.extract_strided_slice %410 {offsets = [1, 0], sizes = [1, 32], strides = [1, 1]} : vector<2x32xf32> to vector<1x32xf32>
    %497 = vector.extract_strided_slice %434 {offsets = [1, 0], sizes = [1, 32], strides = [1, 1]} : vector<2x32xf32> to vector<1x32xf32>
    %498 = vector.extract_strided_slice %458 {offsets = [1, 0], sizes = [1, 32], strides = [1, 1]} : vector<2x32xf32> to vector<1x32xf32>
    %499 = vector.extract_strided_slice %482 {offsets = [1, 0], sizes = [1, 32], strides = [1, 1]} : vector<2x32xf32> to vector<1x32xf32>
    %500 = tpu.concatenate %492, %493, %494, %495, %496, %497, %498, %499 in 0 : vector<1x32xf32>, vector<1x32xf32>, vector<1x32xf32>, vector<1x32xf32>, vector<1x32xf32>, vector<1x32xf32>, vector<1x32xf32>, vector<1x32xf32> -> vector<8x32xf32>
    %c0_106 = arith.constant 0 : index
    %c0_107 = arith.constant 0 : index
    %501 = vector.load %arg3[%c0_106, %c0_107] : memref<8x32xf32, #tpu.memory_space<vmem>>, vector<8x32xf32>
    %c0_108 = arith.constant 0 : index
    %c0_109 = arith.constant 0 : index
    %502 = vector.load %arg19[%c0_108, %c0_109] : memref<32x128xf32, #tpu.memory_space<vmem>>, vector<32x128xf32>
    %cst_110 = arith.constant dense<0.000000e+00> : vector<8x128xf32>
    %503 = tpu.matmul %501, %502, %cst_110 {dimension_numbers = #tpu.dot_dimension_numbers<[1], [0], [0], [1], [0, 0, 1, 1], [], []>} : vector<8x32xf32>, vector<32x128xf32>, vector<8x128xf32> -> vector<8x128xf32>
    %504 = vector.broadcast %0 : f32 to vector<8x128xf32>
    %505 = arith.mulf %504, %503 : vector<8x128xf32>
    %c0_111 = arith.constant 0 : index
    %c0_112 = arith.constant 0 : index
    %506 = vector.load %arg17[%c0_111, %c0_112] : memref<32x128xf32, #tpu.memory_space<vmem>>, vector<32x128xf32>
    %cst_113 = arith.constant dense<0.000000e+00> : vector<8x128xf32>
    %507 = tpu.matmul %491, %506, %cst_113 {dimension_numbers = #tpu.dot_dimension_numbers<[1], [0], [0], [1], [0, 0, 1, 1], [], []>} : vector<8x32xf32>, vector<32x128xf32>, vector<8x128xf32> -> vector<8x128xf32>
    %508 = vector.broadcast %1 : f32 to vector<8x128xf32>
    %509 = arith.mulf %508, %507 : vector<8x128xf32>
    %510 = arith.addf %505, %509 : vector<8x128xf32>
    %c0_114 = arith.constant 0 : index
    %c0_115 = arith.constant 0 : index
    %511 = vector.load %arg17[%c0_114, %c0_115] : memref<32x128xf32, #tpu.memory_space<vmem>>, vector<32x128xf32>
    %cst_116 = arith.constant dense<0.000000e+00> : vector<8x128xf32>
    %512 = tpu.matmul %500, %511, %cst_116 {dimension_numbers = #tpu.dot_dimension_numbers<[1], [0], [0], [1], [0, 0, 1, 1], [], []>} : vector<8x32xf32>, vector<32x128xf32>, vector<8x128xf32> -> vector<8x128xf32>
    %513 = vector.broadcast %2 : f32 to vector<8x128xf32>
    %514 = arith.mulf %513, %512 : vector<8x128xf32>
    %515 = arith.addf %510, %514 : vector<8x128xf32>
    %516 = arith.addf %1, %2 : f32
    %c0_117 = arith.constant 0 : index
    %c0_118 = arith.constant 0 : index
    %517 = vector.load %arg18[%c0_117, %c0_118] : memref<1x128xf32, #tpu.memory_space<vmem>>, vector<1x128xf32>
    %518 = vector.broadcast %516 : f32 to vector<1x128xf32>
    %519 = arith.mulf %518, %517 : vector<1x128xf32>
    %520 = vector.broadcast %519 : vector<1x128xf32> to vector<8x128xf32>
    %521 = arith.addf %515, %520 : vector<8x128xf32>
    %c0_119 = arith.constant 0 : index
    %c0_120 = arith.constant 0 : index
    %522 = vector.load %arg21[%c0_119, %c0_120] : memref<1x128xf32, #tpu.memory_space<vmem>>, vector<1x128xf32>
    %523 = vector.broadcast %522 : vector<1x128xf32> to vector<8x128xf32>
    %524 = arith.addf %521, %523 : vector<8x128xf32>
    %c0_121 = arith.constant 0 : index
    %c0_122 = arith.constant 0 : index
    %525 = vector.load %arg20[%c0_121, %c0_122] : memref<32x128xf32, #tpu.memory_space<vmem>>, vector<32x128xf32>
    %cst_123 = arith.constant 0.000000e+00 : f32
    %526 = vector.broadcast %cst_123 : f32 to vector<1x32xf32>
    %cst_124 = arith.constant 0.000000e+00 : f32
    %527 = vector.broadcast %cst_124 : f32 to vector<1x32xf32>
    %cst_125 = arith.constant 0.000000e+00 : f32
    %528 = vector.broadcast %cst_125 : f32 to vector<1x32xf32>
    %529 = vector.extract_strided_slice %524 {offsets = [0, 0], sizes = [1, 128], strides = [1, 1]} : vector<8x128xf32> to vector<1x128xf32>
    %cst_126 = arith.constant dense<0.000000e+00> : vector<1x128xf32>
    %530 = tpu.matmul %526, %525, %cst_126 {dimension_numbers = #tpu.dot_dimension_numbers<[1], [0], [0], [1], [0, 0, 1, 1], [], []>} : vector<1x32xf32>, vector<32x128xf32>, vector<1x128xf32> -> vector<1x128xf32>
    %531 = arith.addf %529, %530 : vector<1x128xf32>
    %532 = arith.negf %531 : vector<1x128xf32>
    %533 = math.exp %532 : vector<1x128xf32>
    %cst_127 = arith.constant 1.000000e+00 : f32
    %534 = vector.broadcast %cst_127 : f32 to vector<1x128xf32>
    %535 = arith.addf %534, %533 : vector<1x128xf32>
    %536 = arith.divf %534, %535 : vector<1x128xf32>
    %537 = vector.extract_strided_slice %531 {offsets = [0, 64], sizes = [1, 32], strides = [1, 1]} : vector<1x128xf32> to vector<1x32xf32>
    %538 = math.tanh %537 : vector<1x32xf32>
    %539 = vector.extract_strided_slice %536 {offsets = [0, 32], sizes = [1, 32], strides = [1, 1]} : vector<1x128xf32> to vector<1x32xf32>
    %540 = arith.mulf %539, %527 : vector<1x32xf32>
    %541 = vector.extract_strided_slice %536 {offsets = [0, 0], sizes = [1, 32], strides = [1, 1]} : vector<1x128xf32> to vector<1x32xf32>
    %542 = arith.mulf %541, %538 : vector<1x32xf32>
    %543 = arith.addf %540, %542 : vector<1x32xf32>
    %544 = vector.extract_strided_slice %536 {offsets = [0, 96], sizes = [1, 32], strides = [1, 1]} : vector<1x128xf32> to vector<1x32xf32>
    %545 = math.tanh %543 : vector<1x32xf32>
    %546 = arith.mulf %544, %545 : vector<1x32xf32>
    %547 = arith.addf %528, %546 : vector<1x32xf32>
    %548 = vector.extract_strided_slice %524 {offsets = [1, 0], sizes = [1, 128], strides = [1, 1]} : vector<8x128xf32> to vector<1x128xf32>
    %cst_128 = arith.constant dense<0.000000e+00> : vector<1x128xf32>
    %549 = tpu.matmul %546, %525, %cst_128 {dimension_numbers = #tpu.dot_dimension_numbers<[1], [0], [0], [1], [0, 0, 1, 1], [], []>} : vector<1x32xf32>, vector<32x128xf32>, vector<1x128xf32> -> vector<1x128xf32>
    %550 = arith.addf %548, %549 : vector<1x128xf32>
    %551 = arith.negf %550 : vector<1x128xf32>
    %552 = math.exp %551 : vector<1x128xf32>
    %cst_129 = arith.constant 1.000000e+00 : f32
    %553 = vector.broadcast %cst_129 : f32 to vector<1x128xf32>
    %554 = arith.addf %553, %552 : vector<1x128xf32>
    %555 = arith.divf %553, %554 : vector<1x128xf32>
    %556 = vector.extract_strided_slice %550 {offsets = [0, 64], sizes = [1, 32], strides = [1, 1]} : vector<1x128xf32> to vector<1x32xf32>
    %557 = math.tanh %556 : vector<1x32xf32>
    %558 = vector.extract_strided_slice %555 {offsets = [0, 32], sizes = [1, 32], strides = [1, 1]} : vector<1x128xf32> to vector<1x32xf32>
    %559 = arith.mulf %558, %543 : vector<1x32xf32>
    %560 = vector.extract_strided_slice %555 {offsets = [0, 0], sizes = [1, 32], strides = [1, 1]} : vector<1x128xf32> to vector<1x32xf32>
    %561 = arith.mulf %560, %557 : vector<1x32xf32>
    %562 = arith.addf %559, %561 : vector<1x32xf32>
    %563 = vector.extract_strided_slice %555 {offsets = [0, 96], sizes = [1, 32], strides = [1, 1]} : vector<1x128xf32> to vector<1x32xf32>
    %564 = math.tanh %562 : vector<1x32xf32>
    %565 = arith.mulf %563, %564 : vector<1x32xf32>
    %566 = arith.addf %547, %565 : vector<1x32xf32>
    %567 = vector.extract_strided_slice %524 {offsets = [2, 0], sizes = [1, 128], strides = [1, 1]} : vector<8x128xf32> to vector<1x128xf32>
    %cst_130 = arith.constant dense<0.000000e+00> : vector<1x128xf32>
    %568 = tpu.matmul %565, %525, %cst_130 {dimension_numbers = #tpu.dot_dimension_numbers<[1], [0], [0], [1], [0, 0, 1, 1], [], []>} : vector<1x32xf32>, vector<32x128xf32>, vector<1x128xf32> -> vector<1x128xf32>
    %569 = arith.addf %567, %568 : vector<1x128xf32>
    %570 = arith.negf %569 : vector<1x128xf32>
    %571 = math.exp %570 : vector<1x128xf32>
    %cst_131 = arith.constant 1.000000e+00 : f32
    %572 = vector.broadcast %cst_131 : f32 to vector<1x128xf32>
    %573 = arith.addf %572, %571 : vector<1x128xf32>
    %574 = arith.divf %572, %573 : vector<1x128xf32>
    %575 = vector.extract_strided_slice %569 {offsets = [0, 64], sizes = [1, 32], strides = [1, 1]} : vector<1x128xf32> to vector<1x32xf32>
    %576 = math.tanh %575 : vector<1x32xf32>
    %577 = vector.extract_strided_slice %574 {offsets = [0, 32], sizes = [1, 32], strides = [1, 1]} : vector<1x128xf32> to vector<1x32xf32>
    %578 = arith.mulf %577, %562 : vector<1x32xf32>
    %579 = vector.extract_strided_slice %574 {offsets = [0, 0], sizes = [1, 32], strides = [1, 1]} : vector<1x128xf32> to vector<1x32xf32>
    %580 = arith.mulf %579, %576 : vector<1x32xf32>
    %581 = arith.addf %578, %580 : vector<1x32xf32>
    %582 = vector.extract_strided_slice %574 {offsets = [0, 96], sizes = [1, 32], strides = [1, 1]} : vector<1x128xf32> to vector<1x32xf32>
    %583 = math.tanh %581 : vector<1x32xf32>
    %584 = arith.mulf %582, %583 : vector<1x32xf32>
    %585 = arith.addf %566, %584 : vector<1x32xf32>
    %586 = vector.extract_strided_slice %524 {offsets = [3, 0], sizes = [1, 128], strides = [1, 1]} : vector<8x128xf32> to vector<1x128xf32>
    %cst_132 = arith.constant dense<0.000000e+00> : vector<1x128xf32>
    %587 = tpu.matmul %584, %525, %cst_132 {dimension_numbers = #tpu.dot_dimension_numbers<[1], [0], [0], [1], [0, 0, 1, 1], [], []>} : vector<1x32xf32>, vector<32x128xf32>, vector<1x128xf32> -> vector<1x128xf32>
    %588 = arith.addf %586, %587 : vector<1x128xf32>
    %589 = arith.negf %588 : vector<1x128xf32>
    %590 = math.exp %589 : vector<1x128xf32>
    %cst_133 = arith.constant 1.000000e+00 : f32
    %591 = vector.broadcast %cst_133 : f32 to vector<1x128xf32>
    %592 = arith.addf %591, %590 : vector<1x128xf32>
    %593 = arith.divf %591, %592 : vector<1x128xf32>
    %594 = vector.extract_strided_slice %588 {offsets = [0, 64], sizes = [1, 32], strides = [1, 1]} : vector<1x128xf32> to vector<1x32xf32>
    %595 = math.tanh %594 : vector<1x32xf32>
    %596 = vector.extract_strided_slice %593 {offsets = [0, 32], sizes = [1, 32], strides = [1, 1]} : vector<1x128xf32> to vector<1x32xf32>
    %597 = arith.mulf %596, %581 : vector<1x32xf32>
    %598 = vector.extract_strided_slice %593 {offsets = [0, 0], sizes = [1, 32], strides = [1, 1]} : vector<1x128xf32> to vector<1x32xf32>
    %599 = arith.mulf %598, %595 : vector<1x32xf32>
    %600 = arith.addf %597, %599 : vector<1x32xf32>
    %601 = vector.extract_strided_slice %593 {offsets = [0, 96], sizes = [1, 32], strides = [1, 1]} : vector<1x128xf32> to vector<1x32xf32>
    %602 = math.tanh %600 : vector<1x32xf32>
    %603 = arith.mulf %601, %602 : vector<1x32xf32>
    %604 = arith.addf %585, %603 : vector<1x32xf32>
    %605 = vector.extract_strided_slice %524 {offsets = [4, 0], sizes = [1, 128], strides = [1, 1]} : vector<8x128xf32> to vector<1x128xf32>
    %cst_134 = arith.constant dense<0.000000e+00> : vector<1x128xf32>
    %606 = tpu.matmul %603, %525, %cst_134 {dimension_numbers = #tpu.dot_dimension_numbers<[1], [0], [0], [1], [0, 0, 1, 1], [], []>} : vector<1x32xf32>, vector<32x128xf32>, vector<1x128xf32> -> vector<1x128xf32>
    %607 = arith.addf %605, %606 : vector<1x128xf32>
    %608 = arith.negf %607 : vector<1x128xf32>
    %609 = math.exp %608 : vector<1x128xf32>
    %cst_135 = arith.constant 1.000000e+00 : f32
    %610 = vector.broadcast %cst_135 : f32 to vector<1x128xf32>
    %611 = arith.addf %610, %609 : vector<1x128xf32>
    %612 = arith.divf %610, %611 : vector<1x128xf32>
    %613 = vector.extract_strided_slice %607 {offsets = [0, 64], sizes = [1, 32], strides = [1, 1]} : vector<1x128xf32> to vector<1x32xf32>
    %614 = math.tanh %613 : vector<1x32xf32>
    %615 = vector.extract_strided_slice %612 {offsets = [0, 32], sizes = [1, 32], strides = [1, 1]} : vector<1x128xf32> to vector<1x32xf32>
    %616 = arith.mulf %615, %600 : vector<1x32xf32>
    %617 = vector.extract_strided_slice %612 {offsets = [0, 0], sizes = [1, 32], strides = [1, 1]} : vector<1x128xf32> to vector<1x32xf32>
    %618 = arith.mulf %617, %614 : vector<1x32xf32>
    %619 = arith.addf %616, %618 : vector<1x32xf32>
    %620 = vector.extract_strided_slice %612 {offsets = [0, 96], sizes = [1, 32], strides = [1, 1]} : vector<1x128xf32> to vector<1x32xf32>
    %621 = math.tanh %619 : vector<1x32xf32>
    %622 = arith.mulf %620, %621 : vector<1x32xf32>
    %623 = arith.addf %604, %622 : vector<1x32xf32>
    %624 = vector.extract_strided_slice %524 {offsets = [5, 0], sizes = [1, 128], strides = [1, 1]} : vector<8x128xf32> to vector<1x128xf32>
    %cst_136 = arith.constant dense<0.000000e+00> : vector<1x128xf32>
    %625 = tpu.matmul %622, %525, %cst_136 {dimension_numbers = #tpu.dot_dimension_numbers<[1], [0], [0], [1], [0, 0, 1, 1], [], []>} : vector<1x32xf32>, vector<32x128xf32>, vector<1x128xf32> -> vector<1x128xf32>
    %626 = arith.addf %624, %625 : vector<1x128xf32>
    %627 = arith.negf %626 : vector<1x128xf32>
    %628 = math.exp %627 : vector<1x128xf32>
    %cst_137 = arith.constant 1.000000e+00 : f32
    %629 = vector.broadcast %cst_137 : f32 to vector<1x128xf32>
    %630 = arith.addf %629, %628 : vector<1x128xf32>
    %631 = arith.divf %629, %630 : vector<1x128xf32>
    %632 = vector.extract_strided_slice %626 {offsets = [0, 64], sizes = [1, 32], strides = [1, 1]} : vector<1x128xf32> to vector<1x32xf32>
    %633 = math.tanh %632 : vector<1x32xf32>
    %634 = vector.extract_strided_slice %631 {offsets = [0, 32], sizes = [1, 32], strides = [1, 1]} : vector<1x128xf32> to vector<1x32xf32>
    %635 = arith.mulf %634, %619 : vector<1x32xf32>
    %636 = vector.extract_strided_slice %631 {offsets = [0, 0], sizes = [1, 32], strides = [1, 1]} : vector<1x128xf32> to vector<1x32xf32>
    %637 = arith.mulf %636, %633 : vector<1x32xf32>
    %638 = arith.addf %635, %637 : vector<1x32xf32>
    %639 = vector.extract_strided_slice %631 {offsets = [0, 96], sizes = [1, 32], strides = [1, 1]} : vector<1x128xf32> to vector<1x32xf32>
    %640 = math.tanh %638 : vector<1x32xf32>
    %641 = arith.mulf %639, %640 : vector<1x32xf32>
    %642 = arith.addf %623, %641 : vector<1x32xf32>
    %643 = vector.extract_strided_slice %524 {offsets = [6, 0], sizes = [1, 128], strides = [1, 1]} : vector<8x128xf32> to vector<1x128xf32>
    %cst_138 = arith.constant dense<0.000000e+00> : vector<1x128xf32>
    %644 = tpu.matmul %641, %525, %cst_138 {dimension_numbers = #tpu.dot_dimension_numbers<[1], [0], [0], [1], [0, 0, 1, 1], [], []>} : vector<1x32xf32>, vector<32x128xf32>, vector<1x128xf32> -> vector<1x128xf32>
    %645 = arith.addf %643, %644 : vector<1x128xf32>
    %646 = arith.negf %645 : vector<1x128xf32>
    %647 = math.exp %646 : vector<1x128xf32>
    %cst_139 = arith.constant 1.000000e+00 : f32
    %648 = vector.broadcast %cst_139 : f32 to vector<1x128xf32>
    %649 = arith.addf %648, %647 : vector<1x128xf32>
    %650 = arith.divf %648, %649 : vector<1x128xf32>
    %651 = vector.extract_strided_slice %645 {offsets = [0, 64], sizes = [1, 32], strides = [1, 1]} : vector<1x128xf32> to vector<1x32xf32>
    %652 = math.tanh %651 : vector<1x32xf32>
    %653 = vector.extract_strided_slice %650 {offsets = [0, 32], sizes = [1, 32], strides = [1, 1]} : vector<1x128xf32> to vector<1x32xf32>
    %654 = arith.mulf %653, %638 : vector<1x32xf32>
    %655 = vector.extract_strided_slice %650 {offsets = [0, 0], sizes = [1, 32], strides = [1, 1]} : vector<1x128xf32> to vector<1x32xf32>
    %656 = arith.mulf %655, %652 : vector<1x32xf32>
    %657 = arith.addf %654, %656 : vector<1x32xf32>
    %658 = vector.extract_strided_slice %650 {offsets = [0, 96], sizes = [1, 32], strides = [1, 1]} : vector<1x128xf32> to vector<1x32xf32>
    %659 = math.tanh %657 : vector<1x32xf32>
    %660 = arith.mulf %658, %659 : vector<1x32xf32>
    %661 = arith.addf %642, %660 : vector<1x32xf32>
    %662 = vector.extract_strided_slice %524 {offsets = [7, 0], sizes = [1, 128], strides = [1, 1]} : vector<8x128xf32> to vector<1x128xf32>
    %cst_140 = arith.constant dense<0.000000e+00> : vector<1x128xf32>
    %663 = tpu.matmul %660, %525, %cst_140 {dimension_numbers = #tpu.dot_dimension_numbers<[1], [0], [0], [1], [0, 0, 1, 1], [], []>} : vector<1x32xf32>, vector<32x128xf32>, vector<1x128xf32> -> vector<1x128xf32>
    %664 = arith.addf %662, %663 : vector<1x128xf32>
    %665 = arith.negf %664 : vector<1x128xf32>
    %666 = math.exp %665 : vector<1x128xf32>
    %cst_141 = arith.constant 1.000000e+00 : f32
    %667 = vector.broadcast %cst_141 : f32 to vector<1x128xf32>
    %668 = arith.addf %667, %666 : vector<1x128xf32>
    %669 = arith.divf %667, %668 : vector<1x128xf32>
    %670 = vector.extract_strided_slice %664 {offsets = [0, 64], sizes = [1, 32], strides = [1, 1]} : vector<1x128xf32> to vector<1x32xf32>
    %671 = math.tanh %670 : vector<1x32xf32>
    %672 = vector.extract_strided_slice %669 {offsets = [0, 32], sizes = [1, 32], strides = [1, 1]} : vector<1x128xf32> to vector<1x32xf32>
    %673 = arith.mulf %672, %657 : vector<1x32xf32>
    %674 = vector.extract_strided_slice %669 {offsets = [0, 0], sizes = [1, 32], strides = [1, 1]} : vector<1x128xf32> to vector<1x32xf32>
    %675 = arith.mulf %674, %671 : vector<1x32xf32>
    %676 = arith.addf %673, %675 : vector<1x32xf32>
    %677 = vector.extract_strided_slice %669 {offsets = [0, 96], sizes = [1, 32], strides = [1, 1]} : vector<1x128xf32> to vector<1x32xf32>
    %678 = math.tanh %676 : vector<1x32xf32>
    %679 = arith.mulf %677, %678 : vector<1x32xf32>
    %680 = arith.addf %661, %679 : vector<1x32xf32>
    %cst_142 = arith.constant 1.250000e-01 : f32
    %681 = vector.broadcast %cst_142 : f32 to vector<1x32xf32>
    %682 = arith.mulf %680, %681 : vector<1x32xf32>
    %c0_143 = arith.constant 0 : index
    %c0_144 = arith.constant 0 : index
    %683 = vector.load %arg22[%c0_143, %c0_144] : memref<32x5xf32, #tpu.memory_space<vmem>>, vector<32x5xf32>
    %cst_145 = arith.constant dense<0.000000e+00> : vector<1x5xf32>
    %684 = tpu.matmul %682, %683, %cst_145 {dimension_numbers = #tpu.dot_dimension_numbers<[1], [0], [0], [1], [0, 0, 1, 1], [], []>} : vector<1x32xf32>, vector<32x5xf32>, vector<1x5xf32> -> vector<1x5xf32>
    %c0_146 = arith.constant 0 : index
    %c0_147 = arith.constant 0 : index
    %685 = vector.load %arg23[%c0_146, %c0_147] : memref<1x5xf32, #tpu.memory_space<vmem>>, vector<1x5xf32>
    %686 = arith.addf %684, %685 : vector<1x5xf32>
    %c0_148 = arith.constant 0 : index
    %c0_149 = arith.constant 0 : index
    %687 = vector.load %arg24[%c0_148, %c0_149] : memref<1x5xf32, #tpu.memory_space<vmem>>, vector<1x5xf32>
    tpu.vector_store %arg24[%c0_148, %c0_149], %686 {strides = array<i32>} : memref<1x5xf32, #tpu.memory_space<vmem>>, vector<1x5xf32>,
    return
  }
}

</mosaic_0001>

<llo_original>
// kernel: elmo_classifier_forward.1
$region0: #{elmo_classifier_forward.1}
  #allocation0 [shape = 'u32[]', space=smem, size = 0x4, offset = 0x4, fixed_abs, tag = 'smem constant byte address 0x4 - core index']
  #allocation1 [shape = 'u32[144,128]{1,0:T(1,128)}', space=vmem, size = 0x12000, scoped, tag = 'internal scratch']
  %s0 = inlined_call_operand.vmem [shape: f32[3], index: 0, kind: input, shape index: {}]
  %s1 = inlined_call_operand.vmem [shape: s32[8], index: 1, kind: input, shape index: {}]
  %s2 = inlined_call_operand.vmem [shape: s32[8], index: 2, kind: input, shape index: {}]
  %s3 = inlined_call_operand.vmem [shape: f32[8,32], index: 3, kind: input, shape index: {}]
  %s4 = inlined_call_operand.vmem [shape: f32[64,32], index: 4, kind: input, shape index: {}]
  %s5 = inlined_call_operand.vmem [shape: f32[32,128], index: 5, kind: input, shape index: {}]
  %s6 = inlined_call_operand.vmem [shape: f32[32,128], index: 6, kind: input, shape index: {}]
  %s7 = inlined_call_operand.vmem [shape: f32[1,128], index: 7, kind: input, shape index: {}]
  %s8 = inlined_call_operand.vmem [shape: f32[32,128], index: 8, kind: input, shape index: {}]
  %s9 = inlined_call_operand.vmem [shape: f32[32,128], index: 9, kind: input, shape index: {}]
  %s10 = inlined_call_operand.vmem [shape: f32[1,128], index: 10, kind: input, shape index: {}]
  %s11 = inlined_call_operand.vmem [shape: f32[32,128], index: 11, kind: input, shape index: {}]
  %s12 = inlined_call_operand.vmem [shape: f32[32,128], index: 12, kind: input, shape index: {}]
  %s13 = inlined_call_operand.vmem [shape: f32[1,128], index: 13, kind: input, shape index: {}]
  %s14 = inlined_call_operand.vmem [shape: f32[32,128], index: 14, kind: input, shape index: {}]
  %s15 = inlined_call_operand.vmem [shape: f32[32,128], index: 15, kind: input, shape index: {}]
  %s16 = inlined_call_operand.vmem [shape: f32[1,128], index: 16, kind: input, shape index: {}]
  %s17 = inlined_call_operand.vmem [shape: f32[32,128], index: 17, kind: input, shape index: {}]
  %s18 = inlined_call_operand.vmem [shape: f32[1,128], index: 18, kind: input, shape index: {}]
  %s19 = inlined_call_operand.vmem [shape: f32[32,128], index: 19, kind: input, shape index: {}]
  %s20 = inlined_call_operand.vmem [shape: f32[32,128], index: 20, kind: input, shape index: {}]
  %s21 = inlined_call_operand.vmem [shape: f32[1,128], index: 21, kind: input, shape index: {}]
  %s22 = inlined_call_operand.vmem [shape: f32[32,5], index: 22, kind: input, shape index: {}]
  %s23 = inlined_call_operand.vmem [shape: f32[1,5], index: 23, kind: input, shape index: {}]
  %s24 = inlined_call_operand.hbm [shape: f32[1,5], index: 24, kind: output, shape index: {}]
  %s25 = sld [smem:[#allocation0]]
  $region118: #{elmo_classifier_forward.1} parent=0
    _
  %s27 = ssub.s32 1, %s25
  %s28 = scalar_select 0, %s27, %s25
  $region1: #{elmo_classifier_forward.1} parent=0
    #allocation2 [shape = 'u8[512]{0}', space=smem, size = 0x200, scoped, tag = 'input window, operand 0, single buffered']
    #allocation3 [shape = 's32[1]{0}', space=sflag, size = 0x4, scoped, tag = 'scoped memory for elmo_classifier_forward.1']
    #allocation4 [shape = 's32[1]{0}', space=sflag, size = 0x4, scoped, tag = 'scoped memory for elmo_classifier_forward.1']
    #allocation5 [shape = 'u8[512]{0}', space=smem, size = 0x200, scoped, tag = 'input window, operand 1, single buffered']
    #allocation6 [shape = 's32[1]{0}', space=sflag, size = 0x4, scoped, tag = 'scoped memory for elmo_classifier_forward.1']
    #allocation7 [shape = 'u8[512]{0}', space=smem, size = 0x200, scoped, tag = 'input window, operand 2, single buffered']
    #allocation8 [shape = 'u8[512]{0}', space=vmem, size = 0x400, scoped, tag = 'output window, operand 0, single buffered']
    %29 = vsyncpa [#allocation4], 0
    %30 = vsyncpa [#allocation6], 0
    %31 = vsyncpa [#allocation3], 0
    // Predicated region
    $region2: #{elmo_classifier_forward.1} parent=1 // pred_check
      _
    $region3: #{elmo_classifier_forward.1} parent=1 // pred_check_branch
      %33 = sbr.rel (0) target = $region5
    $region4: #{elmo_classifier_forward.1} parent=1 // pred_region
      %s35 = ssub.s32 16, 16
      %36 = vsyncadd [#allocation4], %s35
      %s38 = sshll.u32 %s0, 4
      %s39 = int_to_ptr.vmem [resolvable:$true] %s38
      %41 = dma.vmem_to_smem %s39, 16, [#allocation2], [#allocation4]
    $region5: #{elmo_classifier_forward.1} parent=1 // pred_fallthru
      _
    // Predicated region
    $region6: #{elmo_classifier_forward.1} parent=1 // pred_check
      _
    $region7: #{elmo_classifier_forward.1} parent=1 // pred_check_branch
      %43 = sbr.rel (0) target = $region9
    $region8: #{elmo_classifier_forward.1} parent=1 // pred_region
      %s45 = ssub.s32 16, 16
      %46 = vsyncadd [#allocation6], %s45
      %s48 = sshll.u32 %s1, 4
      %s49 = int_to_ptr.vmem [resolvable:$true] %s48
      %51 = dma.vmem_to_smem %s49, 16, [#allocation5], [#allocation6]
    $region9: #{elmo_classifier_forward.1} parent=1 // pred_fallthru
      _
    // Predicated region
    $region10: #{elmo_classifier_forward.1} parent=1 // pred_check
      _
    $region11: #{elmo_classifier_forward.1} parent=1 // pred_check_branch
      %53 = sbr.rel (0) target = $region13
    $region12: #{elmo_classifier_forward.1} parent=1 // pred_region
      %s55 = ssub.s32 16, 16
      %56 = vsyncadd [#allocation6], %s55
      %s58 = sshll.u32 %s2, 4
      %s59 = int_to_ptr.vmem [resolvable:$true] %s58
      %61 = dma.vmem_to_smem %s59, 16, [#allocation7], [#allocation6]
    $region13: #{elmo_classifier_forward.1} parent=1 // pred_fallthru
      _
    // Predicated region
    $region14: #{elmo_classifier_forward.1} parent=1 // pred_check
      _
    $region15: #{elmo_classifier_forward.1} parent=1 // pred_check_branch
      %63 = sbr.rel (0) target = $region17
    $region16: #{elmo_classifier_forward.1} parent=1 // pred_region
      _
    $region17: #{elmo_classifier_forward.1} parent=1 // pred_fallthru
      _
    // Predicated region
    $region18: #{elmo_classifier_forward.1} parent=1 // pred_check
      _
    $region19: #{elmo_classifier_forward.1} parent=1 // pred_check_branch
      %65 = sbr.rel (0) target = $region21
    $region20: #{elmo_classifier_forward.1} parent=1 // pred_region
      _
    $region21: #{elmo_classifier_forward.1} parent=1 // pred_fallthru
      _
    // Predicated region
    $region22: #{elmo_classifier_forward.1} parent=1 // pred_check
      _
    $region23: #{elmo_classifier_forward.1} parent=1 // pred_check_branch
      %67 = sbr.rel (0) target = $region25
    $region24: #{elmo_classifier_forward.1} parent=1 // pred_region
      _
    $region25: #{elmo_classifier_forward.1} parent=1 // pred_fallthru
      _
    // Predicated region
    $region26: #{elmo_classifier_forward.1} parent=1 // pred_check
      _
    $region27: #{elmo_classifier_forward.1} parent=1 // pred_check_branch
      %69 = sbr.rel (0) target = $region29
    $region28: #{elmo_classifier_forward.1} parent=1 // pred_region
      _
    $region29: #{elmo_classifier_forward.1} parent=1 // pred_fallthru
      _
    // Predicated region
    $region30: #{elmo_classifier_forward.1} parent=1 // pred_check
      _
    $region31: #{elmo_classifier_forward.1} parent=1 // pred_check_branch
      %71 = sbr.rel (0) target = $region33
    $region32: #{elmo_classifier_forward.1} parent=1 // pred_region
      _
    $region33: #{elmo_classifier_forward.1} parent=1 // pred_fallthru
      _
    // Predicated region
    $region34: #{elmo_classifier_forward.1} parent=1 // pred_check
      _
    $region35: #{elmo_classifier_forward.1} parent=1 // pred_check_branch
      %73 = sbr.rel (0) target = $region37
    $region36: #{elmo_classifier_forward.1} parent=1 // pred_region
      _
    $region37: #{elmo_classifier_forward.1} parent=1 // pred_fallthru
      _
    // Predicated region
    $region38: #{elmo_classifier_forward.1} parent=1 // pred_check
      _
    $region39: #{elmo_classifier_forward.1} parent=1 // pred_check_branch
      %75 = sbr.rel (0) target = $region41
    $region40: #{elmo_classifier_forward.1} parent=1 // pred_region
      _
    $region41: #{elmo_classifier_forward.1} parent=1 // pred_fallthru
      _
    // Predicated region
    $region42: #{elmo_classifier_forward.1} parent=1 // pred_check
      _
    $region43: #{elmo_classifier_forward.1} parent=1 // pred_check_branch
      %77 = sbr.rel (0) target = $region45
    $region44: #{elmo_classifier_forward.1} parent=1 // pred_region
      _
    $region45: #{elmo_classifier_forward.1} parent=1 // pred_fallthru
      _
    // Predicated region
    $region46: #{elmo_classifier_forward.1} parent=1 // pred_check
      _
    $region47: #{elmo_classifier_forward.1} parent=1 // pred_check_branch
      %79 = sbr.rel (0) target = $region49
    $region48: #{elmo_classifier_forward.1} parent=1 // pred_region
      _
    $region49: #{elmo_classifier_forward.1} parent=1 // pred_fallthru
      _
    // Predicated region
    $region50: #{elmo_classifier_forward.1} parent=1 // pred_check
      _
    $region51: #{elmo_classifier_forward.1} parent=1 // pred_check_branch
      %81 = sbr.rel (0) target = $region53
    $region52: #{elmo_classifier_forward.1} parent=1 // pred_region
      _
    $region53: #{elmo_classifier_forward.1} parent=1 // pred_fallthru
      _
    // Predicated region
    $region54: #{elmo_classifier_forward.1} parent=1 // pred_check
      _
    $region55: #{elmo_classifier_forward.1} parent=1 // pred_check_branch
      %83 = sbr.rel (0) target = $region57
    $region56: #{elmo_classifier_forward.1} parent=1 // pred_region
      _
    $region57: #{elmo_classifier_forward.1} parent=1 // pred_fallthru
      _
    // Predicated region
    $region58: #{elmo_classifier_forward.1} parent=1 // pred_check
      _
    $region59: #{elmo_classifier_forward.1} parent=1 // pred_check_branch
      %85 = sbr.rel (0) target = $region61
    $region60: #{elmo_classifier_forward.1} parent=1 // pred_region
      _
    $region61: #{elmo_classifier_forward.1} parent=1 // pred_fallthru
      _
    // Predicated region
    $region62: #{elmo_classifier_forward.1} parent=1 // pred_check
      _
    $region63: #{elmo_classifier_forward.1} parent=1 // pred_check_branch
      %87 = sbr.rel (0) target = $region65
    $region64: #{elmo_classifier_forward.1} parent=1 // pred_region
      _
    $region65: #{elmo_classifier_forward.1} parent=1 // pred_fallthru
      _
    // Predicated region
    $region66: #{elmo_classifier_forward.1} parent=1 // pred_check
      _
    $region67: #{elmo_classifier_forward.1} parent=1 // pred_check_branch
      %89 = sbr.rel (0) target = $region69
    $region68: #{elmo_classifier_forward.1} parent=1 // pred_region
      _
    $region69: #{elmo_classifier_forward.1} parent=1 // pred_fallthru
      _
    // Predicated region
    $region70: #{elmo_classifier_forward.1} parent=1 // pred_check
      _
    $region71: #{elmo_classifier_forward.1} parent=1 // pred_check_branch
      %91 = sbr.rel (0) target = $region73
    $region72: #{elmo_classifier_forward.1} parent=1 // pred_region
      _
    $region73: #{elmo_classifier_forward.1} parent=1 // pred_fallthru
      _
    // Predicated region
    $region74: #{elmo_classifier_forward.1} parent=1 // pred_check
      _
    $region75: #{elmo_classifier_forward.1} parent=1 // pred_check_branch
      %93 = sbr.rel (0) target = $region77
    $region76: #{elmo_classifier_forward.1} parent=1 // pred_region
      _
    $region77: #{elmo_classifier_forward.1} parent=1 // pred_fallthru
      _
    // Predicated region
    $region78: #{elmo_classifier_forward.1} parent=1 // pred_check
      _
    $region79: #{elmo_classifier_forward.1} parent=1 // pred_check_branch
      %95 = sbr.rel (0) target = $region81
    $region80: #{elmo_classifier_forward.1} parent=1 // pred_region
      _
    $region81: #{elmo_classifier_forward.1} parent=1 // pred_fallthru
      _
    // Predicated region
    $region82: #{elmo_classifier_forward.1} parent=1 // pred_check
      _
    $region83: #{elmo_classifier_forward.1} parent=1 // pred_check_branch
      %97 = sbr.rel (0) target = $region85
    $region84: #{elmo_classifier_forward.1} parent=1 // pred_region
      _
    $region85: #{elmo_classifier_forward.1} parent=1 // pred_fallthru
      _
    // Predicated region
    $region86: #{elmo_classifier_forward.1} parent=1 // pred_check
      _
    $region87: #{elmo_classifier_forward.1} parent=1 // pred_check_branch
      %99 = sbr.rel (0) target = $region89
    $region88: #{elmo_classifier_forward.1} parent=1 // pred_region
      _
    $region89: #{elmo_classifier_forward.1} parent=1 // pred_fallthru
      _
    // Predicated region
    $region90: #{elmo_classifier_forward.1} parent=1 // pred_check
      _
    $region91: #{elmo_classifier_forward.1} parent=1 // pred_check_branch
      %101 = sbr.rel (0) target = $region93
    $region92: #{elmo_classifier_forward.1} parent=1 // pred_region
      _
    $region93: #{elmo_classifier_forward.1} parent=1 // pred_fallthru
      _
    // Predicated region
    $region94: #{elmo_classifier_forward.1} parent=1 // pred_check
      _
    $region95: #{elmo_classifier_forward.1} parent=1 // pred_check_branch
      %103 = sbr.rel (0) target = $region97
    $region96: #{elmo_classifier_forward.1} parent=1 // pred_region
      _
    $region97: #{elmo_classifier_forward.1} parent=1 // pred_fallthru
      _
    // Predicated region
    $region98: #{elmo_classifier_forward.1} parent=1 // pred_check
      _
    $region99: #{elmo_classifier_forward.1} parent=1 // pred_check_branch
      %105 = sbr.rel (0) target = $region101
    $region100: #{elmo_classifier_forward.1} parent=1 // pred_region
      %106 = dma.done [#allocation4], 16
    $region101: #{elmo_classifier_forward.1} parent=1 // pred_fallthru
      _
    // Predicated region
    $region102: #{elmo_classifier_forward.1} parent=1 // pred_check
      _
    $region103: #{elmo_classifier_forward.1} parent=1 // pred_check_branch
      %108 = sbr.rel (0) target = $region105
    $region104: #{elmo_classifier_forward.1} parent=1 // pred_region
      %109 = dma.done [#allocation6], 16
    $region105: #{elmo_classifier_forward.1} parent=1 // pred_fallthru
      _
    // Predicated region
    $region106: #{elmo_classifier_forward.1} parent=1 // pred_check
      _
    $region107: #{elmo_classifier_forward.1} parent=1 // pred_check_branch
      %111 = sbr.rel (0) target = $region109
    $region108: #{elmo_classifier_forward.1} parent=1 // pred_region
      %112 = dma.done [#allocation6], 16
    $region109: #{elmo_classifier_forward.1} parent=1 // pred_fallthru
      _
    %113 = sfence
    %s114 = sld [smem:[#allocation2]]
    %s115 = sld [smem:[#allocation2 + $0x1]]
    %s116 = sld [smem:[#allocation2 + $0x2]]
    %s117 = sld [smem:[#allocation5]]
    %s118 = scalar_lea.vmem %s4, %s117
    %v119 = vld [vmem:[%s118] sm:$0x1]
    %s120 = sld [smem:[#allocation5 + $0x1]]
    %s121 = scalar_lea.vmem %s4, %s120
    %v122 = vld [vmem:[%s121] sm:$0x1]
    %s123 = sld [smem:[#allocation5 + $0x2]]
    %s124 = scalar_lea.vmem %s4, %s123
    %v125 = vld [vmem:[%s124] sm:$0x1]
    %s126 = sld [smem:[#allocation5 + $0x3]]
    %s127 = scalar_lea.vmem %s4, %s126
    %v128 = vld [vmem:[%s127] sm:$0x1]
    %s129 = sld [smem:[#allocation5 + $0x4]]
    %s130 = scalar_lea.vmem %s4, %s129
    %v131 = vld [vmem:[%s130] sm:$0x1]
    %s132 = sld [smem:[#allocation5 + $0x5]]
    %s133 = scalar_lea.vmem %s4, %s132
    %v134 = vld [vmem:[%s133] sm:$0x1]
    %s135 = sld [smem:[#allocation5 + $0x6]]
    %s136 = scalar_lea.vmem %s4, %s135
    %v137 = vld [vmem:[%s136] sm:$0x1]
    %s138 = sld [smem:[#allocation5 + $0x7]]
    %s139 = scalar_lea.vmem %s4, %s138
    %v140 = vld [vmem:[%s139] sm:$0x1]
    %v142 = vrot.slane %v122, 7
    %v145 = vrot.slane %v125, 6
    %v148 = vrot.slane %v128, 5
    %v151 = vrot.slane %v131, 4
    %v154 = vrot.slane %v134, 3
    %v157 = vrot.slane %v137, 2
    %v160 = vrot.slane %v140, 1
    %vm162 = vcmask 1040384
    %v163 = vsel %vm162, %v119, %v142
    %vm164 = vcmask 1041408
    %v165 = vsel %vm164, %v163, %v145
    %vm166 = vcmask 1042432
    %v167 = vsel %vm166, %v165, %v148
    %vm168 = vcmask 1043456
    %v169 = vsel %vm168, %v167, %v151
    %vm170 = vcmask 1044480
    %v171 = vsel %vm170, %v169, %v154
    %vm172 = vcmask 1045504
    %v173 = vsel %vm172, %v171, %v157
    %vm174 = vcmask 1046528
    %v175 = vsel %vm174, %v173, %v160
    %s176 = sld [smem:[#allocation7]]
    %s177 = scalar_lea.vmem %s4, %s176
    %v178 = vld [vmem:[%s177] sm:$0x1]
    %s179 = sld [smem:[#allocation7 + $0x1]]
    %s180 = scalar_lea.vmem %s4, %s179
    %v181 = vld [vmem:[%s180] sm:$0x1]
    %s182 = sld [smem:[#allocation7 + $0x2]]
    %s183 = scalar_lea.vmem %s4, %s182
    %v184 = vld [vmem:[%s183] sm:$0x1]
    %s185 = sld [smem:[#allocation7 + $0x3]]
    %s186 = scalar_lea.vmem %s4, %s185
    %v187 = vld [vmem:[%s186] sm:$0x1]
    %s188 = sld [smem:[#allocation7 + $0x4]]
    %s189 = scalar_lea.vmem %s4, %s188
    %v190 = vld [vmem:[%s189] sm:$0x1]
    %s191 = sld [smem:[#allocation7 + $0x5]]
    %s192 = scalar_lea.vmem %s4, %s191
    %v193 = vld [vmem:[%s192] sm:$0x1]
    %s194 = sld [smem:[#allocation7 + $0x6]]
    %s195 = scalar_lea.vmem %s4, %s194
    %v196 = vld [vmem:[%s195] sm:$0x1]
    %s197 = sld [smem:[#allocation7 + $0x7]]
    %s198 = scalar_lea.vmem %s4, %s197
    %v199 = vld [vmem:[%s198] sm:$0x1]
    %v201 = vrot.slane %v181, 7
    %v204 = vrot.slane %v184, 6
    %v207 = vrot.slane %v187, 5
    %v210 = vrot.slane %v190, 4
    %v213 = vrot.slane %v193, 3
    %v216 = vrot.slane %v196, 2
    %v219 = vrot.slane %v199, 1
    %v221 = vsel %vm162, %v178, %v201
    %v222 = vsel %vm164, %v221, %v204
    %v223 = vsel %vm166, %v222, %v207
    %v224 = vsel %vm168, %v223, %v210
    %v225 = vsel %vm170, %v224, %v213
    %v226 = vsel %vm172, %v225, %v216
    %v227 = vsel %vm174, %v226, %v219
    %v228 = vld [vmem:[%s5] sm:$0xff]
    %v229 = vld [vmem:[%s5 + $0x8] sm:$0xff]
    %v230 = vld [vmem:[%s5 + $0x10] sm:$0xff]
    %v231 = vld [vmem:[%s5 + $0x18] sm:$0xff]
    %v232 = vld [vmem:[%s7] sm:$0x1]
    %v234 = vlaneseq
    %v235 = vshrl.u32 %v234, 7
    %v236 = vsub.s32 0, %v235
    %v237 = vrot.slane %v232, %v236
    %vm239 = vcmask 261120
    %v241 = vsel %vm239, %v175, 0
    %243 = vmatprep.subr.mxu0 0.0
    %244 = vmatpush1.msra.mxu0 %v228
    %245 = vmatprep.subr.mxu0 0.0
    %246 = vmatpush1.msra.mxu0 %v229
    %247 = vmatprep.subr.mxu0 0.0
    %248 = vmatpush1.msra.mxu0 %v230
    %249 = vmatprep.subr.mxu0 0.0
    %250 = vmatpush1.msra.mxu0 %v231
    %251 = vmatprep.subr.mxu0 0.0
    %252 = vmatpush1.msra.mxu0 0.0
    %253 = vmatprep.subr.mxu0 0.0
    %254 = vmatpush1.msra.mxu0 0.0
    %255 = vmatprep.subr.mxu0 0.0
    %256 = vmatpush1.msra.mxu0 0.0
    %257 = vmatprep.subr.mxu0 0.0
    %258 = vmatpush1.msra.mxu0 0.0
    %259 = vmatprep.subr.mxu0 0.0
    %260 = vmatpush1.msra.mxu0 0.0
    %261 = vmatprep.subr.mxu0 0.0
    %262 = vmatpush1.msra.mxu0 0.0
    %263 = vmatprep.subr.mxu0 0.0
    %264 = vmatpush1.msra.mxu0 0.0
    %265 = vmatprep.subr.mxu0 0.0
    %266 = vmatpush1.msra.mxu0 0.0
    %267 = vmatprep.subr.mxu0 0.0
    %268 = vmatpush1.msra.mxu0 0.0
    %269 = vmatprep.subr.mxu0 0.0
    %270 = vmatpush1.msra.mxu0 0.0
    %271 = vmatprep.subr.mxu0 0.0
    %272 = vmatpush1.msra.mxu0 0.0
    %273 = vmatprep.subr.mxu0 0.0
    %274 = vmatpush1.msra.mxu0 0.0
    %275 = vmatprep.subr.mxu0 0.0
    %276 = vmatpush1.msra.mxu0 0.0
    %277 = vmatprep.subr.mxu0 0.0
    %278 = vmatpush1.msra.mxu0 0.0
    %279 = vmatprep.subr.mxu0 0.0
    %280 = vmatpush1.msra.mxu0 0.0
    %281 = vmatprep.subr.mxu0 0.0
    %282 = vmatpush1.msra.mxu0 0.0
    %283 = vmatprep.subr.mxu0 0.0
    %284 = vmatpush1.msra.mxu0 0.0
    %285 = vmatprep.subr.mxu0 0.0
    %286 = vmatpush1.msra.mxu0 0.0
    %287 = vmatprep.subr.mxu0 0.0
    %288 = vmatpush1.msra.mxu0 0.0
    %289 = vmatprep.subr.mxu0 0.0
    %290 = vmatpush1.msra.mxu0 0.0
    %291 = vmatprep.subr.mxu0 0.0
    %292 = vmatpush1.msra.mxu0 0.0
    %293 = vmatprep.subr.mxu0 0.0
    %294 = vmatpush1.msra.mxu0 0.0
    %295 = vmatprep.subr.mxu0 0.0
    %296 = vmatpush1.msra.mxu0 0.0
    %297 = vmatprep.subr.mxu0 0.0
    %298 = vmatpush1.msra.mxu0 0.0
    %299 = vmatprep.subr.mxu0 0.0
    %300 = vmatpush1.msra.mxu0 0.0
    %301 = vmatprep.subr.mxu0 0.0
    %302 = vmatpush1.msra.mxu0 0.0
    %303 = vmatprep.subr.mxu0 0.0
    %304 = vmatpush1.msra.mxu0 0.0
    %305 = vmatprep.subr.mxu0 0.0
    %306 = vmatpush1.msra.mxu0 0.0
    %307 = vmatprep.mubr.f32.mxu0 0.0
    %308 = vmatmul.mubr.f32.gmra.mrb[0].mxu0 %v241
    %v309 = vpop.f32.mrb[0].mxu0
    %v310 = vadd.f32 %v237, %v309
    %v311 = vpop.f32.mrb[0].mxu0
    %312 = vdwg.mxu0
    %v313 = vld [vmem:[%s8] sm:$0xff]
    %v314 = vld [vmem:[%s8 + $0x8] sm:$0xff]
    %v315 = vld [vmem:[%s8 + $0x10] sm:$0xff]
    %v316 = vld [vmem:[%s8 + $0x18] sm:$0xff]
    %v317 = vld [vmem:[%s10] sm:$0x1]
    %v319 = vlaneseq
    %v320 = vshrl.u32 %v319, 7
    %v321 = vsub.s32 0, %v320
    %v322 = vrot.slane %v317, %v321
    %v325 = vsel %vm239, %v227, 0
    %327 = vmatprep.subr.mxu0 0.0
    %328 = vmatpush1.msra.mxu0 %v313
    %329 = vmatprep.subr.mxu0 0.0
    %330 = vmatpush1.msra.mxu0 %v314
    %331 = vmatprep.subr.mxu0 0.0
    %332 = vmatpush1.msra.mxu0 %v315
    %333 = vmatprep.subr.mxu0 0.0
    %334 = vmatpush1.msra.mxu0 %v316
    %335 = vmatprep.subr.mxu0 0.0
    %336 = vmatpush1.msra.mxu0 0.0
    %337 = vmatprep.subr.mxu0 0.0
    %338 = vmatpush1.msra.mxu0 0.0
    %339 = vmatprep.subr.mxu0 0.0
    %340 = vmatpush1.msra.mxu0 0.0
    %341 = vmatprep.subr.mxu0 0.0
    %342 = vmatpush1.msra.mxu0 0.0
    %343 = vmatprep.subr.mxu0 0.0
    %344 = vmatpush1.msra.mxu0 0.0
    %345 = vmatprep.subr.mxu0 0.0
    %346 = vmatpush1.msra.mxu0 0.0
    %347 = vmatprep.subr.mxu0 0.0
    %348 = vmatpush1.msra.mxu0 0.0
    %349 = vmatprep.subr.mxu0 0.0
    %350 = vmatpush1.msra.mxu0 0.0
    %351 = vmatprep.subr.mxu0 0.0
    %352 = vmatpush1.msra.mxu0 0.0
    %353 = vmatprep.subr.mxu0 0.0
    %354 = vmatpush1.msra.mxu0 0.0
    %355 = vmatprep.subr.mxu0 0.0
    %356 = vmatpush1.msra.mxu0 0.0
    %357 = vmatprep.subr.mxu0 0.0
    %358 = vmatpush1.msra.mxu0 0.0
    %359 = vmatprep.subr.mxu0 0.0
    %360 = vmatpush1.msra.mxu0 0.0
    %361 = vmatprep.subr.mxu0 0.0
    %362 = vmatpush1.msra.mxu0 0.0
    %363 = vmatprep.subr.mxu0 0.0
    %364 = vmatpush1.msra.mxu0 0.0
    %365 = vmatprep.subr.mxu0 0.0
    %366 = vmatpush1.msra.mxu0 0.0
    %367 = vmatprep.subr.mxu0 0.0
    %368 = vmatpush1.msra.mxu0 0.0
    %369 = vmatprep.subr.mxu0 0.0
    %370 = vmatpush1.msra.mxu0 0.0
    %371 = vmatprep.subr.mxu0 0.0
    %372 = vmatpush1.msra.mxu0 0.0
    %373 = vmatprep.subr.mxu0 0.0
    %374 = vmatpush1.msra.mxu0 0.0
    %375 = vmatprep.subr.mxu0 0.0
    %376 = vmatpush1.msra.mxu0 0.0
    %377 = vmatprep.subr.mxu0 0.0
    %378 = vmatpush1.msra.mxu0 0.0
    %379 = vmatprep.subr.mxu0 0.0
    %380 = vmatpush1.msra.mxu0 0.0
    %381 = vmatprep.subr.mxu0 0.0
    %382 = vmatpush1.msra.mxu0 0.0
    %383 = vmatprep.subr.mxu0 0.0
    %384 = vmatpush1.msra.mxu0 0.0
    %385 = vmatprep.subr.mxu0 0.0
    %386 = vmatpush1.msra.mxu0 0.0
    %387 = vmatprep.subr.mxu0 0.0
    %388 = vmatpush1.msra.mxu0 0.0
    %389 = vmatprep.subr.mxu0 0.0
    %390 = vmatpush1.msra.mxu0 0.0
    %391 = vmatprep.mubr.f32.mxu0 0.0
    %392 = vmatmul.mubr.f32.gmra.mrb[0].mxu0 %v325
    %v393 = vpop.f32.mrb[0].mxu0
    %v394 = vadd.f32 %v322, %v393
    %v395 = vpop.f32.mrb[0].mxu0
    %396 = vdwg.mxu0
    %v397 = vld [vmem:[%s6] sm:$0xff]
    %v398 = vld [vmem:[%s6 + $0x8] sm:$0xff]
    %v399 = vld [vmem:[%s6 + $0x10] sm:$0xff]
    %v400 = vld [vmem:[%s6 + $0x18] sm:$0xff]
    %v401 = vld [vmem:[%s9] sm:$0xff]
    %v402 = vld [vmem:[%s9 + $0x8] sm:$0xff]
    %v403 = vld [vmem:[%s9 + $0x10] sm:$0xff]
    %v404 = vld [vmem:[%s9 + $0x18] sm:$0xff]
    %v406 = vsel %vm239, 0.0, 0
    %408 = vmatprep.subr.mxu0 0.0
    %409 = vmatpush1.msra.mxu0 %v397
    %410 = vmatprep.subr.mxu0 0.0
    %411 = vmatpush1.msra.mxu0 %v398
    %412 = vmatprep.subr.mxu0 0.0
    %413 = vmatpush1.msra.mxu0 %v399
    %414 = vmatprep.subr.mxu0 0.0
    %415 = vmatpush1.msra.mxu0 %v400
    %416 = vmatprep.subr.mxu0 0.0
    %417 = vmatpush1.msra.mxu0 0.0
    %418 = vmatprep.subr.mxu0 0.0
    %419 = vmatpush1.msra.mxu0 0.0
    %420 = vmatprep.subr.mxu0 0.0
    %421 = vmatpush1.msra.mxu0 0.0
    %422 = vmatprep.subr.mxu0 0.0
    %423 = vmatpush1.msra.mxu0 0.0
    %424 = vmatprep.subr.mxu0 0.0
    %425 = vmatpush1.msra.mxu0 0.0
    %426 = vmatprep.subr.mxu0 0.0
    %427 = vmatpush1.msra.mxu0 0.0
    %428 = vmatprep.subr.mxu0 0.0
    %429 = vmatpush1.msra.mxu0 0.0
    %430 = vmatprep.subr.mxu0 0.0
    %431 = vmatpush1.msra.mxu0 0.0
    %432 = vmatprep.subr.mxu0 0.0
    %433 = vmatpush1.msra.mxu0 0.0
    %434 = vmatprep.subr.mxu0 0.0
    %435 = vmatpush1.msra.mxu0 0.0
    %436 = vmatprep.subr.mxu0 0.0
    %437 = vmatpush1.msra.mxu0 0.0
    %438 = vmatprep.subr.mxu0 0.0
    %439 = vmatpush1.msra.mxu0 0.0
    %440 = vmatprep.subr.mxu0 0.0
    %441 = vmatpush1.msra.mxu0 0.0
    %442 = vmatprep.subr.mxu0 0.0
    %443 = vmatpush1.msra.mxu0 0.0
    %444 = vmatprep.subr.mxu0 0.0
    %445 = vmatpush1.msra.mxu0 0.0
    %446 = vmatprep.subr.mxu0 0.0
    %447 = vmatpush1.msra.mxu0 0.0
    %448 = vmatprep.subr.mxu0 0.0
    %449 = vmatpush1.msra.mxu0 0.0
    %450 = vmatprep.subr.mxu0 0.0
    %451 = vmatpush1.msra.mxu0 0.0
    %452 = vmatprep.subr.mxu0 0.0
    %453 = vmatpush1.msra.mxu0 0.0
    %454 = vmatprep.subr.mxu0 0.0
    %455 = vmatpush1.msra.mxu0 0.0
    %456 = vmatprep.subr.mxu0 0.0
    %457 = vmatpush1.msra.mxu0 0.0
    %458 = vmatprep.subr.mxu0 0.0
    %459 = vmatpush1.msra.mxu0 0.0
    %460 = vmatprep.subr.mxu0 0.0
    %461 = vmatpush1.msra.mxu0 0.0
    %462 = vmatprep.subr.mxu0 0.0
    %463 = vmatpush1.msra.mxu0 0.0
    %464 = vmatprep.subr.mxu0 0.0
    %465 = vmatpush1.msra.mxu0 0.0
    %466 = vmatprep.subr.mxu0 0.0
    %467 = vmatpush1.msra.mxu0 0.0
    %468 = vmatprep.subr.mxu0 0.0
    %469 = vmatpush1.msra.mxu0 0.0
    %470 = vmatprep.subr.mxu0 0.0
    %471 = vmatpush1.msra.mxu0 0.0
    %472 = vmatprep.mubr.f32.mxu0 0.0
    %473 = vmatmul.mubr.f32.gmra.mrb[0].mxu0 %v406
    %v474 = vpop.f32.mrb[0].mxu0
    %v475 = vadd.f32 0.0, %v474
    %v476 = vpop.f32.mrb[0].mxu0
    %477 = vdwg.mxu0
    %v478 = vadd.f32 %v310, %v475
    %479 = vmatprep.subr.mxu0 0.0
    %480 = vmatpush1.msra.mxu0 %v401
    %481 = vmatprep.subr.mxu0 0.0
    %482 = vmatpush1.msra.mxu0 %v402
    %483 = vmatprep.subr.mxu0 0.0
    %484 = vmatpush1.msra.mxu0 %v403
    %485 = vmatprep.subr.mxu0 0.0
    %486 = vmatpush1.msra.mxu0 %v404
    %487 = vmatprep.subr.mxu0 0.0
    %488 = vmatpush1.msra.mxu0 0.0
    %489 = vmatprep.subr.mxu0 0.0
    %490 = vmatpush1.msra.mxu0 0.0
    %491 = vmatprep.subr.mxu0 0.0
    %492 = vmatpush1.msra.mxu0 0.0
    %493 = vmatprep.subr.mxu0 0.0
    %494 = vmatpush1.msra.mxu0 0.0
    %495 = vmatprep.subr.mxu0 0.0
    %496 = vmatpush1.msra.mxu0 0.0
    %497 = vmatprep.subr.mxu0 0.0
    %498 = vmatpush1.msra.mxu0 0.0
    %499 = vmatprep.subr.mxu0 0.0
    %500 = vmatpush1.msra.mxu0 0.0
    %501 = vmatprep.subr.mxu0 0.0
    %502 = vmatpush1.msra.mxu0 0.0
    %503 = vmatprep.subr.mxu0 0.0
    %504 = vmatpush1.msra.mxu0 0.0
    %505 = vmatprep.subr.mxu0 0.0
    %506 = vmatpush1.msra.mxu0 0.0
    %507 = vmatprep.subr.mxu0 0.0
    %508 = vmatpush1.msra.mxu0 0.0
    %509 = vmatprep.subr.mxu0 0.0
    %510 = vmatpush1.msra.mxu0 0.0
    %511 = vmatprep.subr.mxu0 0.0
    %512 = vmatpush1.msra.mxu0 0.0
    %513 = vmatprep.subr.mxu0 0.0
    %514 = vmatpush1.msra.mxu0 0.0
    %515 = vmatprep.subr.mxu0 0.0
    %516 = vmatpush1.msra.mxu0 0.0
    %517 = vmatprep.subr.mxu0 0.0
    %518 = vmatpush1.msra.mxu0 0.0
    %519 = vmatprep.subr.mxu0 0.0
    %520 = vmatpush1.msra.mxu0 0.0
    %521 = vmatprep.subr.mxu0 0.0
    %522 = vmatpush1.msra.mxu0 0.0
    %523 = vmatprep.subr.mxu0 0.0
    %524 = vmatpush1.msra.mxu0 0.0
    %525 = vmatprep.subr.mxu0 0.0
    %526 = vmatpush1.msra.mxu0 0.0
    %527 = vmatprep.subr.mxu0 0.0
    %528 = vmatpush1.msra.mxu0 0.0
    %529 = vmatprep.subr.mxu0 0.0
    %530 = vmatpush1.msra.mxu0 0.0
    %531 = vmatprep.subr.mxu0 0.0
    %532 = vmatpush1.msra.mxu0 0.0
    %533 = vmatprep.subr.mxu0 0.0
    %534 = vmatpush1.msra.mxu0 0.0
    %535 = vmatprep.subr.mxu0 0.0
    %536 = vmatpush1.msra.mxu0 0.0
    %537 = vmatprep.subr.mxu0 0.0
    %538 = vmatpush1.msra.mxu0 0.0
    %539 = vmatprep.subr.mxu0 0.0
    %540 = vmatpush1.msra.mxu0 0.0
    %541 = vmatprep.subr.mxu0 0.0
    %542 = vmatpush1.msra.mxu0 0.0
    %543 = vmatprep.mubr.f32.mxu0 0.0
    %544 = vmatmul.mubr.f32.gmra.mrb[0].mxu0 %v406
    %v545 = vpop.f32.mrb[0].mxu0
    %v546 = vadd.f32 0.0, %v545
    %v547 = vpop.f32.mrb[0].mxu0
    %548 = vdwg.mxu0
    %v549 = vadd.f32 %v394, %v546
    %v551 = vrot.slane %v549, 7
    %v553 = vsel %vm162, %v478, %v551
    %v554 = vxor.u32 %v553, 2147483648
    %v555 = vmul.f32 %v554, 1.442695
    %v556 = vpow.pop %v555
    %v557 = vadd.f32 %v556, 1.0
    %v558 = vrcp.pop %v557
    %v559 = vmul.f32 1.0, %v558
    %v560 = vtanh.pop %v553
    %v561 = vmul.f32 %v559, 0.0
    %563 = vrot.lane.b32.xlu0 %v560, 64
    %v564 = vpop.permute.xlu0 %563
    %v566 = vmul.f32 %v559, %v564
    %568 = vrot.lane.b32.xlu0 %v566, 32
    %v569 = vpop.permute.xlu0 %568
    %v571 = vadd.f32 %v561, %v569
    %v572 = vtanh.pop %v571
    %574 = vrot.lane.b32.xlu0 %v572, 64
    %v575 = vpop.permute.xlu0 %574
    %v577 = vmul.f32 %v559, %v575
    %579 = vrot.lane.b32.xlu0 %v577, 32
    %v580 = vpop.permute.xlu0 %579
    %v581 = vsel %vm239, %v580, 0
    %583 = vmatprep.subr.mxu0 0.0
    %584 = vmatpush1.msra.mxu0 %v397
    %585 = vmatprep.subr.mxu0 0.0
    %586 = vmatpush1.msra.mxu0 %v398
    %587 = vmatprep.subr.mxu0 0.0
    %588 = vmatpush1.msra.mxu0 %v399
    %589 = vmatprep.subr.mxu0 0.0
    %590 = vmatpush1.msra.mxu0 %v400
    %591 = vmatprep.subr.mxu0 0.0
    %592 = vmatpush1.msra.mxu0 0.0
    %593 = vmatprep.subr.mxu0 0.0
    %594 = vmatpush1.msra.mxu0 0.0
    %595 = vmatprep.subr.mxu0 0.0
    %596 = vmatpush1.msra.mxu0 0.0
    %597 = vmatprep.subr.mxu0 0.0
    %598 = vmatpush1.msra.mxu0 0.0
    %599 = vmatprep.subr.mxu0 0.0
    %600 = vmatpush1.msra.mxu0 0.0
    %601 = vmatprep.subr.mxu0 0.0
    %602 = vmatpush1.msra.mxu0 0.0
    %603 = vmatprep.subr.mxu0 0.0
    %604 = vmatpush1.msra.mxu0 0.0
    %605 = vmatprep.subr.mxu0 0.0
    %606 = vmatpush1.msra.mxu0 0.0
    %607 = vmatprep.subr.mxu0 0.0
    %608 = vmatpush1.msra.mxu0 0.0
    %609 = vmatprep.subr.mxu0 0.0
    %610 = vmatpush1.msra.mxu0 0.0
    %611 = vmatprep.subr.mxu0 0.0
    %612 = vmatpush1.msra.mxu0 0.0
    %613 = vmatprep.subr.mxu0 0.0
    %614 = vmatpush1.msra.mxu0 0.0
    %615 = vmatprep.subr.mxu0 0.0
    %616 = vmatpush1.msra.mxu0 0.0
    %617 = vmatprep.subr.mxu0 0.0
    %618 = vmatpush1.msra.mxu0 0.0
    %619 = vmatprep.subr.mxu0 0.0
    %620 = vmatpush1.msra.mxu0 0.0
    %621 = vmatprep.subr.mxu0 0.0
    %622 = vmatpush1.msra.mxu0 0.0
    %623 = vmatprep.subr.mxu0 0.0
    %624 = vmatpush1.msra.mxu0 0.0
    %625 = vmatprep.subr.mxu0 0.0
    %626 = vmatpush1.msra.mxu0 0.0
    %627 = vmatprep.subr.mxu0 0.0
    %628 = vmatpush1.msra.mxu0 0.0
    %629 = vmatprep.subr.mxu0 0.0
    %630 = vmatpush1.msra.mxu0 0.0
    %631 = vmatprep.subr.mxu0 0.0
    %632 = vmatpush1.msra.mxu0 0.0
    %633 = vmatprep.subr.mxu0 0.0
    %634 = vmatpush1.msra.mxu0 0.0
    %635 = vmatprep.subr.mxu0 0.0
    %636 = vmatpush1.msra.mxu0 0.0
    %637 = vmatprep.subr.mxu0 0.0
    %638 = vmatpush1.msra.mxu0 0.0
    %639 = vmatprep.subr.mxu0 0.0
    %640 = vmatpush1.msra.mxu0 0.0
    %641 = vmatprep.subr.mxu0 0.0
    %642 = vmatpush1.msra.mxu0 0.0
    %643 = vmatprep.subr.mxu0 0.0
    %644 = vmatpush1.msra.mxu0 0.0
    %645 = vmatprep.subr.mxu0 0.0
    %646 = vmatpush1.msra.mxu0 0.0
    %647 = vmatprep.mubr.f32.mxu0 0.0
    %648 = vmatmul.mubr.f32.gmra.mrb[0].mxu0 %v581
    %v649 = vpop.f32.mrb[0].mxu0
    %v650 = vadd.f32 0.0, %v649
    %v651 = vpop.f32.mrb[0].mxu0
    %652 = vdwg.mxu0
    %v654 = vrot.slane %v650, 7
    %v656 = vadd.f32 %v310, %v654
    %v657 = vrot.slane %v577, 1
    %658 = vrot.lane.b32.xlu0 %v657, 32
    %v659 = vpop.permute.xlu0 %658
    %v660 = vsel %vm239, %v659, 0
    %662 = vmatprep.subr.mxu0 0.0
    %663 = vmatpush1.msra.mxu0 %v401
    %664 = vmatprep.subr.mxu0 0.0
    %665 = vmatpush1.msra.mxu0 %v402
    %666 = vmatprep.subr.mxu0 0.0
    %667 = vmatpush1.msra.mxu0 %v403
    %668 = vmatprep.subr.mxu0 0.0
    %669 = vmatpush1.msra.mxu0 %v404
    %670 = vmatprep.subr.mxu0 0.0
    %671 = vmatpush1.msra.mxu0 0.0
    %672 = vmatprep.subr.mxu0 0.0
    %673 = vmatpush1.msra.mxu0 0.0
    %674 = vmatprep.subr.mxu0 0.0
    %675 = vmatpush1.msra.mxu0 0.0
    %676 = vmatprep.subr.mxu0 0.0
    %677 = vmatpush1.msra.mxu0 0.0
    %678 = vmatprep.subr.mxu0 0.0
    %679 = vmatpush1.msra.mxu0 0.0
    %680 = vmatprep.subr.mxu0 0.0
    %681 = vmatpush1.msra.mxu0 0.0
    %682 = vmatprep.subr.mxu0 0.0
    %683 = vmatpush1.msra.mxu0 0.0
    %684 = vmatprep.subr.mxu0 0.0
    %685 = vmatpush1.msra.mxu0 0.0
    %686 = vmatprep.subr.mxu0 0.0
    %687 = vmatpush1.msra.mxu0 0.0
    %688 = vmatprep.subr.mxu0 0.0
    %689 = vmatpush1.msra.mxu0 0.0
    %690 = vmatprep.subr.mxu0 0.0
    %691 = vmatpush1.msra.mxu0 0.0
    %692 = vmatprep.subr.mxu0 0.0
    %693 = vmatpush1.msra.mxu0 0.0
    %694 = vmatprep.subr.mxu0 0.0
    %695 = vmatpush1.msra.mxu0 0.0
    %696 = vmatprep.subr.mxu0 0.0
    %697 = vmatpush1.msra.mxu0 0.0
    %698 = vmatprep.subr.mxu0 0.0
    %699 = vmatpush1.msra.mxu0 0.0
    %700 = vmatprep.subr.mxu0 0.0
    %701 = vmatpush1.msra.mxu0 0.0
    %702 = vmatprep.subr.mxu0 0.0
    %703 = vmatpush1.msra.mxu0 0.0
    %704 = vmatprep.subr.mxu0 0.0
    %705 = vmatpush1.msra.mxu0 0.0
    %706 = vmatprep.subr.mxu0 0.0
    %707 = vmatpush1.msra.mxu0 0.0
    %708 = vmatprep.subr.mxu0 0.0
    %709 = vmatpush1.msra.mxu0 0.0
    %710 = vmatprep.subr.mxu0 0.0
    %711 = vmatpush1.msra.mxu0 0.0
    %712 = vmatprep.subr.mxu0 0.0
    %713 = vmatpush1.msra.mxu0 0.0
    %714 = vmatprep.subr.mxu0 0.0
    %715 = vmatpush1.msra.mxu0 0.0
    %716 = vmatprep.subr.mxu0 0.0
    %717 = vmatpush1.msra.mxu0 0.0
    %718 = vmatprep.subr.mxu0 0.0
    %719 = vmatpush1.msra.mxu0 0.0
    %720 = vmatprep.subr.mxu0 0.0
    %721 = vmatpush1.msra.mxu0 0.0
    %722 = vmatprep.subr.mxu0 0.0
    %723 = vmatpush1.msra.mxu0 0.0
    %724 = vmatprep.subr.mxu0 0.0
    %725 = vmatpush1.msra.mxu0 0.0
    %726 = vmatprep.mubr.f32.mxu0 0.0
    %727 = vmatmul.mubr.f32.gmra.mrb[0].mxu0 %v660
    %v728 = vpop.f32.mrb[0].mxu0
    %v729 = vadd.f32 0.0, %v728
    %v730 = vpop.f32.mrb[0].mxu0
    %731 = vdwg.mxu0
    %v733 = vrot.slane %v729, 7
    %v735 = vadd.f32 %v394, %v733
    %v737 = vrot.slane %v656, 1
    %v739 = vsel %vm162, %v737, %v735
    %v740 = vxor.u32 %v739, 2147483648
    %v741 = vmul.f32 %v740, 1.442695
    %v742 = vpow.pop %v741
    %v743 = vadd.f32 %v742, 1.0
    %v744 = vrcp.pop %v743
    %v745 = vmul.f32 1.0, %v744
    %v746 = vtanh.pop %v739
    %v747 = vmul.f32 %v745, %v571
    %749 = vrot.lane.b32.xlu0 %v746, 64
    %v750 = vpop.permute.xlu0 %749
    %v752 = vmul.f32 %v745, %v750
    %754 = vrot.lane.b32.xlu0 %v752, 32
    %v755 = vpop.permute.xlu0 %754
    %v757 = vadd.f32 %v747, %v755
    %v758 = vtanh.pop %v757
    %760 = vrot.lane.b32.xlu0 %v758, 64
    %v761 = vpop.permute.xlu0 %760
    %v763 = vmul.f32 %v745, %v761
    %765 = vrot.lane.b32.xlu0 %v763, 32
    %v766 = vpop.permute.xlu0 %765
    %v767 = vsel %vm239, %v766, 0
    %769 = vmatprep.subr.mxu0 0.0
    %770 = vmatpush1.msra.mxu0 %v397
    %771 = vmatprep.subr.mxu0 0.0
    %772 = vmatpush1.msra.mxu0 %v398
    %773 = vmatprep.subr.mxu0 0.0
    %774 = vmatpush1.msra.mxu0 %v399
    %775 = vmatprep.subr.mxu0 0.0
    %776 = vmatpush1.msra.mxu0 %v400
    %777 = vmatprep.subr.mxu0 0.0
    %778 = vmatpush1.msra.mxu0 0.0
    %779 = vmatprep.subr.mxu0 0.0
    %780 = vmatpush1.msra.mxu0 0.0
    %781 = vmatprep.subr.mxu0 0.0
    %782 = vmatpush1.msra.mxu0 0.0
    %783 = vmatprep.subr.mxu0 0.0
    %784 = vmatpush1.msra.mxu0 0.0
    %785 = vmatprep.subr.mxu0 0.0
    %786 = vmatpush1.msra.mxu0 0.0
    %787 = vmatprep.subr.mxu0 0.0
    %788 = vmatpush1.msra.mxu0 0.0
    %789 = vmatprep.subr.mxu0 0.0
    %790 = vmatpush1.msra.mxu0 0.0
    %791 = vmatprep.subr.mxu0 0.0
    %792 = vmatpush1.msra.mxu0 0.0
    %793 = vmatprep.subr.mxu0 0.0
    %794 = vmatpush1.msra.mxu0 0.0
    %795 = vmatprep.subr.mxu0 0.0
    %796 = vmatpush1.msra.mxu0 0.0
    %797 = vmatprep.subr.mxu0 0.0
    %798 = vmatpush1.msra.mxu0 0.0
    %799 = vmatprep.subr.mxu0 0.0
    %800 = vmatpush1.msra.mxu0 0.0
    %801 = vmatprep.subr.mxu0 0.0
    %802 = vmatpush1.msra.mxu0 0.0
    %803 = vmatprep.subr.mxu0 0.0
    %804 = vmatpush1.msra.mxu0 0.0
    %805 = vmatprep.subr.mxu0 0.0
    %806 = vmatpush1.msra.mxu0 0.0
    %807 = vmatprep.subr.mxu0 0.0
    %808 = vmatpush1.msra.mxu0 0.0
    %809 = vmatprep.subr.mxu0 0.0
    %810 = vmatpush1.msra.mxu0 0.0
    %811 = vmatprep.subr.mxu0 0.0
    %812 = vmatpush1.msra.mxu0 0.0
    %813 = vmatprep.subr.mxu0 0.0
    %814 = vmatpush1.msra.mxu0 0.0
    %815 = vmatprep.subr.mxu0 0.0
    %816 = vmatpush1.msra.mxu0 0.0
    %817 = vmatprep.subr.mxu0 0.0
    %818 = vmatpush1.msra.mxu0 0.0
    %819 = vmatprep.subr.mxu0 0.0
    %820 = vmatpush1.msra.mxu0 0.0
    %821 = vmatprep.subr.mxu0 0.0
    %822 = vmatpush1.msra.mxu0 0.0
    %823 = vmatprep.subr.mxu0 0.0
    %824 = vmatpush1.msra.mxu0 0.0
    %825 = vmatprep.subr.mxu0 0.0
    %826 = vmatpush1.msra.mxu0 0.0
    %827 = vmatprep.subr.mxu0 0.0
    %828 = vmatpush1.msra.mxu0 0.0
    %829 = vmatprep.subr.mxu0 0.0
    %830 = vmatpush1.msra.mxu0 0.0
    %831 = vmatprep.subr.mxu0 0.0
    %832 = vmatpush1.msra.mxu0 0.0
    %833 = vmatprep.mubr.f32.mxu0 0.0
    %834 = vmatmul.mubr.f32.gmra.mrb[0].mxu0 %v767
    %v835 = vpop.f32.mrb[0].mxu0
    %v836 = vadd.f32 0.0, %v835
    %v837 = vpop.f32.mrb[0].mxu0
    %838 = vdwg.mxu0
    %v840 = vrot.slane %v836, 6
    %v842 = vadd.f32 %v310, %v840
    %v843 = vrot.slane %v763, 1
    %844 = vrot.lane.b32.xlu0 %v843, 32
    %v845 = vpop.permute.xlu0 %844
    %v846 = vsel %vm239, %v845, 0
    %848 = vmatprep.subr.mxu0 0.0
    %849 = vmatpush1.msra.mxu0 %v401
    %850 = vmatprep.subr.mxu0 0.0
    %851 = vmatpush1.msra.mxu0 %v402
    %852 = vmatprep.subr.mxu0 0.0
    %853 = vmatpush1.msra.mxu0 %v403
    %854 = vmatprep.subr.mxu0 0.0
    %855 = vmatpush1.msra.mxu0 %v404
    %856 = vmatprep.subr.mxu0 0.0
    %857 = vmatpush1.msra.mxu0 0.0
    %858 = vmatprep.subr.mxu0 0.0
    %859 = vmatpush1.msra.mxu0 0.0
    %860 = vmatprep.subr.mxu0 0.0
    %861 = vmatpush1.msra.mxu0 0.0
    %862 = vmatprep.subr.mxu0 0.0
    %863 = vmatpush1.msra.mxu0 0.0
    %864 = vmatprep.subr.mxu0 0.0
    %865 = vmatpush1.msra.mxu0 0.0
    %866 = vmatprep.subr.mxu0 0.0
    %867 = vmatpush1.msra.mxu0 0.0
    %868 = vmatprep.subr.mxu0 0.0
    %869 = vmatpush1.msra.mxu0 0.0
    %870 = vmatprep.subr.mxu0 0.0
    %871 = vmatpush1.msra.mxu0 0.0
    %872 = vmatprep.subr.mxu0 0.0
    %873 = vmatpush1.msra.mxu0 0.0
    %874 = vmatprep.subr.mxu0 0.0
    %875 = vmatpush1.msra.mxu0 0.0
    %876 = vmatprep.subr.mxu0 0.0
    %877 = vmatpush1.msra.mxu0 0.0
    %878 = vmatprep.subr.mxu0 0.0
    %879 = vmatpush1.msra.mxu0 0.0
    %880 = vmatprep.subr.mxu0 0.0
    %881 = vmatpush1.msra.mxu0 0.0
    %882 = vmatprep.subr.mxu0 0.0
    %883 = vmatpush1.msra.mxu0 0.0
    %884 = vmatprep.subr.mxu0 0.0
    %885 = vmatpush1.msra.mxu0 0.0
    %886 = vmatprep.subr.mxu0 0.0
    %887 = vmatpush1.msra.mxu0 0.0
    %888 = vmatprep.subr.mxu0 0.0
    %889 = vmatpush1.msra.mxu0 0.0
    %890 = vmatprep.subr.mxu0 0.0
    %891 = vmatpush1.msra.mxu0 0.0
    %892 = vmatprep.subr.mxu0 0.0
    %893 = vmatpush1.msra.mxu0 0.0
    %894 = vmatprep.subr.mxu0 0.0
    %895 = vmatpush1.msra.mxu0 0.0
    %896 = vmatprep.subr.mxu0 0.0
    %897 = vmatpush1.msra.mxu0 0.0
    %898 = vmatprep.subr.mxu0 0.0
    %899 = vmatpush1.msra.mxu0 0.0
    %900 = vmatprep.subr.mxu0 0.0
    %901 = vmatpush1.msra.mxu0 0.0
    %902 = vmatprep.subr.mxu0 0.0
    %903 = vmatpush1.msra.mxu0 0.0
    %904 = vmatprep.subr.mxu0 0.0
    %905 = vmatpush1.msra.mxu0 0.0
    %906 = vmatprep.subr.mxu0 0.0
    %907 = vmatpush1.msra.mxu0 0.0
    %908 = vmatprep.subr.mxu0 0.0
    %909 = vmatpush1.msra.mxu0 0.0
    %910 = vmatprep.subr.mxu0 0.0
    %911 = vmatpush1.msra.mxu0 0.0
    %912 = vmatprep.mubr.f32.mxu0 0.0
    %913 = vmatmul.mubr.f32.gmra.mrb[0].mxu0 %v846
    %v914 = vpop.f32.mrb[0].mxu0
    %v915 = vadd.f32 0.0, %v914
    %v916 = vpop.f32.mrb[0].mxu0
    %917 = vdwg.mxu0
    %v919 = vrot.slane %v915, 6
    %v921 = vadd.f32 %v394, %v919
    %v923 = vrot.slane %v842, 2
    %v926 = vrot.slane %v921, 1
    %v928 = vsel %vm162, %v923, %v926
    %v929 = vxor.u32 %v928, 2147483648
    %v930 = vmul.f32 %v929, 1.442695
    %v931 = vpow.pop %v930
    %v932 = vadd.f32 %v931, 1.0
    %v933 = vrcp.pop %v932
    %v934 = vmul.f32 1.0, %v933
    %v935 = vtanh.pop %v928
    %v936 = vmul.f32 %v934, %v757
    %938 = vrot.lane.b32.xlu0 %v935, 64
    %v939 = vpop.permute.xlu0 %938
    %v941 = vmul.f32 %v934, %v939
    %943 = vrot.lane.b32.xlu0 %v941, 32
    %v944 = vpop.permute.xlu0 %943
    %v946 = vadd.f32 %v936, %v944
    %v947 = vtanh.pop %v946
    %949 = vrot.lane.b32.xlu0 %v947, 64
    %v950 = vpop.permute.xlu0 %949
    %v952 = vmul.f32 %v934, %v950
    %954 = vrot.lane.b32.xlu0 %v952, 32
    %v955 = vpop.permute.xlu0 %954
    %v956 = vsel %vm239, %v955, 0
    %958 = vmatprep.subr.mxu0 0.0
    %959 = vmatpush1.msra.mxu0 %v397
    %960 = vmatprep.subr.mxu0 0.0
    %961 = vmatpush1.msra.mxu0 %v398
    %962 = vmatprep.subr.mxu0 0.0
    %963 = vmatpush1.msra.mxu0 %v399
    %964 = vmatprep.subr.mxu0 0.0
    %965 = vmatpush1.msra.mxu0 %v400
    %966 = vmatprep.subr.mxu0 0.0
    %967 = vmatpush1.msra.mxu0 0.0
    %968 = vmatprep.subr.mxu0 0.0
    %969 = vmatpush1.msra.mxu0 0.0
    %970 = vmatprep.subr.mxu0 0.0
    %971 = vmatpush1.msra.mxu0 0.0
    %972 = vmatprep.subr.mxu0 0.0
    %973 = vmatpush1.msra.mxu0 0.0
    %974 = vmatprep.subr.mxu0 0.0
    %975 = vmatpush1.msra.mxu0 0.0
    %976 = vmatprep.subr.mxu0 0.0
    %977 = vmatpush1.msra.mxu0 0.0
    %978 = vmatprep.subr.mxu0 0.0
    %979 = vmatpush1.msra.mxu0 0.0
    %980 = vmatprep.subr.mxu0 0.0
    %981 = vmatpush1.msra.mxu0 0.0
    %982 = vmatprep.subr.mxu0 0.0
    %983 = vmatpush1.msra.mxu0 0.0
    %984 = vmatprep.subr.mxu0 0.0
    %985 = vmatpush1.msra.mxu0 0.0
    %986 = vmatprep.subr.mxu0 0.0
    %987 = vmatpush1.msra.mxu0 0.0
    %988 = vmatprep.subr.mxu0 0.0
    %989 = vmatpush1.msra.mxu0 0.0
    %990 = vmatprep.subr.mxu0 0.0
    %991 = vmatpush1.msra.mxu0 0.0
    %992 = vmatprep.subr.mxu0 0.0
    %993 = vmatpush1.msra.mxu0 0.0
    %994 = vmatprep.subr.mxu0 0.0
    %995 = vmatpush1.msra.mxu0 0.0
    %996 = vmatprep.subr.mxu0 0.0
    %997 = vmatpush1.msra.mxu0 0.0
    %998 = vmatprep.subr.mxu0 0.0
    %999 = vmatpush1.msra.mxu0 0.0
    %1000 = vmatprep.subr.mxu0 0.0
    %1001 = vmatpush1.msra.mxu0 0.0
    %1002 = vmatprep.subr.mxu0 0.0
    %1003 = vmatpush1.msra.mxu0 0.0
    %1004 = vmatprep.subr.mxu0 0.0
    %1005 = vmatpush1.msra.mxu0 0.0
    %1006 = vmatprep.subr.mxu0 0.0
    %1007 = vmatpush1.msra.mxu0 0.0
    %1008 = vmatprep.subr.mxu0 0.0
    %1009 = vmatpush1.msra.mxu0 0.0
    %1010 = vmatprep.subr.mxu0 0.0
    %1011 = vmatpush1.msra.mxu0 0.0
    %1012 = vmatprep.subr.mxu0 0.0
    %1013 = vmatpush1.msra.mxu0 0.0
    %1014 = vmatprep.subr.mxu0 0.0
    %1015 = vmatpush1.msra.mxu0 0.0
    %1016 = vmatprep.subr.mxu0 0.0
    %1017 = vmatpush1.msra.mxu0 0.0
    %1018 = vmatprep.subr.mxu0 0.0
    %1019 = vmatpush1.msra.mxu0 0.0
    %1020 = vmatprep.subr.mxu0 0.0
    %1021 = vmatpush1.msra.mxu0 0.0
    %1022 = vmatprep.mubr.f32.mxu0 0.0
    %1023 = vmatmul.mubr.f32.gmra.mrb[0].mxu0 %v956
    %v1024 = vpop.f32.mrb[0].mxu0
    %v1025 = vadd.f32 0.0, %v1024
    %v1026 = vpop.f32.mrb[0].mxu0
    %1027 = vdwg.mxu0
    %v1029 = vrot.slane %v1025, 5
    %v1031 = vadd.f32 %v310, %v1029
    %v1032 = vrot.slane %v952, 1
    %1033 = vrot.lane.b32.xlu0 %v1032, 32
    %v1034 = vpop.permute.xlu0 %1033
    %v1035 = vsel %vm239, %v1034, 0
    %1037 = vmatprep.subr.mxu0 0.0
    %1038 = vmatpush1.msra.mxu0 %v401
    %1039 = vmatprep.subr.mxu0 0.0
    %1040 = vmatpush1.msra.mxu0 %v402
    %1041 = vmatprep.subr.mxu0 0.0
    %1042 = vmatpush1.msra.mxu0 %v403
    %1043 = vmatprep.subr.mxu0 0.0
    %1044 = vmatpush1.msra.mxu0 %v404
    %1045 = vmatprep.subr.mxu0 0.0
    %1046 = vmatpush1.msra.mxu0 0.0
    %1047 = vmatprep.subr.mxu0 0.0
    %1048 = vmatpush1.msra.mxu0 0.0
    %1049 = vmatprep.subr.mxu0 0.0
    %1050 = vmatpush1.msra.mxu0 0.0
    %1051 = vmatprep.subr.mxu0 0.0
    %1052 = vmatpush1.msra.mxu0 0.0
    %1053 = vmatprep.subr.mxu0 0.0
    %1054 = vmatpush1.msra.mxu0 0.0
    %1055 = vmatprep.subr.mxu0 0.0
    %1056 = vmatpush1.msra.mxu0 0.0
    %1057 = vmatprep.subr.mxu0 0.0
    %1058 = vmatpush1.msra.mxu0 0.0
    %1059 = vmatprep.subr.mxu0 0.0
    %1060 = vmatpush1.msra.mxu0 0.0
    %1061 = vmatprep.subr.mxu0 0.0
    %1062 = vmatpush1.msra.mxu0 0.0
    %1063 = vmatprep.subr.mxu0 0.0
    %1064 = vmatpush1.msra.mxu0 0.0
    %1065 = vmatprep.subr.mxu0 0.0
    %1066 = vmatpush1.msra.mxu0 0.0
    %1067 = vmatprep.subr.mxu0 0.0
    %1068 = vmatpush1.msra.mxu0 0.0
    %1069 = vmatprep.subr.mxu0 0.0
    %1070 = vmatpush1.msra.mxu0 0.0
    %1071 = vmatprep.subr.mxu0 0.0
    %1072 = vmatpush1.msra.mxu0 0.0
    %1073 = vmatprep.subr.mxu0 0.0
    %1074 = vmatpush1.msra.mxu0 0.0
    %1075 = vmatprep.subr.mxu0 0.0
    %1076 = vmatpush1.msra.mxu0 0.0
    %1077 = vmatprep.subr.mxu0 0.0
    %1078 = vmatpush1.msra.mxu0 0.0
    %1079 = vmatprep.subr.mxu0 0.0
    %1080 = vmatpush1.msra.mxu0 0.0
    %1081 = vmatprep.subr.mxu0 0.0
    %1082 = vmatpush1.msra.mxu0 0.0
    %1083 = vmatprep.subr.mxu0 0.0
    %1084 = vmatpush1.msra.mxu0 0.0
    %1085 = vmatprep.subr.mxu0 0.0
    %1086 = vmatpush1.msra.mxu0 0.0
    %1087 = vmatprep.subr.mxu0 0.0
    %1088 = vmatpush1.msra.mxu0 0.0
    %1089 = vmatprep.subr.mxu0 0.0
    %1090 = vmatpush1.msra.mxu0 0.0
    %1091 = vmatprep.subr.mxu0 0.0
    %1092 = vmatpush1.msra.mxu0 0.0
    %1093 = vmatprep.subr.mxu0 0.0
    %1094 = vmatpush1.msra.mxu0 0.0
    %1095 = vmatprep.subr.mxu0 0.0
    %1096 = vmatpush1.msra.mxu0 0.0
    %1097 = vmatprep.subr.mxu0 0.0
    %1098 = vmatpush1.msra.mxu0 0.0
    %1099 = vmatprep.subr.mxu0 0.0
    %1100 = vmatpush1.msra.mxu0 0.0
    %1101 = vmatprep.mubr.f32.mxu0 0.0
    %1102 = vmatmul.mubr.f32.gmra.mrb[0].mxu0 %v1035
    %v1103 = vpop.f32.mrb[0].mxu0
    %v1104 = vadd.f32 0.0, %v1103
    %v1105 = vpop.f32.mrb[0].mxu0
    %1106 = vdwg.mxu0
    %v1108 = vrot.slane %v1104, 5
    %v1110 = vadd.f32 %v394, %v1108
    %v1112 = vrot.slane %v1031, 3
    %v1115 = vrot.slane %v1110, 2
    %v1117 = vsel %vm162, %v1112, %v1115
    %v1118 = vxor.u32 %v1117, 2147483648
    %v1119 = vmul.f32 %v1118, 1.442695
    %v1120 = vpow.pop %v1119
    %v1121 = vadd.f32 %v1120, 1.0
    %v1122 = vrcp.pop %v1121
    %v1123 = vmul.f32 1.0, %v1122
    %v1124 = vtanh.pop %v1117
    %v1125 = vmul.f32 %v1123, %v946
    %1127 = vrot.lane.b32.xlu0 %v1124, 64
    %v1128 = vpop.permute.xlu0 %1127
    %v1130 = vmul.f32 %v1123, %v1128
    %1132 = vrot.lane.b32.xlu0 %v1130, 32
    %v1133 = vpop.permute.xlu0 %1132
    %v1135 = vadd.f32 %v1125, %v1133
    %v1136 = vtanh.pop %v1135
    %1138 = vrot.lane.b32.xlu0 %v1136, 64
    %v1139 = vpop.permute.xlu0 %1138
    %v1141 = vmul.f32 %v1123, %v1139
    %1143 = vrot.lane.b32.xlu0 %v1141, 32
    %v1144 = vpop.permute.xlu0 %1143
    %v1145 = vsel %vm239, %v1144, 0
    %1147 = vmatprep.subr.mxu0 0.0
    %1148 = vmatpush1.msra.mxu0 %v397
    %1149 = vmatprep.subr.mxu0 0.0
    %1150 = vmatpush1.msra.mxu0 %v398
    %1151 = vmatprep.subr.mxu0 0.0
    %1152 = vmatpush1.msra.mxu0 %v399
    %1153 = vmatprep.subr.mxu0 0.0
    %1154 = vmatpush1.msra.mxu0 %v400
    %1155 = vmatprep.subr.mxu0 0.0
    %1156 = vmatpush1.msra.mxu0 0.0
    %1157 = vmatprep.subr.mxu0 0.0
    %1158 = vmatpush1.msra.mxu0 0.0
    %1159 = vmatprep.subr.mxu0 0.0
    %1160 = vmatpush1.msra.mxu0 0.0
    %1161 = vmatprep.subr.mxu0 0.0
    %1162 = vmatpush1.msra.mxu0 0.0
    %1163 = vmatprep.subr.mxu0 0.0
    %1164 = vmatpush1.msra.mxu0 0.0
    %1165 = vmatprep.subr.mxu0 0.0
    %1166 = vmatpush1.msra.mxu0 0.0
    %1167 = vmatprep.subr.mxu0 0.0
    %1168 = vmatpush1.msra.mxu0 0.0
    %1169 = vmatprep.subr.mxu0 0.0
    %1170 = vmatpush1.msra.mxu0 0.0
    %1171 = vmatprep.subr.mxu0 0.0
    %1172 = vmatpush1.msra.mxu0 0.0
    %1173 = vmatprep.subr.mxu0 0.0
    %1174 = vmatpush1.msra.mxu0 0.0
    %1175 = vmatprep.subr.mxu0 0.0
    %1176 = vmatpush1.msra.mxu0 0.0
    %1177 = vmatprep.subr.mxu0 0.0
    %1178 = vmatpush1.msra.mxu0 0.0
    %1179 = vmatprep.subr.mxu0 0.0
    %1180 = vmatpush1.msra.mxu0 0.0
    %1181 = vmatprep.subr.mxu0 0.0
    %1182 = vmatpush1.msra.mxu0 0.0
    %1183 = vmatprep.subr.mxu0 0.0
    %1184 = vmatpush1.msra.mxu0 0.0
    %1185 = vmatprep.subr.mxu0 0.0
    %1186 = vmatpush1.msra.mxu0 0.0
    %1187 = vmatprep.subr.mxu0 0.0
    %1188 = vmatpush1.msra.mxu0 0.0
    %1189 = vmatprep.subr.mxu0 0.0
    %1190 = vmatpush1.msra.mxu0 0.0
    %1191 = vmatprep.subr.mxu0 0.0
    %1192 = vmatpush1.msra.mxu0 0.0
    %1193 = vmatprep.subr.mxu0 0.0
    %1194 = vmatpush1.msra.mxu0 0.0
    %1195 = vmatprep.subr.mxu0 0.0
    %1196 = vmatpush1.msra.mxu0 0.0
    %1197 = vmatprep.subr.mxu0 0.0
    %1198 = vmatpush1.msra.mxu0 0.0
    %1199 = vmatprep.subr.mxu0 0.0
    %1200 = vmatpush1.msra.mxu0 0.0
    %1201 = vmatprep.subr.mxu0 0.0
    %1202 = vmatpush1.msra.mxu0 0.0
    %1203 = vmatprep.subr.mxu0 0.0
    %1204 = vmatpush1.msra.mxu0 0.0
    %1205 = vmatprep.subr.mxu0 0.0
    %1206 = vmatpush1.msra.mxu0 0.0
    %1207 = vmatprep.subr.mxu0 0.0
    %1208 = vmatpush1.msra.mxu0 0.0
    %1209 = vmatprep.subr.mxu0 0.0
    %1210 = vmatpush1.msra.mxu0 0.0
    %1211 = vmatprep.mubr.f32.mxu0 0.0
    %1212 = vmatmul.mubr.f32.gmra.mrb[0].mxu0 %v1145
    %v1213 = vpop.f32.mrb[0].mxu0
    %v1214 = vadd.f32 0.0, %v1213
    %v1215 = vpop.f32.mrb[0].mxu0
    %1216 = vdwg.mxu0
    %v1218 = vrot.slane %v1214, 4
    %v1220 = vadd.f32 %v310, %v1218
    %v1221 = vrot.slane %v1141, 1
    %1222 = vrot.lane.b32.xlu0 %v1221, 32
    %v1223 = vpop.permute.xlu0 %1222
    %v1224 = vsel %vm239, %v1223, 0
    %1226 = vmatprep.subr.mxu0 0.0
    %1227 = vmatpush1.msra.mxu0 %v401
    %1228 = vmatprep.subr.mxu0 0.0
    %1229 = vmatpush1.msra.mxu0 %v402
    %1230 = vmatprep.subr.mxu0 0.0
    %1231 = vmatpush1.msra.mxu0 %v403
    %1232 = vmatprep.subr.mxu0 0.0
    %1233 = vmatpush1.msra.mxu0 %v404
    %1234 = vmatprep.subr.mxu0 0.0
    %1235 = vmatpush1.msra.mxu0 0.0
    %1236 = vmatprep.subr.mxu0 0.0
    %1237 = vmatpush1.msra.mxu0 0.0
    %1238 = vmatprep.subr.mxu0 0.0
    %1239 = vmatpush1.msra.mxu0 0.0
    %1240 = vmatprep.subr.mxu0 0.0
    %1241 = vmatpush1.msra.mxu0 0.0
    %1242 = vmatprep.subr.mxu0 0.0
    %1243 = vmatpush1.msra.mxu0 0.0
    %1244 = vmatprep.subr.mxu0 0.0
    %1245 = vmatpush1.msra.mxu0 0.0
    %1246 = vmatprep.subr.mxu0 0.0
    %1247 = vmatpush1.msra.mxu0 0.0
    %1248 = vmatprep.subr.mxu0 0.0
    %1249 = vmatpush1.msra.mxu0 0.0
    %1250 = vmatprep.subr.mxu0 0.0
    %1251 = vmatpush1.msra.mxu0 0.0
    %1252 = vmatprep.subr.mxu0 0.0
    %1253 = vmatpush1.msra.mxu0 0.0
    %1254 = vmatprep.subr.mxu0 0.0
    %1255 = vmatpush1.msra.mxu0 0.0
    %1256 = vmatprep.subr.mxu0 0.0
    %1257 = vmatpush1.msra.mxu0 0.0
    %1258 = vmatprep.subr.mxu0 0.0
    %1259 = vmatpush1.msra.mxu0 0.0
    %1260 = vmatprep.subr.mxu0 0.0
    %1261 = vmatpush1.msra.mxu0 0.0
    %1262 = vmatprep.subr.mxu0 0.0
    %1263 = vmatpush1.msra.mxu0 0.0
    %1264 = vmatprep.subr.mxu0 0.0
    %1265 = vmatpush1.msra.mxu0 0.0
    %1266 = vmatprep.subr.mxu0 0.0
    %1267 = vmatpush1.msra.mxu0 0.0
    %1268 = vmatprep.subr.mxu0 0.0
    %1269 = vmatpush1.msra.mxu0 0.0
    %1270 = vmatprep.subr.mxu0 0.0
    %1271 = vmatpush1.msra.mxu0 0.0
    %1272 = vmatprep.subr.mxu0 0.0
    %1273 = vmatpush1.msra.mxu0 0.0
    %1274 = vmatprep.subr.mxu0 0.0
    %1275 = vmatpush1.msra.mxu0 0.0
    %1276 = vmatprep.subr.mxu0 0.0
    %1277 = vmatpush1.msra.mxu0 0.0
    %1278 = vmatprep.subr.mxu0 0.0
    %1279 = vmatpush1.msra.mxu0 0.0
    %1280 = vmatprep.subr.mxu0 0.0
    %1281 = vmatpush1.msra.mxu0 0.0
    %1282 = vmatprep.subr.mxu0 0.0
    %1283 = vmatpush1.msra.mxu0 0.0
    %1284 = vmatprep.subr.mxu0 0.0
    %1285 = vmatpush1.msra.mxu0 0.0
    %1286 = vmatprep.subr.mxu0 0.0
    %1287 = vmatpush1.msra.mxu0 0.0
    %1288 = vmatprep.subr.mxu0 0.0
    %1289 = vmatpush1.msra.mxu0 0.0
    %1290 = vmatprep.mubr.f32.mxu0 0.0
    %1291 = vmatmul.mubr.f32.gmra.mrb[0].mxu0 %v1224
    %v1292 = vpop.f32.mrb[0].mxu0
    %v1293 = vadd.f32 0.0, %v1292
    %v1294 = vpop.f32.mrb[0].mxu0
    %1295 = vdwg.mxu0
    %v1297 = vrot.slane %v1293, 4
    %v1299 = vadd.f32 %v394, %v1297
    %v1301 = vrot.slane %v1220, 4
    %v1304 = vrot.slane %v1299, 3
    %v1306 = vsel %vm162, %v1301, %v1304
    %v1307 = vxor.u32 %v1306, 2147483648
    %v1308 = vmul.f32 %v1307, 1.442695
    %v1309 = vpow.pop %v1308
    %v1310 = vadd.f32 %v1309, 1.0
    %v1311 = vrcp.pop %v1310
    %v1312 = vmul.f32 1.0, %v1311
    %v1313 = vtanh.pop %v1306
    %v1314 = vmul.f32 %v1312, %v1135
    %1316 = vrot.lane.b32.xlu0 %v1313, 64
    %v1317 = vpop.permute.xlu0 %1316
    %v1319 = vmul.f32 %v1312, %v1317
    %1321 = vrot.lane.b32.xlu0 %v1319, 32
    %v1322 = vpop.permute.xlu0 %1321
    %v1324 = vadd.f32 %v1314, %v1322
    %v1325 = vtanh.pop %v1324
    %1327 = vrot.lane.b32.xlu0 %v1325, 64
    %v1328 = vpop.permute.xlu0 %1327
    %v1330 = vmul.f32 %v1312, %v1328
    %1332 = vrot.lane.b32.xlu0 %v1330, 32
    %v1333 = vpop.permute.xlu0 %1332
    %v1334 = vsel %vm239, %v1333, 0
    %1336 = vmatprep.subr.mxu0 0.0
    %1337 = vmatpush1.msra.mxu0 %v397
    %1338 = vmatprep.subr.mxu0 0.0
    %1339 = vmatpush1.msra.mxu0 %v398
    %1340 = vmatprep.subr.mxu0 0.0
    %1341 = vmatpush1.msra.mxu0 %v399
    %1342 = vmatprep.subr.mxu0 0.0
    %1343 = vmatpush1.msra.mxu0 %v400
    %1344 = vmatprep.subr.mxu0 0.0
    %1345 = vmatpush1.msra.mxu0 0.0
    %1346 = vmatprep.subr.mxu0 0.0
    %1347 = vmatpush1.msra.mxu0 0.0
    %1348 = vmatprep.subr.mxu0 0.0
    %1349 = vmatpush1.msra.mxu0 0.0
    %1350 = vmatprep.subr.mxu0 0.0
    %1351 = vmatpush1.msra.mxu0 0.0
    %1352 = vmatprep.subr.mxu0 0.0
    %1353 = vmatpush1.msra.mxu0 0.0
    %1354 = vmatprep.subr.mxu0 0.0
    %1355 = vmatpush1.msra.mxu0 0.0
    %1356 = vmatprep.subr.mxu0 0.0
    %1357 = vmatpush1.msra.mxu0 0.0
    %1358 = vmatprep.subr.mxu0 0.0
    %1359 = vmatpush1.msra.mxu0 0.0
    %1360 = vmatprep.subr.mxu0 0.0
    %1361 = vmatpush1.msra.mxu0 0.0
    %1362 = vmatprep.subr.mxu0 0.0
    %1363 = vmatpush1.msra.mxu0 0.0
    %1364 = vmatprep.subr.mxu0 0.0
    %1365 = vmatpush1.msra.mxu0 0.0
    %1366 = vmatprep.subr.mxu0 0.0
    %1367 = vmatpush1.msra.mxu0 0.0
    %1368 = vmatprep.subr.mxu0 0.0
    %1369 = vmatpush1.msra.mxu0 0.0
    %1370 = vmatprep.subr.mxu0 0.0
    %1371 = vmatpush1.msra.mxu0 0.0
    %1372 = vmatprep.subr.mxu0 0.0
    %1373 = vmatpush1.msra.mxu0 0.0
    %1374 = vmatprep.subr.mxu0 0.0
    %1375 = vmatpush1.msra.mxu0 0.0
    %1376 = vmatprep.subr.mxu0 0.0
    %1377 = vmatpush1.msra.mxu0 0.0
    %1378 = vmatprep.subr.mxu0 0.0
    %1379 = vmatpush1.msra.mxu0 0.0
    %1380 = vmatprep.subr.mxu0 0.0
    %1381 = vmatpush1.msra.mxu0 0.0
    %1382 = vmatprep.subr.mxu0 0.0
    %1383 = vmatpush1.msra.mxu0 0.0
    %1384 = vmatprep.subr.mxu0 0.0
    %1385 = vmatpush1.msra.mxu0 0.0
    %1386 = vmatprep.subr.mxu0 0.0
    %1387 = vmatpush1.msra.mxu0 0.0
    %1388 = vmatprep.subr.mxu0 0.0
    %1389 = vmatpush1.msra.mxu0 0.0
    %1390 = vmatprep.subr.mxu0 0.0
    %1391 = vmatpush1.msra.mxu0 0.0
    %1392 = vmatprep.subr.mxu0 0.0
    %1393 = vmatpush1.msra.mxu0 0.0
    %1394 = vmatprep.subr.mxu0 0.0
    %1395 = vmatpush1.msra.mxu0 0.0
    %1396 = vmatprep.subr.mxu0 0.0
    %1397 = vmatpush1.msra.mxu0 0.0
    %1398 = vmatprep.subr.mxu0 0.0
    %1399 = vmatpush1.msra.mxu0 0.0
    %1400 = vmatprep.mubr.f32.mxu0 0.0
    %1401 = vmatmul.mubr.f32.gmra.mrb[0].mxu0 %v1334
    %v1402 = vpop.f32.mrb[0].mxu0
    %v1403 = vadd.f32 0.0, %v1402
    %v1404 = vpop.f32.mrb[0].mxu0
    %1405 = vdwg.mxu0
    %v1407 = vrot.slane %v1403, 3
    %v1409 = vadd.f32 %v310, %v1407
    %v1410 = vrot.slane %v1330, 1
    %1411 = vrot.lane.b32.xlu0 %v1410, 32
    %v1412 = vpop.permute.xlu0 %1411
    %v1413 = vsel %vm239, %v1412, 0
    %1415 = vmatprep.subr.mxu0 0.0
    %1416 = vmatpush1.msra.mxu0 %v401
    %1417 = vmatprep.subr.mxu0 0.0
    %1418 = vmatpush1.msra.mxu0 %v402
    %1419 = vmatprep.subr.mxu0 0.0
    %1420 = vmatpush1.msra.mxu0 %v403
    %1421 = vmatprep.subr.mxu0 0.0
    %1422 = vmatpush1.msra.mxu0 %v404
    %1423 = vmatprep.subr.mxu0 0.0
    %1424 = vmatpush1.msra.mxu0 0.0
    %1425 = vmatprep.subr.mxu0 0.0
    %1426 = vmatpush1.msra.mxu0 0.0
    %1427 = vmatprep.subr.mxu0 0.0
    %1428 = vmatpush1.msra.mxu0 0.0
    %1429 = vmatprep.subr.mxu0 0.0
    %1430 = vmatpush1.msra.mxu0 0.0
    %1431 = vmatprep.subr.mxu0 0.0
    %1432 = vmatpush1.msra.mxu0 0.0
    %1433 = vmatprep.subr.mxu0 0.0
    %1434 = vmatpush1.msra.mxu0 0.0
    %1435 = vmatprep.subr.mxu0 0.0
    %1436 = vmatpush1.msra.mxu0 0.0
    %1437 = vmatprep.subr.mxu0 0.0
    %1438 = vmatpush1.msra.mxu0 0.0
    %1439 = vmatprep.subr.mxu0 0.0
    %1440 = vmatpush1.msra.mxu0 0.0
    %1441 = vmatprep.subr.mxu0 0.0
    %1442 = vmatpush1.msra.mxu0 0.0
    %1443 = vmatprep.subr.mxu0 0.0
    %1444 = vmatpush1.msra.mxu0 0.0
    %1445 = vmatprep.subr.mxu0 0.0
    %1446 = vmatpush1.msra.mxu0 0.0
    %1447 = vmatprep.subr.mxu0 0.0
    %1448 = vmatpush1.msra.mxu0 0.0
    %1449 = vmatprep.subr.mxu0 0.0
    %1450 = vmatpush1.msra.mxu0 0.0
    %1451 = vmatprep.subr.mxu0 0.0
    %1452 = vmatpush1.msra.mxu0 0.0
    %1453 = vmatprep.subr.mxu0 0.0
    %1454 = vmatpush1.msra.mxu0 0.0
    %1455 = vmatprep.subr.mxu0 0.0
    %1456 = vmatpush1.msra.mxu0 0.0
    %1457 = vmatprep.subr.mxu0 0.0
    %1458 = vmatpush1.msra.mxu0 0.0
    %1459 = vmatprep.subr.mxu0 0.0
    %1460 = vmatpush1.msra.mxu0 0.0
    %1461 = vmatprep.subr.mxu0 0.0
    %1462 = vmatpush1.msra.mxu0 0.0
    %1463 = vmatprep.subr.mxu0 0.0
    %1464 = vmatpush1.msra.mxu0 0.0
    %1465 = vmatprep.subr.mxu0 0.0
    %1466 = vmatpush1.msra.mxu0 0.0
    %1467 = vmatprep.subr.mxu0 0.0
    %1468 = vmatpush1.msra.mxu0 0.0
    %1469 = vmatprep.subr.mxu0 0.0
    %1470 = vmatpush1.msra.mxu0 0.0
    %1471 = vmatprep.subr.mxu0 0.0
    %1472 = vmatpush1.msra.mxu0 0.0
    %1473 = vmatprep.subr.mxu0 0.0
    %1474 = vmatpush1.msra.mxu0 0.0
    %1475 = vmatprep.subr.mxu0 0.0
    %1476 = vmatpush1.msra.mxu0 0.0
    %1477 = vmatprep.subr.mxu0 0.0
    %1478 = vmatpush1.msra.mxu0 0.0
    %1479 = vmatprep.mubr.f32.mxu0 0.0
    %1480 = vmatmul.mubr.f32.gmra.mrb[0].mxu0 %v1413
    %v1481 = vpop.f32.mrb[0].mxu0
    %v1482 = vadd.f32 0.0, %v1481
    %v1483 = vpop.f32.mrb[0].mxu0
    %1484 = vdwg.mxu0
    %v1486 = vrot.slane %v1482, 3
    %v1488 = vadd.f32 %v394, %v1486
    %v1490 = vrot.slane %v1409, 5
    %v1493 = vrot.slane %v1488, 4
    %v1495 = vsel %vm162, %v1490, %v1493
    %v1496 = vxor.u32 %v1495, 2147483648
    %v1497 = vmul.f32 %v1496, 1.442695
    %v1498 = vpow.pop %v1497
    %v1499 = vadd.f32 %v1498, 1.0
    %v1500 = vrcp.pop %v1499
    %v1501 = vmul.f32 1.0, %v1500
    %v1502 = vtanh.pop %v1495
    %v1503 = vmul.f32 %v1501, %v1324
    %1505 = vrot.lane.b32.xlu0 %v1502, 64
    %v1506 = vpop.permute.xlu0 %1505
    %v1508 = vmul.f32 %v1501, %v1506
    %1510 = vrot.lane.b32.xlu0 %v1508, 32
    %v1511 = vpop.permute.xlu0 %1510
    %v1513 = vadd.f32 %v1503, %v1511
    %v1514 = vtanh.pop %v1513
    %1516 = vrot.lane.b32.xlu0 %v1514, 64
    %v1517 = vpop.permute.xlu0 %1516
    %v1519 = vmul.f32 %v1501, %v1517
    %1521 = vrot.lane.b32.xlu0 %v1519, 32
    %v1522 = vpop.permute.xlu0 %1521
    %v1523 = vsel %vm239, %v1522, 0
    %1525 = vmatprep.subr.mxu0 0.0
    %1526 = vmatpush1.msra.mxu0 %v397
    %1527 = vmatprep.subr.mxu0 0.0
    %1528 = vmatpush1.msra.mxu0 %v398
    %1529 = vmatprep.subr.mxu0 0.0
    %1530 = vmatpush1.msra.mxu0 %v399
    %1531 = vmatprep.subr.mxu0 0.0
    %1532 = vmatpush1.msra.mxu0 %v400
    %1533 = vmatprep.subr.mxu0 0.0
    %1534 = vmatpush1.msra.mxu0 0.0
    %1535 = vmatprep.subr.mxu0 0.0
    %1536 = vmatpush1.msra.mxu0 0.0
    %1537 = vmatprep.subr.mxu0 0.0
    %1538 = vmatpush1.msra.mxu0 0.0
    %1539 = vmatprep.subr.mxu0 0.0
    %1540 = vmatpush1.msra.mxu0 0.0
    %1541 = vmatprep.subr.mxu0 0.0
    %1542 = vmatpush1.msra.mxu0 0.0
    %1543 = vmatprep.subr.mxu0 0.0
    %1544 = vmatpush1.msra.mxu0 0.0
    %1545 = vmatprep.subr.mxu0 0.0
    %1546 = vmatpush1.msra.mxu0 0.0
    %1547 = vmatprep.subr.mxu0 0.0
    %1548 = vmatpush1.msra.mxu0 0.0
    %1549 = vmatprep.subr.mxu0 0.0
    %1550 = vmatpush1.msra.mxu0 0.0
    %1551 = vmatprep.subr.mxu0 0.0
    %1552 = vmatpush1.msra.mxu0 0.0
    %1553 = vmatprep.subr.mxu0 0.0
    %1554 = vmatpush1.msra.mxu0 0.0
    %1555 = vmatprep.subr.mxu0 0.0
    %1556 = vmatpush1.msra.mxu0 0.0
    %1557 = vmatprep.subr.mxu0 0.0
    %1558 = vmatpush1.msra.mxu0 0.0
    %1559 = vmatprep.subr.mxu0 0.0
    %1560 = vmatpush1.msra.mxu0 0.0
    %1561 = vmatprep.subr.mxu0 0.0
    %1562 = vmatpush1.msra.mxu0 0.0
    %1563 = vmatprep.subr.mxu0 0.0
    %1564 = vmatpush1.msra.mxu0 0.0
    %1565 = vmatprep.subr.mxu0 0.0
    %1566 = vmatpush1.msra.mxu0 0.0
    %1567 = vmatprep.subr.mxu0 0.0
    %1568 = vmatpush1.msra.mxu0 0.0
    %1569 = vmatprep.subr.mxu0 0.0
    %1570 = vmatpush1.msra.mxu0 0.0
    %1571 = vmatprep.subr.mxu0 0.0
    %1572 = vmatpush1.msra.mxu0 0.0
    %1573 = vmatprep.subr.mxu0 0.0
    %1574 = vmatpush1.msra.mxu0 0.0
    %1575 = vmatprep.subr.mxu0 0.0
    %1576 = vmatpush1.msra.mxu0 0.0
    %1577 = vmatprep.subr.mxu0 0.0
    %1578 = vmatpush1.msra.mxu0 0.0
    %1579 = vmatprep.subr.mxu0 0.0
    %1580 = vmatpush1.msra.mxu0 0.0
    %1581 = vmatprep.subr.mxu0 0.0
    %1582 = vmatpush1.msra.mxu0 0.0
    %1583 = vmatprep.subr.mxu0 0.0
    %1584 = vmatpush1.msra.mxu0 0.0
    %1585 = vmatprep.subr.mxu0 0.0
    %1586 = vmatpush1.msra.mxu0 0.0
    %1587 = vmatprep.subr.mxu0 0.0
    %1588 = vmatpush1.msra.mxu0 0.0
    %1589 = vmatprep.mubr.f32.mxu0 0.0
    %1590 = vmatmul.mubr.f32.gmra.mrb[0].mxu0 %v1523
    %v1591 = vpop.f32.mrb[0].mxu0
    %v1592 = vadd.f32 0.0, %v1591
    %v1593 = vpop.f32.mrb[0].mxu0
    %1594 = vdwg.mxu0
    %v1596 = vrot.slane %v1592, 2
    %v1598 = vadd.f32 %v310, %v1596
    %v1599 = vrot.slane %v1519, 1
    %1600 = vrot.lane.b32.xlu0 %v1599, 32
    %v1601 = vpop.permute.xlu0 %1600
    %v1602 = vsel %vm239, %v1601, 0
    %1604 = vmatprep.subr.mxu0 0.0
    %1605 = vmatpush1.msra.mxu0 %v401
    %1606 = vmatprep.subr.mxu0 0.0
    %1607 = vmatpush1.msra.mxu0 %v402
    %1608 = vmatprep.subr.mxu0 0.0
    %1609 = vmatpush1.msra.mxu0 %v403
    %1610 = vmatprep.subr.mxu0 0.0
    %1611 = vmatpush1.msra.mxu0 %v404
    %1612 = vmatprep.subr.mxu0 0.0
    %1613 = vmatpush1.msra.mxu0 0.0
    %1614 = vmatprep.subr.mxu0 0.0
    %1615 = vmatpush1.msra.mxu0 0.0
    %1616 = vmatprep.subr.mxu0 0.0
    %1617 = vmatpush1.msra.mxu0 0.0
    %1618 = vmatprep.subr.mxu0 0.0
    %1619 = vmatpush1.msra.mxu0 0.0
    %1620 = vmatprep.subr.mxu0 0.0
    %1621 = vmatpush1.msra.mxu0 0.0
    %1622 = vmatprep.subr.mxu0 0.0
    %1623 = vmatpush1.msra.mxu0 0.0
    %1624 = vmatprep.subr.mxu0 0.0
    %1625 = vmatpush1.msra.mxu0 0.0
    %1626 = vmatprep.subr.mxu0 0.0
    %1627 = vmatpush1.msra.mxu0 0.0
    %1628 = vmatprep.subr.mxu0 0.0
    %1629 = vmatpush1.msra.mxu0 0.0
    %1630 = vmatprep.subr.mxu0 0.0
    %1631 = vmatpush1.msra.mxu0 0.0
    %1632 = vmatprep.subr.mxu0 0.0
    %1633 = vmatpush1.msra.mxu0 0.0
    %1634 = vmatprep.subr.mxu0 0.0
    %1635 = vmatpush1.msra.mxu0 0.0
    %1636 = vmatprep.subr.mxu0 0.0
    %1637 = vmatpush1.msra.mxu0 0.0
    %1638 = vmatprep.subr.mxu0 0.0
    %1639 = vmatpush1.msra.mxu0 0.0
    %1640 = vmatprep.subr.mxu0 0.0
    %1641 = vmatpush1.msra.mxu0 0.0
    %1642 = vmatprep.subr.mxu0 0.0
    %1643 = vmatpush1.msra.mxu0 0.0
    %1644 = vmatprep.subr.mxu0 0.0
    %1645 = vmatpush1.msra.mxu0 0.0
    %1646 = vmatprep.subr.mxu0 0.0
    %1647 = vmatpush1.msra.mxu0 0.0
    %1648 = vmatprep.subr.mxu0 0.0
    %1649 = vmatpush1.msra.mxu0 0.0
    %1650 = vmatprep.subr.mxu0 0.0
    %1651 = vmatpush1.msra.mxu0 0.0
    %1652 = vmatprep.subr.mxu0 0.0
    %1653 = vmatpush1.msra.mxu0 0.0
    %1654 = vmatprep.subr.mxu0 0.0
    %1655 = vmatpush1.msra.mxu0 0.0
    %1656 = vmatprep.subr.mxu0 0.0
    %1657 = vmatpush1.msra.mxu0 0.0
    %1658 = vmatprep.subr.mxu0 0.0
    %1659 = vmatpush1.msra.mxu0 0.0
    %1660 = vmatprep.subr.mxu0 0.0
    %1661 = vmatpush1.msra.mxu0 0.0
    %1662 = vmatprep.subr.mxu0 0.0
    %1663 = vmatpush1.msra.mxu0 0.0
    %1664 = vmatprep.subr.mxu0 0.0
    %1665 = vmatpush1.msra.mxu0 0.0
    %1666 = vmatprep.subr.mxu0 0.0
    %1667 = vmatpush1.msra.mxu0 0.0
    %1668 = vmatprep.mubr.f32.mxu0 0.0
    %1669 = vmatmul.mubr.f32.gmra.mrb[0].mxu0 %v1602
    %v1670 = vpop.f32.mrb[0].mxu0
    %v1671 = vadd.f32 0.0, %v1670
    %v1672 = vpop.f32.mrb[0].mxu0
    %1673 = vdwg.mxu0
    %v1675 = vrot.slane %v1671, 2
    %v1677 = vadd.f32 %v394, %v1675
    %v1679 = vrot.slane %v1598, 6
    %v1682 = vrot.slane %v1677, 5
    %v1684 = vsel %vm162, %v1679, %v1682
    %v1685 = vxor.u32 %v1684, 2147483648
    %v1686 = vmul.f32 %v1685, 1.442695
    %v1687 = vpow.pop %v1686
    %v1688 = vadd.f32 %v1687, 1.0
    %v1689 = vrcp.pop %v1688
    %v1690 = vmul.f32 1.0, %v1689
    %v1691 = vtanh.pop %v1684
    %v1692 = vmul.f32 %v1690, %v1513
    %1694 = vrot.lane.b32.xlu0 %v1691, 64
    %v1695 = vpop.permute.xlu0 %1694
    %v1697 = vmul.f32 %v1690, %v1695
    %1699 = vrot.lane.b32.xlu0 %v1697, 32
    %v1700 = vpop.permute.xlu0 %1699
    %v1702 = vadd.f32 %v1692, %v1700
    %v1703 = vtanh.pop %v1702
    %1705 = vrot.lane.b32.xlu0 %v1703, 64
    %v1706 = vpop.permute.xlu0 %1705
    %v1708 = vmul.f32 %v1690, %v1706
    %1710 = vrot.lane.b32.xlu0 %v1708, 32
    %v1711 = vpop.permute.xlu0 %1710
    %v1712 = vsel %vm239, %v1711, 0
    %1714 = vmatprep.subr.mxu0 0.0
    %1715 = vmatpush1.msra.mxu0 %v397
    %1716 = vmatprep.subr.mxu0 0.0
    %1717 = vmatpush1.msra.mxu0 %v398
    %1718 = vmatprep.subr.mxu0 0.0
    %1719 = vmatpush1.msra.mxu0 %v399
    %1720 = vmatprep.subr.mxu0 0.0
    %1721 = vmatpush1.msra.mxu0 %v400
    %1722 = vmatprep.subr.mxu0 0.0
    %1723 = vmatpush1.msra.mxu0 0.0
    %1724 = vmatprep.subr.mxu0 0.0
    %1725 = vmatpush1.msra.mxu0 0.0
    %1726 = vmatprep.subr.mxu0 0.0
    %1727 = vmatpush1.msra.mxu0 0.0
    %1728 = vmatprep.subr.mxu0 0.0
    %1729 = vmatpush1.msra.mxu0 0.0
    %1730 = vmatprep.subr.mxu0 0.0
    %1731 = vmatpush1.msra.mxu0 0.0
    %1732 = vmatprep.subr.mxu0 0.0
    %1733 = vmatpush1.msra.mxu0 0.0
    %1734 = vmatprep.subr.mxu0 0.0
    %1735 = vmatpush1.msra.mxu0 0.0
    %1736 = vmatprep.subr.mxu0 0.0
    %1737 = vmatpush1.msra.mxu0 0.0
    %1738 = vmatprep.subr.mxu0 0.0
    %1739 = vmatpush1.msra.mxu0 0.0
    %1740 = vmatprep.subr.mxu0 0.0
    %1741 = vmatpush1.msra.mxu0 0.0
    %1742 = vmatprep.subr.mxu0 0.0
    %1743 = vmatpush1.msra.mxu0 0.0
    %1744 = vmatprep.subr.mxu0 0.0
    %1745 = vmatpush1.msra.mxu0 0.0
    %1746 = vmatprep.subr.mxu0 0.0
    %1747 = vmatpush1.msra.mxu0 0.0
    %1748 = vmatprep.subr.mxu0 0.0
    %1749 = vmatpush1.msra.mxu0 0.0
    %1750 = vmatprep.subr.mxu0 0.0
    %1751 = vmatpush1.msra.mxu0 0.0
    %1752 = vmatprep.subr.mxu0 0.0
    %1753 = vmatpush1.msra.mxu0 0.0
    %1754 = vmatprep.subr.mxu0 0.0
    %1755 = vmatpush1.msra.mxu0 0.0
    %1756 = vmatprep.subr.mxu0 0.0
    %1757 = vmatpush1.msra.mxu0 0.0
    %1758 = vmatprep.subr.mxu0 0.0
    %1759 = vmatpush1.msra.mxu0 0.0
    %1760 = vmatprep.subr.mxu0 0.0
    %1761 = vmatpush1.msra.mxu0 0.0
    %1762 = vmatprep.subr.mxu0 0.0
    %1763 = vmatpush1.msra.mxu0 0.0
    %1764 = vmatprep.subr.mxu0 0.0
    %1765 = vmatpush1.msra.mxu0 0.0
    %1766 = vmatprep.subr.mxu0 0.0
    %1767 = vmatpush1.msra.mxu0 0.0
    %1768 = vmatprep.subr.mxu0 0.0
    %1769 = vmatpush1.msra.mxu0 0.0
    %1770 = vmatprep.subr.mxu0 0.0
    %1771 = vmatpush1.msra.mxu0 0.0
    %1772 = vmatprep.subr.mxu0 0.0
    %1773 = vmatpush1.msra.mxu0 0.0
    %1774 = vmatprep.subr.mxu0 0.0
    %1775 = vmatpush1.msra.mxu0 0.0
    %1776 = vmatprep.subr.mxu0 0.0
    %1777 = vmatpush1.msra.mxu0 0.0
    %1778 = vmatprep.mubr.f32.mxu0 0.0
    %1779 = vmatmul.mubr.f32.gmra.mrb[0].mxu0 %v1712
    %v1780 = vpop.f32.mrb[0].mxu0
    %v1781 = vadd.f32 0.0, %v1780
    %v1782 = vpop.f32.mrb[0].mxu0
    %1783 = vdwg.mxu0
    %v1785 = vrot.slane %v1781, 1
    %v1787 = vadd.f32 %v310, %v1785
    %v1788 = vrot.slane %v1708, 1
    %1789 = vrot.lane.b32.xlu0 %v1788, 32
    %v1790 = vpop.permute.xlu0 %1789
    %v1791 = vsel %vm239, %v1790, 0
    %1793 = vmatprep.subr.mxu0 0.0
    %1794 = vmatpush1.msra.mxu0 %v401
    %1795 = vmatprep.subr.mxu0 0.0
    %1796 = vmatpush1.msra.mxu0 %v402
    %1797 = vmatprep.subr.mxu0 0.0
    %1798 = vmatpush1.msra.mxu0 %v403
    %1799 = vmatprep.subr.mxu0 0.0
    %1800 = vmatpush1.msra.mxu0 %v404
    %1801 = vmatprep.subr.mxu0 0.0
    %1802 = vmatpush1.msra.mxu0 0.0
    %1803 = vmatprep.subr.mxu0 0.0
    %1804 = vmatpush1.msra.mxu0 0.0
    %1805 = vmatprep.subr.mxu0 0.0
    %1806 = vmatpush1.msra.mxu0 0.0
    %1807 = vmatprep.subr.mxu0 0.0
    %1808 = vmatpush1.msra.mxu0 0.0
    %1809 = vmatprep.subr.mxu0 0.0
    %1810 = vmatpush1.msra.mxu0 0.0
    %1811 = vmatprep.subr.mxu0 0.0
    %1812 = vmatpush1.msra.mxu0 0.0
    %1813 = vmatprep.subr.mxu0 0.0
    %1814 = vmatpush1.msra.mxu0 0.0
    %1815 = vmatprep.subr.mxu0 0.0
    %1816 = vmatpush1.msra.mxu0 0.0
    %1817 = vmatprep.subr.mxu0 0.0
    %1818 = vmatpush1.msra.mxu0 0.0
    %1819 = vmatprep.subr.mxu0 0.0
    %1820 = vmatpush1.msra.mxu0 0.0
    %1821 = vmatprep.subr.mxu0 0.0
    %1822 = vmatpush1.msra.mxu0 0.0
    %1823 = vmatprep.subr.mxu0 0.0
    %1824 = vmatpush1.msra.mxu0 0.0
    %1825 = vmatprep.subr.mxu0 0.0
    %1826 = vmatpush1.msra.mxu0 0.0
    %1827 = vmatprep.subr.mxu0 0.0
    %1828 = vmatpush1.msra.mxu0 0.0
    %1829 = vmatprep.subr.mxu0 0.0
    %1830 = vmatpush1.msra.mxu0 0.0
    %1831 = vmatprep.subr.mxu0 0.0
    %1832 = vmatpush1.msra.mxu0 0.0
    %1833 = vmatprep.subr.mxu0 0.0
    %1834 = vmatpush1.msra.mxu0 0.0
    %1835 = vmatprep.subr.mxu0 0.0
    %1836 = vmatpush1.msra.mxu0 0.0
    %1837 = vmatprep.subr.mxu0 0.0
    %1838 = vmatpush1.msra.mxu0 0.0
    %1839 = vmatprep.subr.mxu0 0.0
    %1840 = vmatpush1.msra.mxu0 0.0
    %1841 = vmatprep.subr.mxu0 0.0
    %1842 = vmatpush1.msra.mxu0 0.0
    %1843 = vmatprep.subr.mxu0 0.0
    %1844 = vmatpush1.msra.mxu0 0.0
    %1845 = vmatprep.subr.mxu0 0.0
    %1846 = vmatpush1.msra.mxu0 0.0
    %1847 = vmatprep.subr.mxu0 0.0
    %1848 = vmatpush1.msra.mxu0 0.0
    %1849 = vmatprep.subr.mxu0 0.0
    %1850 = vmatpush1.msra.mxu0 0.0
    %1851 = vmatprep.subr.mxu0 0.0
    %1852 = vmatpush1.msra.mxu0 0.0
    %1853 = vmatprep.subr.mxu0 0.0
    %1854 = vmatpush1.msra.mxu0 0.0
    %1855 = vmatprep.subr.mxu0 0.0
    %1856 = vmatpush1.msra.mxu0 0.0
    %1857 = vmatprep.mubr.f32.mxu0 0.0
    %1858 = vmatmul.mubr.f32.gmra.mrb[0].mxu0 %v1791
    %v1859 = vpop.f32.mrb[0].mxu0
    %v1860 = vadd.f32 0.0, %v1859
    %v1861 = vpop.f32.mrb[0].mxu0
    %1862 = vdwg.mxu0
    %v1864 = vrot.slane %v1860, 1
    %v1866 = vadd.f32 %v394, %v1864
    %v1868 = vrot.slane %v1787, 7
    %v1871 = vrot.slane %v1866, 6
    %v1873 = vsel %vm162, %v1868, %v1871
    %v1874 = vxor.u32 %v1873, 2147483648
    %v1875 = vmul.f32 %v1874, 1.442695
    %v1876 = vpow.pop %v1875
    %v1877 = vadd.f32 %v1876, 1.0
    %v1878 = vrcp.pop %v1877
    %v1879 = vmul.f32 1.0, %v1878
    %v1880 = vtanh.pop %v1873
    %v1881 = vmul.f32 %v1879, %v1702
    %1883 = vrot.lane.b32.xlu0 %v1880, 64
    %v1884 = vpop.permute.xlu0 %1883
    %v1886 = vmul.f32 %v1879, %v1884
    %1888 = vrot.lane.b32.xlu0 %v1886, 32
    %v1889 = vpop.permute.xlu0 %1888
    %v1891 = vadd.f32 %v1881, %v1889
    %v1892 = vtanh.pop %v1891
    %1894 = vrot.lane.b32.xlu0 %v1892, 64
    %v1895 = vpop.permute.xlu0 %1894
    %v1897 = vmul.f32 %v1879, %v1895
    %v1898 = vrot.slane %v763, 7
    %v1900 = vrot.slane %v952, 6
    %v1902 = vrot.slane %v1141, 5
    %v1904 = vrot.slane %v1330, 4
    %v1906 = vrot.slane %v1519, 3
    %v1908 = vrot.slane %v1708, 2
    %v1911 = vrot.slane %v1897, 1
    %v1913 = vsel %vm162, %v577, %v1898
    %v1914 = vsel %vm164, %v1913, %v1900
    %v1915 = vsel %vm166, %v1914, %v1902
    %v1916 = vsel %vm168, %v1915, %v1904
    %v1917 = vsel %vm170, %v1916, %v1906
    %v1918 = vsel %vm172, %v1917, %v1908
    %v1919 = vsel %vm174, %v1918, %v1911
    %v1921 = vrot.slane %v952, 7
    %v1923 = vrot.slane %v1141, 6
    %v1925 = vrot.slane %v1330, 5
    %v1927 = vrot.slane %v1519, 4
    %v1929 = vrot.slane %v1708, 3
    %v1931 = vrot.slane %v1897, 2
    %v1933 = vsel %vm162, %v657, %v763
    %v1934 = vsel %vm164, %v1933, %v1921
    %v1935 = vsel %vm166, %v1934, %v1923
    %v1936 = vsel %vm168, %v1935, %v1925
    %v1937 = vsel %vm170, %v1936, %v1927
    %v1938 = vsel %vm172, %v1937, %v1929
    %v1939 = vsel %vm174, %v1938, %v1931
    %v1940 = vld [vmem:[%s11] sm:$0xff]
    %v1941 = vld [vmem:[%s11 + $0x8] sm:$0xff]
    %v1942 = vld [vmem:[%s11 + $0x10] sm:$0xff]
    %v1943 = vld [vmem:[%s11 + $0x18] sm:$0xff]
    %v1944 = vld [vmem:[%s13] sm:$0x1]
    %v1946 = vlaneseq
    %v1947 = vshrl.u32 %v1946, 7
    %v1948 = vsub.s32 0, %v1947
    %v1949 = vrot.slane %v1944, %v1948
    %1952 = vrot.lane.b32.xlu0 %v1919, 32
    %v1953 = vpop.permute.xlu0 %1952
    %v1954 = vsel %vm239, %v1953, 0
    %1956 = vmatprep.subr.mxu0 0.0
    %1957 = vmatpush1.msra.mxu0 %v1940
    %1958 = vmatprep.subr.mxu0 0.0
    %1959 = vmatpush1.msra.mxu0 %v1941
    %1960 = vmatprep.subr.mxu0 0.0
    %1961 = vmatpush1.msra.mxu0 %v1942
    %1962 = vmatprep.subr.mxu0 0.0
    %1963 = vmatpush1.msra.mxu0 %v1943
    %1964 = vmatprep.subr.mxu0 0.0
    %1965 = vmatpush1.msra.mxu0 0.0
    %1966 = vmatprep.subr.mxu0 0.0
    %1967 = vmatpush1.msra.mxu0 0.0
    %1968 = vmatprep.subr.mxu0 0.0
    %1969 = vmatpush1.msra.mxu0 0.0
    %1970 = vmatprep.subr.mxu0 0.0
    %1971 = vmatpush1.msra.mxu0 0.0
    %1972 = vmatprep.subr.mxu0 0.0
    %1973 = vmatpush1.msra.mxu0 0.0
    %1974 = vmatprep.subr.mxu0 0.0
    %1975 = vmatpush1.msra.mxu0 0.0
    %1976 = vmatprep.subr.mxu0 0.0
    %1977 = vmatpush1.msra.mxu0 0.0
    %1978 = vmatprep.subr.mxu0 0.0
    %1979 = vmatpush1.msra.mxu0 0.0
    %1980 = vmatprep.subr.mxu0 0.0
    %1981 = vmatpush1.msra.mxu0 0.0
    %1982 = vmatprep.subr.mxu0 0.0
    %1983 = vmatpush1.msra.mxu0 0.0
    %1984 = vmatprep.subr.mxu0 0.0
    %1985 = vmatpush1.msra.mxu0 0.0
    %1986 = vmatprep.subr.mxu0 0.0
    %1987 = vmatpush1.msra.mxu0 0.0
    %1988 = vmatprep.subr.mxu0 0.0
    %1989 = vmatpush1.msra.mxu0 0.0
    %1990 = vmatprep.subr.mxu0 0.0
    %1991 = vmatpush1.msra.mxu0 0.0
    %1992 = vmatprep.subr.mxu0 0.0
    %1993 = vmatpush1.msra.mxu0 0.0
    %1994 = vmatprep.subr.mxu0 0.0
    %1995 = vmatpush1.msra.mxu0 0.0
    %1996 = vmatprep.subr.mxu0 0.0
    %1997 = vmatpush1.msra.mxu0 0.0
    %1998 = vmatprep.subr.mxu0 0.0
    %1999 = vmatpush1.msra.mxu0 0.0
    %2000 = vmatprep.subr.mxu0 0.0
    %2001 = vmatpush1.msra.mxu0 0.0
    %2002 = vmatprep.subr.mxu0 0.0
    %2003 = vmatpush1.msra.mxu0 0.0
    %2004 = vmatprep.subr.mxu0 0.0
    %2005 = vmatpush1.msra.mxu0 0.0
    %2006 = vmatprep.subr.mxu0 0.0
    %2007 = vmatpush1.msra.mxu0 0.0
    %2008 = vmatprep.subr.mxu0 0.0
    %2009 = vmatpush1.msra.mxu0 0.0
    %2010 = vmatprep.subr.mxu0 0.0
    %2011 = vmatpush1.msra.mxu0 0.0
    %2012 = vmatprep.subr.mxu0 0.0
    %2013 = vmatpush1.msra.mxu0 0.0
    %2014 = vmatprep.subr.mxu0 0.0
    %2015 = vmatpush1.msra.mxu0 0.0
    %2016 = vmatprep.subr.mxu0 0.0
    %2017 = vmatpush1.msra.mxu0 0.0
    %2018 = vmatprep.subr.mxu0 0.0
    %2019 = vmatpush1.msra.mxu0 0.0
    %2020 = vmatprep.mubr.f32.mxu0 0.0
    %2021 = vmatmul.mubr.f32.gmra.mrb[0].mxu0 %v1954
    %v2022 = vpop.f32.mrb[0].mxu0
    %v2023 = vadd.f32 %v1949, %v2022
    %v2024 = vpop.f32.mrb[0].mxu0
    %2025 = vdwg.mxu0
    %v2026 = vld [vmem:[%s14] sm:$0xff]
    %v2027 = vld [vmem:[%s14 + $0x8] sm:$0xff]
    %v2028 = vld [vmem:[%s14 + $0x10] sm:$0xff]
    %v2029 = vld [vmem:[%s14 + $0x18] sm:$0xff]
    %v2030 = vld [vmem:[%s16] sm:$0x1]
    %v2032 = vlaneseq
    %v2033 = vshrl.u32 %v2032, 7
    %v2034 = vsub.s32 0, %v2033
    %v2035 = vrot.slane %v2030, %v2034
    %2038 = vrot.lane.b32.xlu0 %v1939, 32
    %v2039 = vpop.permute.xlu0 %2038
    %v2040 = vsel %vm239, %v2039, 0
    %2042 = vmatprep.subr.mxu0 0.0
    %2043 = vmatpush1.msra.mxu0 %v2026
    %2044 = vmatprep.subr.mxu0 0.0
    %2045 = vmatpush1.msra.mxu0 %v2027
    %2046 = vmatprep.subr.mxu0 0.0
    %2047 = vmatpush1.msra.mxu0 %v2028
    %2048 = vmatprep.subr.mxu0 0.0
    %2049 = vmatpush1.msra.mxu0 %v2029
    %2050 = vmatprep.subr.mxu0 0.0
    %2051 = vmatpush1.msra.mxu0 0.0
    %2052 = vmatprep.subr.mxu0 0.0
    %2053 = vmatpush1.msra.mxu0 0.0
    %2054 = vmatprep.subr.mxu0 0.0
    %2055 = vmatpush1.msra.mxu0 0.0
    %2056 = vmatprep.subr.mxu0 0.0
    %2057 = vmatpush1.msra.mxu0 0.0
    %2058 = vmatprep.subr.mxu0 0.0
    %2059 = vmatpush1.msra.mxu0 0.0
    %2060 = vmatprep.subr.mxu0 0.0
    %2061 = vmatpush1.msra.mxu0 0.0
    %2062 = vmatprep.subr.mxu0 0.0
    %2063 = vmatpush1.msra.mxu0 0.0
    %2064 = vmatprep.subr.mxu0 0.0
    %2065 = vmatpush1.msra.mxu0 0.0
    %2066 = vmatprep.subr.mxu0 0.0
    %2067 = vmatpush1.msra.mxu0 0.0
    %2068 = vmatprep.subr.mxu0 0.0
    %2069 = vmatpush1.msra.mxu0 0.0
    %2070 = vmatprep.subr.mxu0 0.0
    %2071 = vmatpush1.msra.mxu0 0.0
    %2072 = vmatprep.subr.mxu0 0.0
    %2073 = vmatpush1.msra.mxu0 0.0
    %2074 = vmatprep.subr.mxu0 0.0
    %2075 = vmatpush1.msra.mxu0 0.0
    %2076 = vmatprep.subr.mxu0 0.0
    %2077 = vmatpush1.msra.mxu0 0.0
    %2078 = vmatprep.subr.mxu0 0.0
    %2079 = vmatpush1.msra.mxu0 0.0
    %2080 = vmatprep.subr.mxu0 0.0
    %2081 = vmatpush1.msra.mxu0 0.0
    %2082 = vmatprep.subr.mxu0 0.0
    %2083 = vmatpush1.msra.mxu0 0.0
    %2084 = vmatprep.subr.mxu0 0.0
    %2085 = vmatpush1.msra.mxu0 0.0
    %2086 = vmatprep.subr.mxu0 0.0
    %2087 = vmatpush1.msra.mxu0 0.0
    %2088 = vmatprep.subr.mxu0 0.0
    %2089 = vmatpush1.msra.mxu0 0.0
    %2090 = vmatprep.subr.mxu0 0.0
    %2091 = vmatpush1.msra.mxu0 0.0
    %2092 = vmatprep.subr.mxu0 0.0
    %2093 = vmatpush1.msra.mxu0 0.0
    %2094 = vmatprep.subr.mxu0 0.0
    %2095 = vmatpush1.msra.mxu0 0.0
    %2096 = vmatprep.subr.mxu0 0.0
    %2097 = vmatpush1.msra.mxu0 0.0
    %2098 = vmatprep.subr.mxu0 0.0
    %2099 = vmatpush1.msra.mxu0 0.0
    %2100 = vmatprep.subr.mxu0 0.0
    %2101 = vmatpush1.msra.mxu0 0.0
    %2102 = vmatprep.subr.mxu0 0.0
    %2103 = vmatpush1.msra.mxu0 0.0
    %2104 = vmatprep.subr.mxu0 0.0
    %2105 = vmatpush1.msra.mxu0 0.0
    %2106 = vmatprep.mubr.f32.mxu0 0.0
    %2107 = vmatmul.mubr.f32.gmra.mrb[0].mxu0 %v2040
    %v2108 = vpop.f32.mrb[0].mxu0
    %v2109 = vadd.f32 %v2035, %v2108
    %v2110 = vpop.f32.mrb[0].mxu0
    %2111 = vdwg.mxu0
    %v2112 = vld [vmem:[%s12] sm:$0xff]
    %v2113 = vld [vmem:[%s12 + $0x8] sm:$0xff]
    %v2114 = vld [vmem:[%s12 + $0x10] sm:$0xff]
    %v2115 = vld [vmem:[%s12 + $0x18] sm:$0xff]
    %v2116 = vld [vmem:[%s15] sm:$0xff]
    %v2117 = vld [vmem:[%s15 + $0x8] sm:$0xff]
    %v2118 = vld [vmem:[%s15 + $0x10] sm:$0xff]
    %v2119 = vld [vmem:[%s15 + $0x18] sm:$0xff]
    %2120 = vmatprep.subr.mxu0 0.0
    %2121 = vmatpush1.msra.mxu0 %v2112
    %2122 = vmatprep.subr.mxu0 0.0
    %2123 = vmatpush1.msra.mxu0 %v2113
    %2124 = vmatprep.subr.mxu0 0.0
    %2125 = vmatpush1.msra.mxu0 %v2114
    %2126 = vmatprep.subr.mxu0 0.0
    %2127 = vmatpush1.msra.mxu0 %v2115
    %2128 = vmatprep.subr.mxu0 0.0
    %2129 = vmatpush1.msra.mxu0 0.0
    %2130 = vmatprep.subr.mxu0 0.0
    %2131 = vmatpush1.msra.mxu0 0.0
    %2132 = vmatprep.subr.mxu0 0.0
    %2133 = vmatpush1.msra.mxu0 0.0
    %2134 = vmatprep.subr.mxu0 0.0
    %2135 = vmatpush1.msra.mxu0 0.0
    %2136 = vmatprep.subr.mxu0 0.0
    %2137 = vmatpush1.msra.mxu0 0.0
    %2138 = vmatprep.subr.mxu0 0.0
    %2139 = vmatpush1.msra.mxu0 0.0
    %2140 = vmatprep.subr.mxu0 0.0
    %2141 = vmatpush1.msra.mxu0 0.0
    %2142 = vmatprep.subr.mxu0 0.0
    %2143 = vmatpush1.msra.mxu0 0.0
    %2144 = vmatprep.subr.mxu0 0.0
    %2145 = vmatpush1.msra.mxu0 0.0
    %2146 = vmatprep.subr.mxu0 0.0
    %2147 = vmatpush1.msra.mxu0 0.0
    %2148 = vmatprep.subr.mxu0 0.0
    %2149 = vmatpush1.msra.mxu0 0.0
    %2150 = vmatprep.subr.mxu0 0.0
    %2151 = vmatpush1.msra.mxu0 0.0
    %2152 = vmatprep.subr.mxu0 0.0
    %2153 = vmatpush1.msra.mxu0 0.0
    %2154 = vmatprep.subr.mxu0 0.0
    %2155 = vmatpush1.msra.mxu0 0.0
    %2156 = vmatprep.subr.mxu0 0.0
    %2157 = vmatpush1.msra.mxu0 0.0
    %2158 = vmatprep.subr.mxu0 0.0
    %2159 = vmatpush1.msra.mxu0 0.0
    %2160 = vmatprep.subr.mxu0 0.0
    %2161 = vmatpush1.msra.mxu0 0.0
    %2162 = vmatprep.subr.mxu0 0.0
    %2163 = vmatpush1.msra.mxu0 0.0
    %2164 = vmatprep.subr.mxu0 0.0
    %2165 = vmatpush1.msra.mxu0 0.0
    %2166 = vmatprep.subr.mxu0 0.0
    %2167 = vmatpush1.msra.mxu0 0.0
    %2168 = vmatprep.subr.mxu0 0.0
    %2169 = vmatpush1.msra.mxu0 0.0
    %2170 = vmatprep.subr.mxu0 0.0
    %2171 = vmatpush1.msra.mxu0 0.0
    %2172 = vmatprep.subr.mxu0 0.0
    %2173 = vmatpush1.msra.mxu0 0.0
    %2174 = vmatprep.subr.mxu0 0.0
    %2175 = vmatpush1.msra.mxu0 0.0
    %2176 = vmatprep.subr.mxu0 0.0
    %2177 = vmatpush1.msra.mxu0 0.0
    %2178 = vmatprep.subr.mxu0 0.0
    %2179 = vmatpush1.msra.mxu0 0.0
    %2180 = vmatprep.subr.mxu0 0.0
    %2181 = vmatpush1.msra.mxu0 0.0
    %2182 = vmatprep.subr.mxu0 0.0
    %2183 = vmatpush1.msra.mxu0 0.0
    %2184 = vmatprep.mubr.f32.mxu0 0.0
    %2185 = vmatmul.mubr.f32.gmra.mrb[0].mxu0 %v406
    %v2186 = vpop.f32.mrb[0].mxu0
    %v2187 = vadd.f32 0.0, %v2186
    %v2188 = vpop.f32.mrb[0].mxu0
    %2189 = vdwg.mxu0
    %v2190 = vadd.f32 %v2023, %v2187
    %2191 = vmatprep.subr.mxu0 0.0
    %2192 = vmatpush1.msra.mxu0 %v2116
    %2193 = vmatprep.subr.mxu0 0.0
    %2194 = vmatpush1.msra.mxu0 %v2117
    %2195 = vmatprep.subr.mxu0 0.0
    %2196 = vmatpush1.msra.mxu0 %v2118
    %2197 = vmatprep.subr.mxu0 0.0
    %2198 = vmatpush1.msra.mxu0 %v2119
    %2199 = vmatprep.subr.mxu0 0.0
    %2200 = vmatpush1.msra.mxu0 0.0
    %2201 = vmatprep.subr.mxu0 0.0
    %2202 = vmatpush1.msra.mxu0 0.0
    %2203 = vmatprep.subr.mxu0 0.0
    %2204 = vmatpush1.msra.mxu0 0.0
    %2205 = vmatprep.subr.mxu0 0.0
    %2206 = vmatpush1.msra.mxu0 0.0
    %2207 = vmatprep.subr.mxu0 0.0
    %2208 = vmatpush1.msra.mxu0 0.0
    %2209 = vmatprep.subr.mxu0 0.0
    %2210 = vmatpush1.msra.mxu0 0.0
    %2211 = vmatprep.subr.mxu0 0.0
    %2212 = vmatpush1.msra.mxu0 0.0
    %2213 = vmatprep.subr.mxu0 0.0
    %2214 = vmatpush1.msra.mxu0 0.0
    %2215 = vmatprep.subr.mxu0 0.0
    %2216 = vmatpush1.msra.mxu0 0.0
    %2217 = vmatprep.subr.mxu0 0.0
    %2218 = vmatpush1.msra.mxu0 0.0
    %2219 = vmatprep.subr.mxu0 0.0
    %2220 = vmatpush1.msra.mxu0 0.0
    %2221 = vmatprep.subr.mxu0 0.0
    %2222 = vmatpush1.msra.mxu0 0.0
    %2223 = vmatprep.subr.mxu0 0.0
    %2224 = vmatpush1.msra.mxu0 0.0
    %2225 = vmatprep.subr.mxu0 0.0
    %2226 = vmatpush1.msra.mxu0 0.0
    %2227 = vmatprep.subr.mxu0 0.0
    %2228 = vmatpush1.msra.mxu0 0.0
    %2229 = vmatprep.subr.mxu0 0.0
    %2230 = vmatpush1.msra.mxu0 0.0
    %2231 = vmatprep.subr.mxu0 0.0
    %2232 = vmatpush1.msra.mxu0 0.0
    %2233 = vmatprep.subr.mxu0 0.0
    %2234 = vmatpush1.msra.mxu0 0.0
    %2235 = vmatprep.subr.mxu0 0.0
    %2236 = vmatpush1.msra.mxu0 0.0
    %2237 = vmatprep.subr.mxu0 0.0
    %2238 = vmatpush1.msra.mxu0 0.0
    %2239 = vmatprep.subr.mxu0 0.0
    %2240 = vmatpush1.msra.mxu0 0.0
    %2241 = vmatprep.subr.mxu0 0.0
    %2242 = vmatpush1.msra.mxu0 0.0
    %2243 = vmatprep.subr.mxu0 0.0
    %2244 = vmatpush1.msra.mxu0 0.0
    %2245 = vmatprep.subr.mxu0 0.0
    %2246 = vmatpush1.msra.mxu0 0.0
    %2247 = vmatprep.subr.mxu0 0.0
    %2248 = vmatpush1.msra.mxu0 0.0
    %2249 = vmatprep.subr.mxu0 0.0
    %2250 = vmatpush1.msra.mxu0 0.0
    %2251 = vmatprep.subr.mxu0 0.0
    %2252 = vmatpush1.msra.mxu0 0.0
    %2253 = vmatprep.subr.mxu0 0.0
    %2254 = vmatpush1.msra.mxu0 0.0
    %2255 = vmatprep.mubr.f32.mxu0 0.0
    %2256 = vmatmul.mubr.f32.gmra.mrb[0].mxu0 %v406
    %v2257 = vpop.f32.mrb[0].mxu0
    %v2258 = vadd.f32 0.0, %v2257
    %v2259 = vpop.f32.mrb[0].mxu0
    %2260 = vdwg.mxu0
    %v2261 = vadd.f32 %v2109, %v2258
    %v2263 = vrot.slane %v2261, 7
    %v2265 = vsel %vm162, %v2190, %v2263
    %v2266 = vxor.u32 %v2265, 2147483648
    %v2267 = vmul.f32 %v2266, 1.442695
    %v2268 = vpow.pop %v2267
    %v2269 = vadd.f32 %v2268, 1.0
    %v2270 = vrcp.pop %v2269
    %v2271 = vmul.f32 1.0, %v2270
    %v2272 = vtanh.pop %v2265
    %v2273 = vmul.f32 %v2271, 0.0
    %2275 = vrot.lane.b32.xlu0 %v2272, 64
    %v2276 = vpop.permute.xlu0 %2275
    %v2278 = vmul.f32 %v2271, %v2276
    %2280 = vrot.lane.b32.xlu0 %v2278, 32
    %v2281 = vpop.permute.xlu0 %2280
    %v2283 = vadd.f32 %v2273, %v2281
    %v2284 = vtanh.pop %v2283
    %2286 = vrot.lane.b32.xlu0 %v2284, 64
    %v2287 = vpop.permute.xlu0 %2286
    %v2289 = vmul.f32 %v2271, %v2287
    %2291 = vrot.lane.b32.xlu0 %v2289, 32
    %v2292 = vpop.permute.xlu0 %2291
    %v2293 = vsel %vm239, %v2292, 0
    %2295 = vmatprep.subr.mxu0 0.0
    %2296 = vmatpush1.msra.mxu0 %v2112
    %2297 = vmatprep.subr.mxu0 0.0
    %2298 = vmatpush1.msra.mxu0 %v2113
    %2299 = vmatprep.subr.mxu0 0.0
    %2300 = vmatpush1.msra.mxu0 %v2114
    %2301 = vmatprep.subr.mxu0 0.0
    %2302 = vmatpush1.msra.mxu0 %v2115
    %2303 = vmatprep.subr.mxu0 0.0
    %2304 = vmatpush1.msra.mxu0 0.0
    %2305 = vmatprep.subr.mxu0 0.0
    %2306 = vmatpush1.msra.mxu0 0.0
    %2307 = vmatprep.subr.mxu0 0.0
    %2308 = vmatpush1.msra.mxu0 0.0
    %2309 = vmatprep.subr.mxu0 0.0
    %2310 = vmatpush1.msra.mxu0 0.0
    %2311 = vmatprep.subr.mxu0 0.0
    %2312 = vmatpush1.msra.mxu0 0.0
    %2313 = vmatprep.subr.mxu0 0.0
    %2314 = vmatpush1.msra.mxu0 0.0
    %2315 = vmatprep.subr.mxu0 0.0
    %2316 = vmatpush1.msra.mxu0 0.0
    %2317 = vmatprep.subr.mxu0 0.0
    %2318 = vmatpush1.msra.mxu0 0.0
    %2319 = vmatprep.subr.mxu0 0.0
    %2320 = vmatpush1.msra.mxu0 0.0
    %2321 = vmatprep.subr.mxu0 0.0
    %2322 = vmatpush1.msra.mxu0 0.0
    %2323 = vmatprep.subr.mxu0 0.0
    %2324 = vmatpush1.msra.mxu0 0.0
    %2325 = vmatprep.subr.mxu0 0.0
    %2326 = vmatpush1.msra.mxu0 0.0
    %2327 = vmatprep.subr.mxu0 0.0
    %2328 = vmatpush1.msra.mxu0 0.0
    %2329 = vmatprep.subr.mxu0 0.0
    %2330 = vmatpush1.msra.mxu0 0.0
    %2331 = vmatprep.subr.mxu0 0.0
    %2332 = vmatpush1.msra.mxu0 0.0
    %2333 = vmatprep.subr.mxu0 0.0
    %2334 = vmatpush1.msra.mxu0 0.0
    %2335 = vmatprep.subr.mxu0 0.0
    %2336 = vmatpush1.msra.mxu0 0.0
    %2337 = vmatprep.subr.mxu0 0.0
    %2338 = vmatpush1.msra.mxu0 0.0
    %2339 = vmatprep.subr.mxu0 0.0
    %2340 = vmatpush1.msra.mxu0 0.0
    %2341 = vmatprep.subr.mxu0 0.0
    %2342 = vmatpush1.msra.mxu0 0.0
    %2343 = vmatprep.subr.mxu0 0.0
    %2344 = vmatpush1.msra.mxu0 0.0
    %2345 = vmatprep.subr.mxu0 0.0
    %2346 = vmatpush1.msra.mxu0 0.0
    %2347 = vmatprep.subr.mxu0 0.0
    %2348 = vmatpush1.msra.mxu0 0.0
    %2349 = vmatprep.subr.mxu0 0.0
    %2350 = vmatpush1.msra.mxu0 0.0
    %2351 = vmatprep.subr.mxu0 0.0
    %2352 = vmatpush1.msra.mxu0 0.0
    %2353 = vmatprep.subr.mxu0 0.0
    %2354 = vmatpush1.msra.mxu0 0.0
    %2355 = vmatprep.subr.mxu0 0.0
    %2356 = vmatpush1.msra.mxu0 0.0
    %2357 = vmatprep.subr.mxu0 0.0
    %2358 = vmatpush1.msra.mxu0 0.0
    %2359 = vmatprep.mubr.f32.mxu0 0.0
    %2360 = vmatmul.mubr.f32.gmra.mrb[0].mxu0 %v2293
    %v2361 = vpop.f32.mrb[0].mxu0
    %v2362 = vadd.f32 0.0, %v2361
    %v2363 = vpop.f32.mrb[0].mxu0
    %2364 = vdwg.mxu0
    %v2366 = vrot.slane %v2362, 7
    %v2368 = vadd.f32 %v2023, %v2366
    %v2369 = vrot.slane %v2289, 1
    %2370 = vrot.lane.b32.xlu0 %v2369, 32
    %v2371 = vpop.permute.xlu0 %2370
    %v2372 = vsel %vm239, %v2371, 0
    %2374 = vmatprep.subr.mxu0 0.0
    %2375 = vmatpush1.msra.mxu0 %v2116
    %2376 = vmatprep.subr.mxu0 0.0
    %2377 = vmatpush1.msra.mxu0 %v2117
    %2378 = vmatprep.subr.mxu0 0.0
    %2379 = vmatpush1.msra.mxu0 %v2118
    %2380 = vmatprep.subr.mxu0 0.0
    %2381 = vmatpush1.msra.mxu0 %v2119
    %2382 = vmatprep.subr.mxu0 0.0
    %2383 = vmatpush1.msra.mxu0 0.0
    %2384 = vmatprep.subr.mxu0 0.0
    %2385 = vmatpush1.msra.mxu0 0.0
    %2386 = vmatprep.subr.mxu0 0.0
    %2387 = vmatpush1.msra.mxu0 0.0
    %2388 = vmatprep.subr.mxu0 0.0
    %2389 = vmatpush1.msra.mxu0 0.0
    %2390 = vmatprep.subr.mxu0 0.0
    %2391 = vmatpush1.msra.mxu0 0.0
    %2392 = vmatprep.subr.mxu0 0.0
    %2393 = vmatpush1.msra.mxu0 0.0
    %2394 = vmatprep.subr.mxu0 0.0
    %2395 = vmatpush1.msra.mxu0 0.0
    %2396 = vmatprep.subr.mxu0 0.0
    %2397 = vmatpush1.msra.mxu0 0.0
    %2398 = vmatprep.subr.mxu0 0.0
    %2399 = vmatpush1.msra.mxu0 0.0
    %2400 = vmatprep.subr.mxu0 0.0
    %2401 = vmatpush1.msra.mxu0 0.0
    %2402 = vmatprep.subr.mxu0 0.0
    %2403 = vmatpush1.msra.mxu0 0.0
    %2404 = vmatprep.subr.mxu0 0.0
    %2405 = vmatpush1.msra.mxu0 0.0
    %2406 = vmatprep.subr.mxu0 0.0
    %2407 = vmatpush1.msra.mxu0 0.0
    %2408 = vmatprep.subr.mxu0 0.0
    %2409 = vmatpush1.msra.mxu0 0.0
    %2410 = vmatprep.subr.mxu0 0.0
    %2411 = vmatpush1.msra.mxu0 0.0
    %2412 = vmatprep.subr.mxu0 0.0
    %2413 = vmatpush1.msra.mxu0 0.0
    %2414 = vmatprep.subr.mxu0 0.0
    %2415 = vmatpush1.msra.mxu0 0.0
    %2416 = vmatprep.subr.mxu0 0.0
    %2417 = vmatpush1.msra.mxu0 0.0
    %2418 = vmatprep.subr.mxu0 0.0
    %2419 = vmatpush1.msra.mxu0 0.0
    %2420 = vmatprep.subr.mxu0 0.0
    %2421 = vmatpush1.msra.mxu0 0.0
    %2422 = vmatprep.subr.mxu0 0.0
    %2423 = vmatpush1.msra.mxu0 0.0
    %2424 = vmatprep.subr.mxu0 0.0
    %2425 = vmatpush1.msra.mxu0 0.0
    %2426 = vmatprep.subr.mxu0 0.0
    %2427 = vmatpush1.msra.mxu0 0.0
    %2428 = vmatprep.subr.mxu0 0.0
    %2429 = vmatpush1.msra.mxu0 0.0
    %2430 = vmatprep.subr.mxu0 0.0
    %2431 = vmatpush1.msra.mxu0 0.0
    %2432 = vmatprep.subr.mxu0 0.0
    %2433 = vmatpush1.msra.mxu0 0.0
    %2434 = vmatprep.subr.mxu0 0.0
    %2435 = vmatpush1.msra.mxu0 0.0
    %2436 = vmatprep.subr.mxu0 0.0
    %2437 = vmatpush1.msra.mxu0 0.0
    %2438 = vmatprep.mubr.f32.mxu0 0.0
    %2439 = vmatmul.mubr.f32.gmra.mrb[0].mxu0 %v2372
    %v2440 = vpop.f32.mrb[0].mxu0
    %v2441 = vadd.f32 0.0, %v2440
    %v2442 = vpop.f32.mrb[0].mxu0
    %2443 = vdwg.mxu0
    %v2445 = vrot.slane %v2441, 7
    %v2447 = vadd.f32 %v2109, %v2445
    %v2449 = vrot.slane %v2368, 1
    %v2451 = vsel %vm162, %v2449, %v2447
    %v2452 = vxor.u32 %v2451, 2147483648
    %v2453 = vmul.f32 %v2452, 1.442695
    %v2454 = vpow.pop %v2453
    %v2455 = vadd.f32 %v2454, 1.0
    %v2456 = vrcp.pop %v2455
    %v2457 = vmul.f32 1.0, %v2456
    %v2458 = vtanh.pop %v2451
    %v2459 = vmul.f32 %v2457, %v2283
    %2461 = vrot.lane.b32.xlu0 %v2458, 64
    %v2462 = vpop.permute.xlu0 %2461
    %v2464 = vmul.f32 %v2457, %v2462
    %2466 = vrot.lane.b32.xlu0 %v2464, 32
    %v2467 = vpop.permute.xlu0 %2466
    %v2469 = vadd.f32 %v2459, %v2467
    %v2470 = vtanh.pop %v2469
    %2472 = vrot.lane.b32.xlu0 %v2470, 64
    %v2473 = vpop.permute.xlu0 %2472
    %v2475 = vmul.f32 %v2457, %v2473
    %2477 = vrot.lane.b32.xlu0 %v2475, 32
    %v2478 = vpop.permute.xlu0 %2477
    %v2479 = vsel %vm239, %v2478, 0
    %2481 = vmatprep.subr.mxu0 0.0
    %2482 = vmatpush1.msra.mxu0 %v2112
    %2483 = vmatprep.subr.mxu0 0.0
    %2484 = vmatpush1.msra.mxu0 %v2113
    %2485 = vmatprep.subr.mxu0 0.0
    %2486 = vmatpush1.msra.mxu0 %v2114
    %2487 = vmatprep.subr.mxu0 0.0
    %2488 = vmatpush1.msra.mxu0 %v2115
    %2489 = vmatprep.subr.mxu0 0.0
    %2490 = vmatpush1.msra.mxu0 0.0
    %2491 = vmatprep.subr.mxu0 0.0
    %2492 = vmatpush1.msra.mxu0 0.0
    %2493 = vmatprep.subr.mxu0 0.0
    %2494 = vmatpush1.msra.mxu0 0.0
    %2495 = vmatprep.subr.mxu0 0.0
    %2496 = vmatpush1.msra.mxu0 0.0
    %2497 = vmatprep.subr.mxu0 0.0
    %2498 = vmatpush1.msra.mxu0 0.0
    %2499 = vmatprep.subr.mxu0 0.0
    %2500 = vmatpush1.msra.mxu0 0.0
    %2501 = vmatprep.subr.mxu0 0.0
    %2502 = vmatpush1.msra.mxu0 0.0
    %2503 = vmatprep.subr.mxu0 0.0
    %2504 = vmatpush1.msra.mxu0 0.0
    %2505 = vmatprep.subr.mxu0 0.0
    %2506 = vmatpush1.msra.mxu0 0.0
    %2507 = vmatprep.subr.mxu0 0.0
    %2508 = vmatpush1.msra.mxu0 0.0
    %2509 = vmatprep.subr.mxu0 0.0
    %2510 = vmatpush1.msra.mxu0 0.0
    %2511 = vmatprep.subr.mxu0 0.0
    %2512 = vmatpush1.msra.mxu0 0.0
    %2513 = vmatprep.subr.mxu0 0.0
    %2514 = vmatpush1.msra.mxu0 0.0
    %2515 = vmatprep.subr.mxu0 0.0
    %2516 = vmatpush1.msra.mxu0 0.0
    %2517 = vmatprep.subr.mxu0 0.0
    %2518 = vmatpush1.msra.mxu0 0.0
    %2519 = vmatprep.subr.mxu0 0.0
    %2520 = vmatpush1.msra.mxu0 0.0
    %2521 = vmatprep.subr.mxu0 0.0
    %2522 = vmatpush1.msra.mxu0 0.0
    %2523 = vmatprep.subr.mxu0 0.0
    %2524 = vmatpush1.msra.mxu0 0.0
    %2525 = vmatprep.subr.mxu0 0.0
    %2526 = vmatpush1.msra.mxu0 0.0
    %2527 = vmatprep.subr.mxu0 0.0
    %2528 = vmatpush1.msra.mxu0 0.0
    %2529 = vmatprep.subr.mxu0 0.0
    %2530 = vmatpush1.msra.mxu0 0.0
    %2531 = vmatprep.subr.mxu0 0.0
    %2532 = vmatpush1.msra.mxu0 0.0
    %2533 = vmatprep.subr.mxu0 0.0
    %2534 = vmatpush1.msra.mxu0 0.0
    %2535 = vmatprep.subr.mxu0 0.0
    %2536 = vmatpush1.msra.mxu0 0.0
    %2537 = vmatprep.subr.mxu0 0.0
    %2538 = vmatpush1.msra.mxu0 0.0
    %2539 = vmatprep.subr.mxu0 0.0
    %2540 = vmatpush1.msra.mxu0 0.0
    %2541 = vmatprep.subr.mxu0 0.0
    %2542 = vmatpush1.msra.mxu0 0.0
    %2543 = vmatprep.subr.mxu0 0.0
    %2544 = vmatpush1.msra.mxu0 0.0
    %2545 = vmatprep.mubr.f32.mxu0 0.0
    %2546 = vmatmul.mubr.f32.gmra.mrb[0].mxu0 %v2479
    %v2547 = vpop.f32.mrb[0].mxu0
    %v2548 = vadd.f32 0.0, %v2547
    %v2549 = vpop.f32.mrb[0].mxu0
    %2550 = vdwg.mxu0
    %v2552 = vrot.slane %v2548, 6
    %v2554 = vadd.f32 %v2023, %v2552
    %v2555 = vrot.slane %v2475, 1
    %2556 = vrot.lane.b32.xlu0 %v2555, 32
    %v2557 = vpop.permute.xlu0 %2556
    %v2558 = vsel %vm239, %v2557, 0
    %2560 = vmatprep.subr.mxu0 0.0
    %2561 = vmatpush1.msra.mxu0 %v2116
    %2562 = vmatprep.subr.mxu0 0.0
    %2563 = vmatpush1.msra.mxu0 %v2117
    %2564 = vmatprep.subr.mxu0 0.0
    %2565 = vmatpush1.msra.mxu0 %v2118
    %2566 = vmatprep.subr.mxu0 0.0
    %2567 = vmatpush1.msra.mxu0 %v2119
    %2568 = vmatprep.subr.mxu0 0.0
    %2569 = vmatpush1.msra.mxu0 0.0
    %2570 = vmatprep.subr.mxu0 0.0
    %2571 = vmatpush1.msra.mxu0 0.0
    %2572 = vmatprep.subr.mxu0 0.0
    %2573 = vmatpush1.msra.mxu0 0.0
    %2574 = vmatprep.subr.mxu0 0.0
    %2575 = vmatpush1.msra.mxu0 0.0
    %2576 = vmatprep.subr.mxu0 0.0
    %2577 = vmatpush1.msra.mxu0 0.0
    %2578 = vmatprep.subr.mxu0 0.0
    %2579 = vmatpush1.msra.mxu0 0.0
    %2580 = vmatprep.subr.mxu0 0.0
    %2581 = vmatpush1.msra.mxu0 0.0
    %2582 = vmatprep.subr.mxu0 0.0
    %2583 = vmatpush1.msra.mxu0 0.0
    %2584 = vmatprep.subr.mxu0 0.0
    %2585 = vmatpush1.msra.mxu0 0.0
    %2586 = vmatprep.subr.mxu0 0.0
    %2587 = vmatpush1.msra.mxu0 0.0
    %2588 = vmatprep.subr.mxu0 0.0
    %2589 = vmatpush1.msra.mxu0 0.0
    %2590 = vmatprep.subr.mxu0 0.0
    %2591 = vmatpush1.msra.mxu0 0.0
    %2592 = vmatprep.subr.mxu0 0.0
    %2593 = vmatpush1.msra.mxu0 0.0
    %2594 = vmatprep.subr.mxu0 0.0
    %2595 = vmatpush1.msra.mxu0 0.0
    %2596 = vmatprep.subr.mxu0 0.0
    %2597 = vmatpush1.msra.mxu0 0.0
    %2598 = vmatprep.subr.mxu0 0.0
    %2599 = vmatpush1.msra.mxu0 0.0
    %2600 = vmatprep.subr.mxu0 0.0
    %2601 = vmatpush1.msra.mxu0 0.0
    %2602 = vmatprep.subr.mxu0 0.0
    %2603 = vmatpush1.msra.mxu0 0.0
    %2604 = vmatprep.subr.mxu0 0.0
    %2605 = vmatpush1.msra.mxu0 0.0
    %2606 = vmatprep.subr.mxu0 0.0
    %2607 = vmatpush1.msra.mxu0 0.0
    %2608 = vmatprep.subr.mxu0 0.0
    %2609 = vmatpush1.msra.mxu0 0.0
    %2610 = vmatprep.subr.mxu0 0.0
    %2611 = vmatpush1.msra.mxu0 0.0
    %2612 = vmatprep.subr.mxu0 0.0
    %2613 = vmatpush1.msra.mxu0 0.0
    %2614 = vmatprep.subr.mxu0 0.0
    %2615 = vmatpush1.msra.mxu0 0.0
    %2616 = vmatprep.subr.mxu0 0.0
    %2617 = vmatpush1.msra.mxu0 0.0
    %2618 = vmatprep.subr.mxu0 0.0
    %2619 = vmatpush1.msra.mxu0 0.0
    %2620 = vmatprep.subr.mxu0 0.0
    %2621 = vmatpush1.msra.mxu0 0.0
    %2622 = vmatprep.subr.mxu0 0.0
    %2623 = vmatpush1.msra.mxu0 0.0
    %2624 = vmatprep.mubr.f32.mxu0 0.0
    %2625 = vmatmul.mubr.f32.gmra.mrb[0].mxu0 %v2558
    %v2626 = vpop.f32.mrb[0].mxu0
    %v2627 = vadd.f32 0.0, %v2626
    %v2628 = vpop.f32.mrb[0].mxu0
    %2629 = vdwg.mxu0
    %v2631 = vrot.slane %v2627, 6
    %v2633 = vadd.f32 %v2109, %v2631
    %v2635 = vrot.slane %v2554, 2
    %v2638 = vrot.slane %v2633, 1
    %v2640 = vsel %vm162, %v2635, %v2638
    %v2641 = vxor.u32 %v2640, 2147483648
    %v2642 = vmul.f32 %v2641, 1.442695
    %v2643 = vpow.pop %v2642
    %v2644 = vadd.f32 %v2643, 1.0
    %v2645 = vrcp.pop %v2644
    %v2646 = vmul.f32 1.0, %v2645
    %v2647 = vtanh.pop %v2640
    %v2648 = vmul.f32 %v2646, %v2469
    %2650 = vrot.lane.b32.xlu0 %v2647, 64
    %v2651 = vpop.permute.xlu0 %2650
    %v2653 = vmul.f32 %v2646, %v2651
    %2655 = vrot.lane.b32.xlu0 %v2653, 32
    %v2656 = vpop.permute.xlu0 %2655
    %v2658 = vadd.f32 %v2648, %v2656
    %v2659 = vtanh.pop %v2658
    %2661 = vrot.lane.b32.xlu0 %v2659, 64
    %v2662 = vpop.permute.xlu0 %2661
    %v2664 = vmul.f32 %v2646, %v2662
    %2666 = vrot.lane.b32.xlu0 %v2664, 32
    %v2667 = vpop.permute.xlu0 %2666
    %v2668 = vsel %vm239, %v2667, 0
    %2670 = vmatprep.subr.mxu0 0.0
    %2671 = vmatpush1.msra.mxu0 %v2112
    %2672 = vmatprep.subr.mxu0 0.0
    %2673 = vmatpush1.msra.mxu0 %v2113
    %2674 = vmatprep.subr.mxu0 0.0
    %2675 = vmatpush1.msra.mxu0 %v2114
    %2676 = vmatprep.subr.mxu0 0.0
    %2677 = vmatpush1.msra.mxu0 %v2115
    %2678 = vmatprep.subr.mxu0 0.0
    %2679 = vmatpush1.msra.mxu0 0.0
    %2680 = vmatprep.subr.mxu0 0.0
    %2681 = vmatpush1.msra.mxu0 0.0
    %2682 = vmatprep.subr.mxu0 0.0
    %2683 = vmatpush1.msra.mxu0 0.0
    %2684 = vmatprep.subr.mxu0 0.0
    %2685 = vmatpush1.msra.mxu0 0.0
    %2686 = vmatprep.subr.mxu0 0.0
    %2687 = vmatpush1.msra.mxu0 0.0
    %2688 = vmatprep.subr.mxu0 0.0
    %2689 = vmatpush1.msra.mxu0 0.0
    %2690 = vmatprep.subr.mxu0 0.0
    %2691 = vmatpush1.msra.mxu0 0.0
    %2692 = vmatprep.subr.mxu0 0.0
    %2693 = vmatpush1.msra.mxu0 0.0
    %2694 = vmatprep.subr.mxu0 0.0
    %2695 = vmatpush1.msra.mxu0 0.0
    %2696 = vmatprep.subr.mxu0 0.0
    %2697 = vmatpush1.msra.mxu0 0.0
    %2698 = vmatprep.subr.mxu0 0.0
    %2699 = vmatpush1.msra.mxu0 0.0
    %2700 = vmatprep.subr.mxu0 0.0
    %2701 = vmatpush1.msra.mxu0 0.0
    %2702 = vmatprep.subr.mxu0 0.0
    %2703 = vmatpush1.msra.mxu0 0.0
    %2704 = vmatprep.subr.mxu0 0.0
    %2705 = vmatpush1.msra.mxu0 0.0
    %2706 = vmatprep.subr.mxu0 0.0
    %2707 = vmatpush1.msra.mxu0 0.0
    %2708 = vmatprep.subr.mxu0 0.0
    %2709 = vmatpush1.msra.mxu0 0.0
    %2710 = vmatprep.subr.mxu0 0.0
    %2711 = vmatpush1.msra.mxu0 0.0
    %2712 = vmatprep.subr.mxu0 0.0
    %2713 = vmatpush1.msra.mxu0 0.0
    %2714 = vmatprep.subr.mxu0 0.0
    %2715 = vmatpush1.msra.mxu0 0.0
    %2716 = vmatprep.subr.mxu0 0.0
    %2717 = vmatpush1.msra.mxu0 0.0
    %2718 = vmatprep.subr.mxu0 0.0
    %2719 = vmatpush1.msra.mxu0 0.0
    %2720 = vmatprep.subr.mxu0 0.0
    %2721 = vmatpush1.msra.mxu0 0.0
    %2722 = vmatprep.subr.mxu0 0.0
    %2723 = vmatpush1.msra.mxu0 0.0
    %2724 = vmatprep.subr.mxu0 0.0
    %2725 = vmatpush1.msra.mxu0 0.0
    %2726 = vmatprep.subr.mxu0 0.0
    %2727 = vmatpush1.msra.mxu0 0.0
    %2728 = vmatprep.subr.mxu0 0.0
    %2729 = vmatpush1.msra.mxu0 0.0
    %2730 = vmatprep.subr.mxu0 0.0
    %2731 = vmatpush1.msra.mxu0 0.0
    %2732 = vmatprep.subr.mxu0 0.0
    %2733 = vmatpush1.msra.mxu0 0.0
    %2734 = vmatprep.mubr.f32.mxu0 0.0
    %2735 = vmatmul.mubr.f32.gmra.mrb[0].mxu0 %v2668
    %v2736 = vpop.f32.mrb[0].mxu0
    %v2737 = vadd.f32 0.0, %v2736
    %v2738 = vpop.f32.mrb[0].mxu0
    %2739 = vdwg.mxu0
    %v2741 = vrot.slane %v2737, 5
    %v2743 = vadd.f32 %v2023, %v2741
    %v2744 = vrot.slane %v2664, 1
    %2745 = vrot.lane.b32.xlu0 %v2744, 32
    %v2746 = vpop.permute.xlu0 %2745
    %v2747 = vsel %vm239, %v2746, 0
    %2749 = vmatprep.subr.mxu0 0.0
    %2750 = vmatpush1.msra.mxu0 %v2116
    %2751 = vmatprep.subr.mxu0 0.0
    %2752 = vmatpush1.msra.mxu0 %v2117
    %2753 = vmatprep.subr.mxu0 0.0
    %2754 = vmatpush1.msra.mxu0 %v2118
    %2755 = vmatprep.subr.mxu0 0.0
    %2756 = vmatpush1.msra.mxu0 %v2119
    %2757 = vmatprep.subr.mxu0 0.0
    %2758 = vmatpush1.msra.mxu0 0.0
    %2759 = vmatprep.subr.mxu0 0.0
    %2760 = vmatpush1.msra.mxu0 0.0
    %2761 = vmatprep.subr.mxu0 0.0
    %2762 = vmatpush1.msra.mxu0 0.0
    %2763 = vmatprep.subr.mxu0 0.0
    %2764 = vmatpush1.msra.mxu0 0.0
    %2765 = vmatprep.subr.mxu0 0.0
    %2766 = vmatpush1.msra.mxu0 0.0
    %2767 = vmatprep.subr.mxu0 0.0
    %2768 = vmatpush1.msra.mxu0 0.0
    %2769 = vmatprep.subr.mxu0 0.0
    %2770 = vmatpush1.msra.mxu0 0.0
    %2771 = vmatprep.subr.mxu0 0.0
    %2772 = vmatpush1.msra.mxu0 0.0
    %2773 = vmatprep.subr.mxu0 0.0
    %2774 = vmatpush1.msra.mxu0 0.0
    %2775 = vmatprep.subr.mxu0 0.0
    %2776 = vmatpush1.msra.mxu0 0.0
    %2777 = vmatprep.subr.mxu0 0.0
    %2778 = vmatpush1.msra.mxu0 0.0
    %2779 = vmatprep.subr.mxu0 0.0
    %2780 = vmatpush1.msra.mxu0 0.0
    %2781 = vmatprep.subr.mxu0 0.0
    %2782 = vmatpush1.msra.mxu0 0.0
    %2783 = vmatprep.subr.mxu0 0.0
    %2784 = vmatpush1.msra.mxu0 0.0
    %2785 = vmatprep.subr.mxu0 0.0
    %2786 = vmatpush1.msra.mxu0 0.0
    %2787 = vmatprep.subr.mxu0 0.0
    %2788 = vmatpush1.msra.mxu0 0.0
    %2789 = vmatprep.subr.mxu0 0.0
    %2790 = vmatpush1.msra.mxu0 0.0
    %2791 = vmatprep.subr.mxu0 0.0
    %2792 = vmatpush1.msra.mxu0 0.0
    %2793 = vmatprep.subr.mxu0 0.0
    %2794 = vmatpush1.msra.mxu0 0.0
    %2795 = vmatprep.subr.mxu0 0.0
    %2796 = vmatpush1.msra.mxu0 0.0
    %2797 = vmatprep.subr.mxu0 0.0
    %2798 = vmatpush1.msra.mxu0 0.0
    %2799 = vmatprep.subr.mxu0 0.0
    %2800 = vmatpush1.msra.mxu0 0.0
    %2801 = vmatprep.subr.mxu0 0.0
    %2802 = vmatpush1.msra.mxu0 0.0
    %2803 = vmatprep.subr.mxu0 0.0
    %2804 = vmatpush1.msra.mxu0 0.0
    %2805 = vmatprep.subr.mxu0 0.0
    %2806 = vmatpush1.msra.mxu0 0.0
    %2807 = vmatprep.subr.mxu0 0.0
    %2808 = vmatpush1.msra.mxu0 0.0
    %2809 = vmatprep.subr.mxu0 0.0
    %2810 = vmatpush1.msra.mxu0 0.0
    %2811 = vmatprep.subr.mxu0 0.0
    %2812 = vmatpush1.msra.mxu0 0.0
    %2813 = vmatprep.mubr.f32.mxu0 0.0
    %2814 = vmatmul.mubr.f32.gmra.mrb[0].mxu0 %v2747
    %v2815 = vpop.f32.mrb[0].mxu0
    %v2816 = vadd.f32 0.0, %v2815
    %v2817 = vpop.f32.mrb[0].mxu0
    %2818 = vdwg.mxu0
    %v2820 = vrot.slane %v2816, 5
    %v2822 = vadd.f32 %v2109, %v2820
    %v2824 = vrot.slane %v2743, 3
    %v2827 = vrot.slane %v2822, 2
    %v2829 = vsel %vm162, %v2824, %v2827
    %v2830 = vxor.u32 %v2829, 2147483648
    %v2831 = vmul.f32 %v2830, 1.442695
    %v2832 = vpow.pop %v2831
    %v2833 = vadd.f32 %v2832, 1.0
    %v2834 = vrcp.pop %v2833
    %v2835 = vmul.f32 1.0, %v2834
    %v2836 = vtanh.pop %v2829
    %v2837 = vmul.f32 %v2835, %v2658
    %2839 = vrot.lane.b32.xlu0 %v2836, 64
    %v2840 = vpop.permute.xlu0 %2839
    %v2842 = vmul.f32 %v2835, %v2840
    %2844 = vrot.lane.b32.xlu0 %v2842, 32
    %v2845 = vpop.permute.xlu0 %2844
    %v2847 = vadd.f32 %v2837, %v2845
    %v2848 = vtanh.pop %v2847
    %2850 = vrot.lane.b32.xlu0 %v2848, 64
    %v2851 = vpop.permute.xlu0 %2850
    %v2853 = vmul.f32 %v2835, %v2851
    %2855 = vrot.lane.b32.xlu0 %v2853, 32
    %v2856 = vpop.permute.xlu0 %2855
    %v2857 = vsel %vm239, %v2856, 0
    %2859 = vmatprep.subr.mxu0 0.0
    %2860 = vmatpush1.msra.mxu0 %v2112
    %2861 = vmatprep.subr.mxu0 0.0
    %2862 = vmatpush1.msra.mxu0 %v2113
    %2863 = vmatprep.subr.mxu0 0.0
    %2864 = vmatpush1.msra.mxu0 %v2114
    %2865 = vmatprep.subr.mxu0 0.0
    %2866 = vmatpush1.msra.mxu0 %v2115
    %2867 = vmatprep.subr.mxu0 0.0
    %2868 = vmatpush1.msra.mxu0 0.0
    %2869 = vmatprep.subr.mxu0 0.0
    %2870 = vmatpush1.msra.mxu0 0.0
    %2871 = vmatprep.subr.mxu0 0.0
    %2872 = vmatpush1.msra.mxu0 0.0
    %2873 = vmatprep.subr.mxu0 0.0
    %2874 = vmatpush1.msra.mxu0 0.0
    %2875 = vmatprep.subr.mxu0 0.0
    %2876 = vmatpush1.msra.mxu0 0.0
    %2877 = vmatprep.subr.mxu0 0.0
    %2878 = vmatpush1.msra.mxu0 0.0
    %2879 = vmatprep.subr.mxu0 0.0
    %2880 = vmatpush1.msra.mxu0 0.0
    %2881 = vmatprep.subr.mxu0 0.0
    %2882 = vmatpush1.msra.mxu0 0.0
    %2883 = vmatprep.subr.mxu0 0.0
    %2884 = vmatpush1.msra.mxu0 0.0
    %2885 = vmatprep.subr.mxu0 0.0
    %2886 = vmatpush1.msra.mxu0 0.0
    %2887 = vmatprep.subr.mxu0 0.0
    %2888 = vmatpush1.msra.mxu0 0.0
    %2889 = vmatprep.subr.mxu0 0.0
    %2890 = vmatpush1.msra.mxu0 0.0
    %2891 = vmatprep.subr.mxu0 0.0
    %2892 = vmatpush1.msra.mxu0 0.0
    %2893 = vmatprep.subr.mxu0 0.0
    %2894 = vmatpush1.msra.mxu0 0.0
    %2895 = vmatprep.subr.mxu0 0.0
    %2896 = vmatpush1.msra.mxu0 0.0
    %2897 = vmatprep.subr.mxu0 0.0
    %2898 = vmatpush1.msra.mxu0 0.0
    %2899 = vmatprep.subr.mxu0 0.0
    %2900 = vmatpush1.msra.mxu0 0.0
    %2901 = vmatprep.subr.mxu0 0.0
    %2902 = vmatpush1.msra.mxu0 0.0
    %2903 = vmatprep.subr.mxu0 0.0
    %2904 = vmatpush1.msra.mxu0 0.0
    %2905 = vmatprep.subr.mxu0 0.0
    %2906 = vmatpush1.msra.mxu0 0.0
    %2907 = vmatprep.subr.mxu0 0.0
    %2908 = vmatpush1.msra.mxu0 0.0
    %2909 = vmatprep.subr.mxu0 0.0
    %2910 = vmatpush1.msra.mxu0 0.0
    %2911 = vmatprep.subr.mxu0 0.0
    %2912 = vmatpush1.msra.mxu0 0.0
    %2913 = vmatprep.subr.mxu0 0.0
    %2914 = vmatpush1.msra.mxu0 0.0
    %2915 = vmatprep.subr.mxu0 0.0
    %2916 = vmatpush1.msra.mxu0 0.0
    %2917 = vmatprep.subr.mxu0 0.0
    %2918 = vmatpush1.msra.mxu0 0.0
    %2919 = vmatprep.subr.mxu0 0.0
    %2920 = vmatpush1.msra.mxu0 0.0
    %2921 = vmatprep.subr.mxu0 0.0
    %2922 = vmatpush1.msra.mxu0 0.0
    %2923 = vmatprep.mubr.f32.mxu0 0.0
    %2924 = vmatmul.mubr.f32.gmra.mrb[0].mxu0 %v2857
    %v2925 = vpop.f32.mrb[0].mxu0
    %v2926 = vadd.f32 0.0, %v2925
    %v2927 = vpop.f32.mrb[0].mxu0
    %2928 = vdwg.mxu0
    %v2930 = vrot.slane %v2926, 4
    %v2932 = vadd.f32 %v2023, %v2930
    %v2933 = vrot.slane %v2853, 1
    %2934 = vrot.lane.b32.xlu0 %v2933, 32
    %v2935 = vpop.permute.xlu0 %2934
    %v2936 = vsel %vm239, %v2935, 0
    %2938 = vmatprep.subr.mxu0 0.0
    %2939 = vmatpush1.msra.mxu0 %v2116
    %2940 = vmatprep.subr.mxu0 0.0
    %2941 = vmatpush1.msra.mxu0 %v2117
    %2942 = vmatprep.subr.mxu0 0.0
    %2943 = vmatpush1.msra.mxu0 %v2118
    %2944 = vmatprep.subr.mxu0 0.0
    %2945 = vmatpush1.msra.mxu0 %v2119
    %2946 = vmatprep.subr.mxu0 0.0
    %2947 = vmatpush1.msra.mxu0 0.0
    %2948 = vmatprep.subr.mxu0 0.0
    %2949 = vmatpush1.msra.mxu0 0.0
    %2950 = vmatprep.subr.mxu0 0.0
    %2951 = vmatpush1.msra.mxu0 0.0
    %2952 = vmatprep.subr.mxu0 0.0
    %2953 = vmatpush1.msra.mxu0 0.0
    %2954 = vmatprep.subr.mxu0 0.0
    %2955 = vmatpush1.msra.mxu0 0.0
    %2956 = vmatprep.subr.mxu0 0.0
    %2957 = vmatpush1.msra.mxu0 0.0
    %2958 = vmatprep.subr.mxu0 0.0
    %2959 = vmatpush1.msra.mxu0 0.0
    %2960 = vmatprep.subr.mxu0 0.0
    %2961 = vmatpush1.msra.mxu0 0.0
    %2962 = vmatprep.subr.mxu0 0.0
    %2963 = vmatpush1.msra.mxu0 0.0
    %2964 = vmatprep.subr.mxu0 0.0
    %2965 = vmatpush1.msra.mxu0 0.0
    %2966 = vmatprep.subr.mxu0 0.0
    %2967 = vmatpush1.msra.mxu0 0.0
    %2968 = vmatprep.subr.mxu0 0.0
    %2969 = vmatpush1.msra.mxu0 0.0
    %2970 = vmatprep.subr.mxu0 0.0
    %2971 = vmatpush1.msra.mxu0 0.0
    %2972 = vmatprep.subr.mxu0 0.0
    %2973 = vmatpush1.msra.mxu0 0.0
    %2974 = vmatprep.subr.mxu0 0.0
    %2975 = vmatpush1.msra.mxu0 0.0
    %2976 = vmatprep.subr.mxu0 0.0
    %2977 = vmatpush1.msra.mxu0 0.0
    %2978 = vmatprep.subr.mxu0 0.0
    %2979 = vmatpush1.msra.mxu0 0.0
    %2980 = vmatprep.subr.mxu0 0.0
    %2981 = vmatpush1.msra.mxu0 0.0
    %2982 = vmatprep.subr.mxu0 0.0
    %2983 = vmatpush1.msra.mxu0 0.0
    %2984 = vmatprep.subr.mxu0 0.0
    %2985 = vmatpush1.msra.mxu0 0.0
    %2986 = vmatprep.subr.mxu0 0.0
    %2987 = vmatpush1.msra.mxu0 0.0
    %2988 = vmatprep.subr.mxu0 0.0
    %2989 = vmatpush1.msra.mxu0 0.0
    %2990 = vmatprep.subr.mxu0 0.0
    %2991 = vmatpush1.msra.mxu0 0.0
    %2992 = vmatprep.subr.mxu0 0.0
    %2993 = vmatpush1.msra.mxu0 0.0
    %2994 = vmatprep.subr.mxu0 0.0
    %2995 = vmatpush1.msra.mxu0 0.0
    %2996 = vmatprep.subr.mxu0 0.0
    %2997 = vmatpush1.msra.mxu0 0.0
    %2998 = vmatprep.subr.mxu0 0.0
    %2999 = vmatpush1.msra.mxu0 0.0
    %3000 = vmatprep.subr.mxu0 0.0
    %3001 = vmatpush1.msra.mxu0 0.0
    %3002 = vmatprep.mubr.f32.mxu0 0.0
    %3003 = vmatmul.mubr.f32.gmra.mrb[0].mxu0 %v2936
    %v3004 = vpop.f32.mrb[0].mxu0
    %v3005 = vadd.f32 0.0, %v3004
    %v3006 = vpop.f32.mrb[0].mxu0
    %3007 = vdwg.mxu0
    %v3009 = vrot.slane %v3005, 4
    %v3011 = vadd.f32 %v2109, %v3009
    %v3013 = vrot.slane %v2932, 4
    %v3016 = vrot.slane %v3011, 3
    %v3018 = vsel %vm162, %v3013, %v3016
    %v3019 = vxor.u32 %v3018, 2147483648
    %v3020 = vmul.f32 %v3019, 1.442695
    %v3021 = vpow.pop %v3020
    %v3022 = vadd.f32 %v3021, 1.0
    %v3023 = vrcp.pop %v3022
    %v3024 = vmul.f32 1.0, %v3023
    %v3025 = vtanh.pop %v3018
    %v3026 = vmul.f32 %v3024, %v2847
    %3028 = vrot.lane.b32.xlu0 %v3025, 64
    %v3029 = vpop.permute.xlu0 %3028
    %v3031 = vmul.f32 %v3024, %v3029
    %3033 = vrot.lane.b32.xlu0 %v3031, 32
    %v3034 = vpop.permute.xlu0 %3033
    %v3036 = vadd.f32 %v3026, %v3034
    %v3037 = vtanh.pop %v3036
    %3039 = vrot.lane.b32.xlu0 %v3037, 64
    %v3040 = vpop.permute.xlu0 %3039
    %v3042 = vmul.f32 %v3024, %v3040
    %3044 = vrot.lane.b32.xlu0 %v3042, 32
    %v3045 = vpop.permute.xlu0 %3044
    %v3046 = vsel %vm239, %v3045, 0
    %3048 = vmatprep.subr.mxu0 0.0
    %3049 = vmatpush1.msra.mxu0 %v2112
    %3050 = vmatprep.subr.mxu0 0.0
    %3051 = vmatpush1.msra.mxu0 %v2113
    %3052 = vmatprep.subr.mxu0 0.0
    %3053 = vmatpush1.msra.mxu0 %v2114
    %3054 = vmatprep.subr.mxu0 0.0
    %3055 = vmatpush1.msra.mxu0 %v2115
    %3056 = vmatprep.subr.mxu0 0.0
    %3057 = vmatpush1.msra.mxu0 0.0
    %3058 = vmatprep.subr.mxu0 0.0
    %3059 = vmatpush1.msra.mxu0 0.0
    %3060 = vmatprep.subr.mxu0 0.0
    %3061 = vmatpush1.msra.mxu0 0.0
    %3062 = vmatprep.subr.mxu0 0.0
    %3063 = vmatpush1.msra.mxu0 0.0
    %3064 = vmatprep.subr.mxu0 0.0
    %3065 = vmatpush1.msra.mxu0 0.0
    %3066 = vmatprep.subr.mxu0 0.0
    %3067 = vmatpush1.msra.mxu0 0.0
    %3068 = vmatprep.subr.mxu0 0.0
    %3069 = vmatpush1.msra.mxu0 0.0
    %3070 = vmatprep.subr.mxu0 0.0
    %3071 = vmatpush1.msra.mxu0 0.0
    %3072 = vmatprep.subr.mxu0 0.0
    %3073 = vmatpush1.msra.mxu0 0.0
    %3074 = vmatprep.subr.mxu0 0.0
    %3075 = vmatpush1.msra.mxu0 0.0
    %3076 = vmatprep.subr.mxu0 0.0
    %3077 = vmatpush1.msra.mxu0 0.0
    %3078 = vmatprep.subr.mxu0 0.0
    %3079 = vmatpush1.msra.mxu0 0.0
    %3080 = vmatprep.subr.mxu0 0.0
    %3081 = vmatpush1.msra.mxu0 0.0
    %3082 = vmatprep.subr.mxu0 0.0
    %3083 = vmatpush1.msra.mxu0 0.0
    %3084 = vmatprep.subr.mxu0 0.0
    %3085 = vmatpush1.msra.mxu0 0.0
    %3086 = vmatprep.subr.mxu0 0.0
    %3087 = vmatpush1.msra.mxu0 0.0
    %3088 = vmatprep.subr.mxu0 0.0
    %3089 = vmatpush1.msra.mxu0 0.0
    %3090 = vmatprep.subr.mxu0 0.0
    %3091 = vmatpush1.msra.mxu0 0.0
    %3092 = vmatprep.subr.mxu0 0.0
    %3093 = vmatpush1.msra.mxu0 0.0
    %3094 = vmatprep.subr.mxu0 0.0
    %3095 = vmatpush1.msra.mxu0 0.0
    %3096 = vmatprep.subr.mxu0 0.0
    %3097 = vmatpush1.msra.mxu0 0.0
    %3098 = vmatprep.subr.mxu0 0.0
    %3099 = vmatpush1.msra.mxu0 0.0
    %3100 = vmatprep.subr.mxu0 0.0
    %3101 = vmatpush1.msra.mxu0 0.0
    %3102 = vmatprep.subr.mxu0 0.0
    %3103 = vmatpush1.msra.mxu0 0.0
    %3104 = vmatprep.subr.mxu0 0.0
    %3105 = vmatpush1.msra.mxu0 0.0
    %3106 = vmatprep.subr.mxu0 0.0
    %3107 = vmatpush1.msra.mxu0 0.0
    %3108 = vmatprep.subr.mxu0 0.0
    %3109 = vmatpush1.msra.mxu0 0.0
    %3110 = vmatprep.subr.mxu0 0.0
    %3111 = vmatpush1.msra.mxu0 0.0
    %3112 = vmatprep.mubr.f32.mxu0 0.0
    %3113 = vmatmul.mubr.f32.gmra.mrb[0].mxu0 %v3046
    %v3114 = vpop.f32.mrb[0].mxu0
    %v3115 = vadd.f32 0.0, %v3114
    %v3116 = vpop.f32.mrb[0].mxu0
    %3117 = vdwg.mxu0
    %v3119 = vrot.slane %v3115, 3
    %v3121 = vadd.f32 %v2023, %v3119
    %v3122 = vrot.slane %v3042, 1
    %3123 = vrot.lane.b32.xlu0 %v3122, 32
    %v3124 = vpop.permute.xlu0 %3123
    %v3125 = vsel %vm239, %v3124, 0
    %3127 = vmatprep.subr.mxu0 0.0
    %3128 = vmatpush1.msra.mxu0 %v2116
    %3129 = vmatprep.subr.mxu0 0.0
    %3130 = vmatpush1.msra.mxu0 %v2117
    %3131 = vmatprep.subr.mxu0 0.0
    %3132 = vmatpush1.msra.mxu0 %v2118
    %3133 = vmatprep.subr.mxu0 0.0
    %3134 = vmatpush1.msra.mxu0 %v2119
    %3135 = vmatprep.subr.mxu0 0.0
    %3136 = vmatpush1.msra.mxu0 0.0
    %3137 = vmatprep.subr.mxu0 0.0
    %3138 = vmatpush1.msra.mxu0 0.0
    %3139 = vmatprep.subr.mxu0 0.0
    %3140 = vmatpush1.msra.mxu0 0.0
    %3141 = vmatprep.subr.mxu0 0.0
    %3142 = vmatpush1.msra.mxu0 0.0
    %3143 = vmatprep.subr.mxu0 0.0
    %3144 = vmatpush1.msra.mxu0 0.0
    %3145 = vmatprep.subr.mxu0 0.0
    %3146 = vmatpush1.msra.mxu0 0.0
    %3147 = vmatprep.subr.mxu0 0.0
    %3148 = vmatpush1.msra.mxu0 0.0
    %3149 = vmatprep.subr.mxu0 0.0
    %3150 = vmatpush1.msra.mxu0 0.0
    %3151 = vmatprep.subr.mxu0 0.0
    %3152 = vmatpush1.msra.mxu0 0.0
    %3153 = vmatprep.subr.mxu0 0.0
    %3154 = vmatpush1.msra.mxu0 0.0
    %3155 = vmatprep.subr.mxu0 0.0
    %3156 = vmatpush1.msra.mxu0 0.0
    %3157 = vmatprep.subr.mxu0 0.0
    %3158 = vmatpush1.msra.mxu0 0.0
    %3159 = vmatprep.subr.mxu0 0.0
    %3160 = vmatpush1.msra.mxu0 0.0
    %3161 = vmatprep.subr.mxu0 0.0
    %3162 = vmatpush1.msra.mxu0 0.0
    %3163 = vmatprep.subr.mxu0 0.0
    %3164 = vmatpush1.msra.mxu0 0.0
    %3165 = vmatprep.subr.mxu0 0.0
    %3166 = vmatpush1.msra.mxu0 0.0
    %3167 = vmatprep.subr.mxu0 0.0
    %3168 = vmatpush1.msra.mxu0 0.0
    %3169 = vmatprep.subr.mxu0 0.0
    %3170 = vmatpush1.msra.mxu0 0.0
    %3171 = vmatprep.subr.mxu0 0.0
    %3172 = vmatpush1.msra.mxu0 0.0
    %3173 = vmatprep.subr.mxu0 0.0
    %3174 = vmatpush1.msra.mxu0 0.0
    %3175 = vmatprep.subr.mxu0 0.0
    %3176 = vmatpush1.msra.mxu0 0.0
    %3177 = vmatprep.subr.mxu0 0.0
    %3178 = vmatpush1.msra.mxu0 0.0
    %3179 = vmatprep.subr.mxu0 0.0
    %3180 = vmatpush1.msra.mxu0 0.0
    %3181 = vmatprep.subr.mxu0 0.0
    %3182 = vmatpush1.msra.mxu0 0.0
    %3183 = vmatprep.subr.mxu0 0.0
    %3184 = vmatpush1.msra.mxu0 0.0
    %3185 = vmatprep.subr.mxu0 0.0
    %3186 = vmatpush1.msra.mxu0 0.0
    %3187 = vmatprep.subr.mxu0 0.0
    %3188 = vmatpush1.msra.mxu0 0.0
    %3189 = vmatprep.subr.mxu0 0.0
    %3190 = vmatpush1.msra.mxu0 0.0
    %3191 = vmatprep.mubr.f32.mxu0 0.0
    %3192 = vmatmul.mubr.f32.gmra.mrb[0].mxu0 %v3125
    %v3193 = vpop.f32.mrb[0].mxu0
    %v3194 = vadd.f32 0.0, %v3193
    %v3195 = vpop.f32.mrb[0].mxu0
    %3196 = vdwg.mxu0
    %v3198 = vrot.slane %v3194, 3
    %v3200 = vadd.f32 %v2109, %v3198
    %v3202 = vrot.slane %v3121, 5
    %v3205 = vrot.slane %v3200, 4
    %v3207 = vsel %vm162, %v3202, %v3205
    %v3208 = vxor.u32 %v3207, 2147483648
    %v3209 = vmul.f32 %v3208, 1.442695
    %v3210 = vpow.pop %v3209
    %v3211 = vadd.f32 %v3210, 1.0
    %v3212 = vrcp.pop %v3211
    %v3213 = vmul.f32 1.0, %v3212
    %v3214 = vtanh.pop %v3207
    %v3215 = vmul.f32 %v3213, %v3036
    %3217 = vrot.lane.b32.xlu0 %v3214, 64
    %v3218 = vpop.permute.xlu0 %3217
    %v3220 = vmul.f32 %v3213, %v3218
    %3222 = vrot.lane.b32.xlu0 %v3220, 32
    %v3223 = vpop.permute.xlu0 %3222
    %v3225 = vadd.f32 %v3215, %v3223
    %v3226 = vtanh.pop %v3225
    %3228 = vrot.lane.b32.xlu0 %v3226, 64
    %v3229 = vpop.permute.xlu0 %3228
    %v3231 = vmul.f32 %v3213, %v3229
    %3233 = vrot.lane.b32.xlu0 %v3231, 32
    %v3234 = vpop.permute.xlu0 %3233
    %v3235 = vsel %vm239, %v3234, 0
    %3237 = vmatprep.subr.mxu0 0.0
    %3238 = vmatpush1.msra.mxu0 %v2112
    %3239 = vmatprep.subr.mxu0 0.0
    %3240 = vmatpush1.msra.mxu0 %v2113
    %3241 = vmatprep.subr.mxu0 0.0
    %3242 = vmatpush1.msra.mxu0 %v2114
    %3243 = vmatprep.subr.mxu0 0.0
    %3244 = vmatpush1.msra.mxu0 %v2115
    %3245 = vmatprep.subr.mxu0 0.0
    %3246 = vmatpush1.msra.mxu0 0.0
    %3247 = vmatprep.subr.mxu0 0.0
    %3248 = vmatpush1.msra.mxu0 0.0
    %3249 = vmatprep.subr.mxu0 0.0
    %3250 = vmatpush1.msra.mxu0 0.0
    %3251 = vmatprep.subr.mxu0 0.0
    %3252 = vmatpush1.msra.mxu0 0.0
    %3253 = vmatprep.subr.mxu0 0.0
    %3254 = vmatpush1.msra.mxu0 0.0
    %3255 = vmatprep.subr.mxu0 0.0
    %3256 = vmatpush1.msra.mxu0 0.0
    %3257 = vmatprep.subr.mxu0 0.0
    %3258 = vmatpush1.msra.mxu0 0.0
    %3259 = vmatprep.subr.mxu0 0.0
    %3260 = vmatpush1.msra.mxu0 0.0
    %3261 = vmatprep.subr.mxu0 0.0
    %3262 = vmatpush1.msra.mxu0 0.0
    %3263 = vmatprep.subr.mxu0 0.0
    %3264 = vmatpush1.msra.mxu0 0.0
    %3265 = vmatprep.subr.mxu0 0.0
    %3266 = vmatpush1.msra.mxu0 0.0
    %3267 = vmatprep.subr.mxu0 0.0
    %3268 = vmatpush1.msra.mxu0 0.0
    %3269 = vmatprep.subr.mxu0 0.0
    %3270 = vmatpush1.msra.mxu0 0.0
    %3271 = vmatprep.subr.mxu0 0.0
    %3272 = vmatpush1.msra.mxu0 0.0
    %3273 = vmatprep.subr.mxu0 0.0
    %3274 = vmatpush1.msra.mxu0 0.0
    %3275 = vmatprep.subr.mxu0 0.0
    %3276 = vmatpush1.msra.mxu0 0.0
    %3277 = vmatprep.subr.mxu0 0.0
    %3278 = vmatpush1.msra.mxu0 0.0
    %3279 = vmatprep.subr.mxu0 0.0
    %3280 = vmatpush1.msra.mxu0 0.0
    %3281 = vmatprep.subr.mxu0 0.0
    %3282 = vmatpush1.msra.mxu0 0.0
    %3283 = vmatprep.subr.mxu0 0.0
    %3284 = vmatpush1.msra.mxu0 0.0
    %3285 = vmatprep.subr.mxu0 0.0
    %3286 = vmatpush1.msra.mxu0 0.0
    %3287 = vmatprep.subr.mxu0 0.0
    %3288 = vmatpush1.msra.mxu0 0.0
    %3289 = vmatprep.subr.mxu0 0.0
    %3290 = vmatpush1.msra.mxu0 0.0
    %3291 = vmatprep.subr.mxu0 0.0
    %3292 = vmatpush1.msra.mxu0 0.0
    %3293 = vmatprep.subr.mxu0 0.0
    %3294 = vmatpush1.msra.mxu0 0.0
    %3295 = vmatprep.subr.mxu0 0.0
    %3296 = vmatpush1.msra.mxu0 0.0
    %3297 = vmatprep.subr.mxu0 0.0
    %3298 = vmatpush1.msra.mxu0 0.0
    %3299 = vmatprep.subr.mxu0 0.0
    %3300 = vmatpush1.msra.mxu0 0.0
    %3301 = vmatprep.mubr.f32.mxu0 0.0
    %3302 = vmatmul.mubr.f32.gmra.mrb[0].mxu0 %v3235
    %v3303 = vpop.f32.mrb[0].mxu0
    %v3304 = vadd.f32 0.0, %v3303
    %v3305 = vpop.f32.mrb[0].mxu0
    %3306 = vdwg.mxu0
    %v3308 = vrot.slane %v3304, 2
    %v3310 = vadd.f32 %v2023, %v3308
    %v3311 = vrot.slane %v3231, 1
    %3312 = vrot.lane.b32.xlu0 %v3311, 32
    %v3313 = vpop.permute.xlu0 %3312
    %v3314 = vsel %vm239, %v3313, 0
    %3316 = vmatprep.subr.mxu0 0.0
    %3317 = vmatpush1.msra.mxu0 %v2116
    %3318 = vmatprep.subr.mxu0 0.0
    %3319 = vmatpush1.msra.mxu0 %v2117
    %3320 = vmatprep.subr.mxu0 0.0
    %3321 = vmatpush1.msra.mxu0 %v2118
    %3322 = vmatprep.subr.mxu0 0.0
    %3323 = vmatpush1.msra.mxu0 %v2119
    %3324 = vmatprep.subr.mxu0 0.0
    %3325 = vmatpush1.msra.mxu0 0.0
    %3326 = vmatprep.subr.mxu0 0.0
    %3327 = vmatpush1.msra.mxu0 0.0
    %3328 = vmatprep.subr.mxu0 0.0
    %3329 = vmatpush1.msra.mxu0 0.0
    %3330 = vmatprep.subr.mxu0 0.0
    %3331 = vmatpush1.msra.mxu0 0.0
    %3332 = vmatprep.subr.mxu0 0.0
    %3333 = vmatpush1.msra.mxu0 0.0
    %3334 = vmatprep.subr.mxu0 0.0
    %3335 = vmatpush1.msra.mxu0 0.0
    %3336 = vmatprep.subr.mxu0 0.0
    %3337 = vmatpush1.msra.mxu0 0.0
    %3338 = vmatprep.subr.mxu0 0.0
    %3339 = vmatpush1.msra.mxu0 0.0
    %3340 = vmatprep.subr.mxu0 0.0
    %3341 = vmatpush1.msra.mxu0 0.0
    %3342 = vmatprep.subr.mxu0 0.0
    %3343 = vmatpush1.msra.mxu0 0.0
    %3344 = vmatprep.subr.mxu0 0.0
    %3345 = vmatpush1.msra.mxu0 0.0
    %3346 = vmatprep.subr.mxu0 0.0
    %3347 = vmatpush1.msra.mxu0 0.0
    %3348 = vmatprep.subr.mxu0 0.0
    %3349 = vmatpush1.msra.mxu0 0.0
    %3350 = vmatprep.subr.mxu0 0.0
    %3351 = vmatpush1.msra.mxu0 0.0
    %3352 = vmatprep.subr.mxu0 0.0
    %3353 = vmatpush1.msra.mxu0 0.0
    %3354 = vmatprep.subr.mxu0 0.0
    %3355 = vmatpush1.msra.mxu0 0.0
    %3356 = vmatprep.subr.mxu0 0.0
    %3357 = vmatpush1.msra.mxu0 0.0
    %3358 = vmatprep.subr.mxu0 0.0
    %3359 = vmatpush1.msra.mxu0 0.0
    %3360 = vmatprep.subr.mxu0 0.0
    %3361 = vmatpush1.msra.mxu0 0.0
    %3362 = vmatprep.subr.mxu0 0.0
    %3363 = vmatpush1.msra.mxu0 0.0
    %3364 = vmatprep.subr.mxu0 0.0
    %3365 = vmatpush1.msra.mxu0 0.0
    %3366 = vmatprep.subr.mxu0 0.0
    %3367 = vmatpush1.msra.mxu0 0.0
    %3368 = vmatprep.subr.mxu0 0.0
    %3369 = vmatpush1.msra.mxu0 0.0
    %3370 = vmatprep.subr.mxu0 0.0
    %3371 = vmatpush1.msra.mxu0 0.0
    %3372 = vmatprep.subr.mxu0 0.0
    %3373 = vmatpush1.msra.mxu0 0.0
    %3374 = vmatprep.subr.mxu0 0.0
    %3375 = vmatpush1.msra.mxu0 0.0
    %3376 = vmatprep.subr.mxu0 0.0
    %3377 = vmatpush1.msra.mxu0 0.0
    %3378 = vmatprep.subr.mxu0 0.0
    %3379 = vmatpush1.msra.mxu0 0.0
    %3380 = vmatprep.mubr.f32.mxu0 0.0
    %3381 = vmatmul.mubr.f32.gmra.mrb[0].mxu0 %v3314
    %v3382 = vpop.f32.mrb[0].mxu0
    %v3383 = vadd.f32 0.0, %v3382
    %v3384 = vpop.f32.mrb[0].mxu0
    %3385 = vdwg.mxu0
    %v3387 = vrot.slane %v3383, 2
    %v3389 = vadd.f32 %v2109, %v3387
    %v3391 = vrot.slane %v3310, 6
    %v3394 = vrot.slane %v3389, 5
    %v3396 = vsel %vm162, %v3391, %v3394
    %v3397 = vxor.u32 %v3396, 2147483648
    %v3398 = vmul.f32 %v3397, 1.442695
    %v3399 = vpow.pop %v3398
    %v3400 = vadd.f32 %v3399, 1.0
    %v3401 = vrcp.pop %v3400
    %v3402 = vmul.f32 1.0, %v3401
    %v3403 = vtanh.pop %v3396
    %v3404 = vmul.f32 %v3402, %v3225
    %3406 = vrot.lane.b32.xlu0 %v3403, 64
    %v3407 = vpop.permute.xlu0 %3406
    %v3409 = vmul.f32 %v3402, %v3407
    %3411 = vrot.lane.b32.xlu0 %v3409, 32
    %v3412 = vpop.permute.xlu0 %3411
    %v3414 = vadd.f32 %v3404, %v3412
    %v3415 = vtanh.pop %v3414
    %3417 = vrot.lane.b32.xlu0 %v3415, 64
    %v3418 = vpop.permute.xlu0 %3417
    %v3420 = vmul.f32 %v3402, %v3418
    %3422 = vrot.lane.b32.xlu0 %v3420, 32
    %v3423 = vpop.permute.xlu0 %3422
    %v3424 = vsel %vm239, %v3423, 0
    %3426 = vmatprep.subr.mxu0 0.0
    %3427 = vmatpush1.msra.mxu0 %v2112
    %3428 = vmatprep.subr.mxu0 0.0
    %3429 = vmatpush1.msra.mxu0 %v2113
    %3430 = vmatprep.subr.mxu0 0.0
    %3431 = vmatpush1.msra.mxu0 %v2114
    %3432 = vmatprep.subr.mxu0 0.0
    %3433 = vmatpush1.msra.mxu0 %v2115
    %3434 = vmatprep.subr.mxu0 0.0
    %3435 = vmatpush1.msra.mxu0 0.0
    %3436 = vmatprep.subr.mxu0 0.0
    %3437 = vmatpush1.msra.mxu0 0.0
    %3438 = vmatprep.subr.mxu0 0.0
    %3439 = vmatpush1.msra.mxu0 0.0
    %3440 = vmatprep.subr.mxu0 0.0
    %3441 = vmatpush1.msra.mxu0 0.0
    %3442 = vmatprep.subr.mxu0 0.0
    %3443 = vmatpush1.msra.mxu0 0.0
    %3444 = vmatprep.subr.mxu0 0.0
    %3445 = vmatpush1.msra.mxu0 0.0
    %3446 = vmatprep.subr.mxu0 0.0
    %3447 = vmatpush1.msra.mxu0 0.0
    %3448 = vmatprep.subr.mxu0 0.0
    %3449 = vmatpush1.msra.mxu0 0.0
    %3450 = vmatprep.subr.mxu0 0.0
    %3451 = vmatpush1.msra.mxu0 0.0
    %3452 = vmatprep.subr.mxu0 0.0
    %3453 = vmatpush1.msra.mxu0 0.0
    %3454 = vmatprep.subr.mxu0 0.0
    %3455 = vmatpush1.msra.mxu0 0.0
    %3456 = vmatprep.subr.mxu0 0.0
    %3457 = vmatpush1.msra.mxu0 0.0
    %3458 = vmatprep.subr.mxu0 0.0
    %3459 = vmatpush1.msra.mxu0 0.0
    %3460 = vmatprep.subr.mxu0 0.0
    %3461 = vmatpush1.msra.mxu0 0.0
    %3462 = vmatprep.subr.mxu0 0.0
    %3463 = vmatpush1.msra.mxu0 0.0
    %3464 = vmatprep.subr.mxu0 0.0
    %3465 = vmatpush1.msra.mxu0 0.0
    %3466 = vmatprep.subr.mxu0 0.0
    %3467 = vmatpush1.msra.mxu0 0.0
    %3468 = vmatprep.subr.mxu0 0.0
    %3469 = vmatpush1.msra.mxu0 0.0
    %3470 = vmatprep.subr.mxu0 0.0
    %3471 = vmatpush1.msra.mxu0 0.0
    %3472 = vmatprep.subr.mxu0 0.0
    %3473 = vmatpush1.msra.mxu0 0.0
    %3474 = vmatprep.subr.mxu0 0.0
    %3475 = vmatpush1.msra.mxu0 0.0
    %3476 = vmatprep.subr.mxu0 0.0
    %3477 = vmatpush1.msra.mxu0 0.0
    %3478 = vmatprep.subr.mxu0 0.0
    %3479 = vmatpush1.msra.mxu0 0.0
    %3480 = vmatprep.subr.mxu0 0.0
    %3481 = vmatpush1.msra.mxu0 0.0
    %3482 = vmatprep.subr.mxu0 0.0
    %3483 = vmatpush1.msra.mxu0 0.0
    %3484 = vmatprep.subr.mxu0 0.0
    %3485 = vmatpush1.msra.mxu0 0.0
    %3486 = vmatprep.subr.mxu0 0.0
    %3487 = vmatpush1.msra.mxu0 0.0
    %3488 = vmatprep.subr.mxu0 0.0
    %3489 = vmatpush1.msra.mxu0 0.0
    %3490 = vmatprep.mubr.f32.mxu0 0.0
    %3491 = vmatmul.mubr.f32.gmra.mrb[0].mxu0 %v3424
    %v3492 = vpop.f32.mrb[0].mxu0
    %v3493 = vadd.f32 0.0, %v3492
    %v3494 = vpop.f32.mrb[0].mxu0
    %3495 = vdwg.mxu0
    %v3497 = vrot.slane %v3493, 1
    %v3499 = vadd.f32 %v2023, %v3497
    %v3500 = vrot.slane %v3420, 1
    %3501 = vrot.lane.b32.xlu0 %v3500, 32
    %v3502 = vpop.permute.xlu0 %3501
    %v3503 = vsel %vm239, %v3502, 0
    %3505 = vmatprep.subr.mxu0 0.0
    %3506 = vmatpush1.msra.mxu0 %v2116
    %3507 = vmatprep.subr.mxu0 0.0
    %3508 = vmatpush1.msra.mxu0 %v2117
    %3509 = vmatprep.subr.mxu0 0.0
    %3510 = vmatpush1.msra.mxu0 %v2118
    %3511 = vmatprep.subr.mxu0 0.0
    %3512 = vmatpush1.msra.mxu0 %v2119
    %3513 = vmatprep.subr.mxu0 0.0
    %3514 = vmatpush1.msra.mxu0 0.0
    %3515 = vmatprep.subr.mxu0 0.0
    %3516 = vmatpush1.msra.mxu0 0.0
    %3517 = vmatprep.subr.mxu0 0.0
    %3518 = vmatpush1.msra.mxu0 0.0
    %3519 = vmatprep.subr.mxu0 0.0
    %3520 = vmatpush1.msra.mxu0 0.0
    %3521 = vmatprep.subr.mxu0 0.0
    %3522 = vmatpush1.msra.mxu0 0.0
    %3523 = vmatprep.subr.mxu0 0.0
    %3524 = vmatpush1.msra.mxu0 0.0
    %3525 = vmatprep.subr.mxu0 0.0
    %3526 = vmatpush1.msra.mxu0 0.0
    %3527 = vmatprep.subr.mxu0 0.0
    %3528 = vmatpush1.msra.mxu0 0.0
    %3529 = vmatprep.subr.mxu0 0.0
    %3530 = vmatpush1.msra.mxu0 0.0
    %3531 = vmatprep.subr.mxu0 0.0
    %3532 = vmatpush1.msra.mxu0 0.0
    %3533 = vmatprep.subr.mxu0 0.0
    %3534 = vmatpush1.msra.mxu0 0.0
    %3535 = vmatprep.subr.mxu0 0.0
    %3536 = vmatpush1.msra.mxu0 0.0
    %3537 = vmatprep.subr.mxu0 0.0
    %3538 = vmatpush1.msra.mxu0 0.0
    %3539 = vmatprep.subr.mxu0 0.0
    %3540 = vmatpush1.msra.mxu0 0.0
    %3541 = vmatprep.subr.mxu0 0.0
    %3542 = vmatpush1.msra.mxu0 0.0
    %3543 = vmatprep.subr.mxu0 0.0
    %3544 = vmatpush1.msra.mxu0 0.0
    %3545 = vmatprep.subr.mxu0 0.0
    %3546 = vmatpush1.msra.mxu0 0.0
    %3547 = vmatprep.subr.mxu0 0.0
    %3548 = vmatpush1.msra.mxu0 0.0
    %3549 = vmatprep.subr.mxu0 0.0
    %3550 = vmatpush1.msra.mxu0 0.0
    %3551 = vmatprep.subr.mxu0 0.0
    %3552 = vmatpush1.msra.mxu0 0.0
    %3553 = vmatprep.subr.mxu0 0.0
    %3554 = vmatpush1.msra.mxu0 0.0
    %3555 = vmatprep.subr.mxu0 0.0
    %3556 = vmatpush1.msra.mxu0 0.0
    %3557 = vmatprep.subr.mxu0 0.0
    %3558 = vmatpush1.msra.mxu0 0.0
    %3559 = vmatprep.subr.mxu0 0.0
    %3560 = vmatpush1.msra.mxu0 0.0
    %3561 = vmatprep.subr.mxu0 0.0
    %3562 = vmatpush1.msra.mxu0 0.0
    %3563 = vmatprep.subr.mxu0 0.0
    %3564 = vmatpush1.msra.mxu0 0.0
    %3565 = vmatprep.subr.mxu0 0.0
    %3566 = vmatpush1.msra.mxu0 0.0
    %3567 = vmatprep.subr.mxu0 0.0
    %3568 = vmatpush1.msra.mxu0 0.0
    %3569 = vmatprep.mubr.f32.mxu0 0.0
    %3570 = vmatmul.mubr.f32.gmra.mrb[0].mxu0 %v3503
    %v3571 = vpop.f32.mrb[0].mxu0
    %v3572 = vadd.f32 0.0, %v3571
    %v3573 = vpop.f32.mrb[0].mxu0
    %3574 = vdwg.mxu0
    %v3576 = vrot.slane %v3572, 1
    %v3578 = vadd.f32 %v2109, %v3576
    %v3580 = vrot.slane %v3499, 7
    %v3583 = vrot.slane %v3578, 6
    %v3585 = vsel %vm162, %v3580, %v3583
    %v3586 = vxor.u32 %v3585, 2147483648
    %v3587 = vmul.f32 %v3586, 1.442695
    %v3588 = vpow.pop %v3587
    %v3589 = vadd.f32 %v3588, 1.0
    %v3590 = vrcp.pop %v3589
    %v3591 = vmul.f32 1.0, %v3590
    %v3592 = vtanh.pop %v3585
    %v3593 = vmul.f32 %v3591, %v3414
    %3595 = vrot.lane.b32.xlu0 %v3592, 64
    %v3596 = vpop.permute.xlu0 %3595
    %v3598 = vmul.f32 %v3591, %v3596
    %3600 = vrot.lane.b32.xlu0 %v3598, 32
    %v3601 = vpop.permute.xlu0 %3600
    %v3603 = vadd.f32 %v3593, %v3601
    %v3604 = vtanh.pop %v3603
    %3606 = vrot.lane.b32.xlu0 %v3604, 64
    %v3607 = vpop.permute.xlu0 %3606
    %v3609 = vmul.f32 %v3591, %v3607
    %v3610 = vrot.slane %v2475, 7
    %v3612 = vrot.slane %v2664, 6
    %v3614 = vrot.slane %v2853, 5
    %v3616 = vrot.slane %v3042, 4
    %v3618 = vrot.slane %v3231, 3
    %v3620 = vrot.slane %v3420, 2
    %v3623 = vrot.slane %v3609, 1
    %v3625 = vsel %vm162, %v2289, %v3610
    %v3626 = vsel %vm164, %v3625, %v3612
    %v3627 = vsel %vm166, %v3626, %v3614
    %v3628 = vsel %vm168, %v3627, %v3616
    %v3629 = vsel %vm170, %v3628, %v3618
    %v3630 = vsel %vm172, %v3629, %v3620
    %v3631 = vsel %vm174, %v3630, %v3623
    %v3633 = vrot.slane %v2664, 7
    %v3635 = vrot.slane %v2853, 6
    %v3637 = vrot.slane %v3042, 5
    %v3639 = vrot.slane %v3231, 4
    %v3641 = vrot.slane %v3420, 3
    %v3643 = vrot.slane %v3609, 2
    %v3645 = vsel %vm162, %v2369, %v2475
    %v3646 = vsel %vm164, %v3645, %v3633
    %v3647 = vsel %vm166, %v3646, %v3635
    %v3648 = vsel %vm168, %v3647, %v3637
    %v3649 = vsel %vm170, %v3648, %v3639
    %v3650 = vsel %vm172, %v3649, %v3641
    %v3651 = vsel %vm174, %v3650, %v3643
    %v3652 = vld [vmem:[%s3] sm:$0xff]
    %v3653 = vld [vmem:[%s19] sm:$0xff]
    %v3654 = vld [vmem:[%s19 + $0x8] sm:$0xff]
    %v3655 = vld [vmem:[%s19 + $0x10] sm:$0xff]
    %v3656 = vld [vmem:[%s19 + $0x18] sm:$0xff]
    %v3658 = vsel %vm239, %v3652, 0
    %3660 = vmatprep.subr.mxu0 0.0
    %3661 = vmatpush1.msra.mxu0 %v3653
    %3662 = vmatprep.subr.mxu0 0.0
    %3663 = vmatpush1.msra.mxu0 %v3654
    %3664 = vmatprep.subr.mxu0 0.0
    %3665 = vmatpush1.msra.mxu0 %v3655
    %3666 = vmatprep.subr.mxu0 0.0
    %3667 = vmatpush1.msra.mxu0 %v3656
    %3668 = vmatprep.subr.mxu0 0.0
    %3669 = vmatpush1.msra.mxu0 0.0
    %3670 = vmatprep.subr.mxu0 0.0
    %3671 = vmatpush1.msra.mxu0 0.0
    %3672 = vmatprep.subr.mxu0 0.0
    %3673 = vmatpush1.msra.mxu0 0.0
    %3674 = vmatprep.subr.mxu0 0.0
    %3675 = vmatpush1.msra.mxu0 0.0
    %3676 = vmatprep.subr.mxu0 0.0
    %3677 = vmatpush1.msra.mxu0 0.0
    %3678 = vmatprep.subr.mxu0 0.0
    %3679 = vmatpush1.msra.mxu0 0.0
    %3680 = vmatprep.subr.mxu0 0.0
    %3681 = vmatpush1.msra.mxu0 0.0
    %3682 = vmatprep.subr.mxu0 0.0
    %3683 = vmatpush1.msra.mxu0 0.0
    %3684 = vmatprep.subr.mxu0 0.0
    %3685 = vmatpush1.msra.mxu0 0.0
    %3686 = vmatprep.subr.mxu0 0.0
    %3687 = vmatpush1.msra.mxu0 0.0
    %3688 = vmatprep.subr.mxu0 0.0
    %3689 = vmatpush1.msra.mxu0 0.0
    %3690 = vmatprep.subr.mxu0 0.0
    %3691 = vmatpush1.msra.mxu0 0.0
    %3692 = vmatprep.subr.mxu0 0.0
    %3693 = vmatpush1.msra.mxu0 0.0
    %3694 = vmatprep.subr.mxu0 0.0
    %3695 = vmatpush1.msra.mxu0 0.0
    %3696 = vmatprep.subr.mxu0 0.0
    %3697 = vmatpush1.msra.mxu0 0.0
    %3698 = vmatprep.subr.mxu0 0.0
    %3699 = vmatpush1.msra.mxu0 0.0
    %3700 = vmatprep.subr.mxu0 0.0
    %3701 = vmatpush1.msra.mxu0 0.0
    %3702 = vmatprep.subr.mxu0 0.0
    %3703 = vmatpush1.msra.mxu0 0.0
    %3704 = vmatprep.subr.mxu0 0.0
    %3705 = vmatpush1.msra.mxu0 0.0
    %3706 = vmatprep.subr.mxu0 0.0
    %3707 = vmatpush1.msra.mxu0 0.0
    %3708 = vmatprep.subr.mxu0 0.0
    %3709 = vmatpush1.msra.mxu0 0.0
    %3710 = vmatprep.subr.mxu0 0.0
    %3711 = vmatpush1.msra.mxu0 0.0
    %3712 = vmatprep.subr.mxu0 0.0
    %3713 = vmatpush1.msra.mxu0 0.0
    %3714 = vmatprep.subr.mxu0 0.0
    %3715 = vmatpush1.msra.mxu0 0.0
    %3716 = vmatprep.subr.mxu0 0.0
    %3717 = vmatpush1.msra.mxu0 0.0
    %3718 = vmatprep.subr.mxu0 0.0
    %3719 = vmatpush1.msra.mxu0 0.0
    %3720 = vmatprep.subr.mxu0 0.0
    %3721 = vmatpush1.msra.mxu0 0.0
    %3722 = vmatprep.subr.mxu0 0.0
    %3723 = vmatpush1.msra.mxu0 0.0
    %3724 = vmatprep.mubr.f32.mxu0 0.0
    %3725 = vmatmul.mubr.f32.gmra.mrb[0].mxu0 %v3658
    %v3726 = vpop.f32.mrb[0].mxu0
    %v3727 = vadd.f32 0.0, %v3726
    %v3728 = vpop.f32.mrb[0].mxu0
    %3729 = vdwg.mxu0
    %v3730 = vstv %s114
    %v3731 = vmul.f32 %v3730, %v3727
    %v3732 = vld [vmem:[%s17] sm:$0xff]
    %v3733 = vld [vmem:[%s17 + $0x8] sm:$0xff]
    %v3734 = vld [vmem:[%s17 + $0x10] sm:$0xff]
    %v3735 = vld [vmem:[%s17 + $0x18] sm:$0xff]
    %3737 = vrot.lane.b32.xlu0 %v3631, 32
    %v3738 = vpop.permute.xlu0 %3737
    %v3739 = vsel %vm239, %v3738, 0
    %3741 = vmatprep.subr.mxu0 0.0
    %3742 = vmatpush1.msra.mxu0 %v3732
    %3743 = vmatprep.subr.mxu0 0.0
    %3744 = vmatpush1.msra.mxu0 %v3733
    %3745 = vmatprep.subr.mxu0 0.0
    %3746 = vmatpush1.msra.mxu0 %v3734
    %3747 = vmatprep.subr.mxu0 0.0
    %3748 = vmatpush1.msra.mxu0 %v3735
    %3749 = vmatprep.subr.mxu0 0.0
    %3750 = vmatpush1.msra.mxu0 0.0
    %3751 = vmatprep.subr.mxu0 0.0
    %3752 = vmatpush1.msra.mxu0 0.0
    %3753 = vmatprep.subr.mxu0 0.0
    %3754 = vmatpush1.msra.mxu0 0.0
    %3755 = vmatprep.subr.mxu0 0.0
    %3756 = vmatpush1.msra.mxu0 0.0
    %3757 = vmatprep.subr.mxu0 0.0
    %3758 = vmatpush1.msra.mxu0 0.0
    %3759 = vmatprep.subr.mxu0 0.0
    %3760 = vmatpush1.msra.mxu0 0.0
    %3761 = vmatprep.subr.mxu0 0.0
    %3762 = vmatpush1.msra.mxu0 0.0
    %3763 = vmatprep.subr.mxu0 0.0
    %3764 = vmatpush1.msra.mxu0 0.0
    %3765 = vmatprep.subr.mxu0 0.0
    %3766 = vmatpush1.msra.mxu0 0.0
    %3767 = vmatprep.subr.mxu0 0.0
    %3768 = vmatpush1.msra.mxu0 0.0
    %3769 = vmatprep.subr.mxu0 0.0
    %3770 = vmatpush1.msra.mxu0 0.0
    %3771 = vmatprep.subr.mxu0 0.0
    %3772 = vmatpush1.msra.mxu0 0.0
    %3773 = vmatprep.subr.mxu0 0.0
    %3774 = vmatpush1.msra.mxu0 0.0
    %3775 = vmatprep.subr.mxu0 0.0
    %3776 = vmatpush1.msra.mxu0 0.0
    %3777 = vmatprep.subr.mxu0 0.0
    %3778 = vmatpush1.msra.mxu0 0.0
    %3779 = vmatprep.subr.mxu0 0.0
    %3780 = vmatpush1.msra.mxu0 0.0
    %3781 = vmatprep.subr.mxu0 0.0
    %3782 = vmatpush1.msra.mxu0 0.0
    %3783 = vmatprep.subr.mxu0 0.0
    %3784 = vmatpush1.msra.mxu0 0.0
    %3785 = vmatprep.subr.mxu0 0.0
    %3786 = vmatpush1.msra.mxu0 0.0
    %3787 = vmatprep.subr.mxu0 0.0
    %3788 = vmatpush1.msra.mxu0 0.0
    %3789 = vmatprep.subr.mxu0 0.0
    %3790 = vmatpush1.msra.mxu0 0.0
    %3791 = vmatprep.subr.mxu0 0.0
    %3792 = vmatpush1.msra.mxu0 0.0
    %3793 = vmatprep.subr.mxu0 0.0
    %3794 = vmatpush1.msra.mxu0 0.0
    %3795 = vmatprep.subr.mxu0 0.0
    %3796 = vmatpush1.msra.mxu0 0.0
    %3797 = vmatprep.subr.mxu0 0.0
    %3798 = vmatpush1.msra.mxu0 0.0
    %3799 = vmatprep.subr.mxu0 0.0
    %3800 = vmatpush1.msra.mxu0 0.0
    %3801 = vmatprep.subr.mxu0 0.0
    %3802 = vmatpush1.msra.mxu0 0.0
    %3803 = vmatprep.subr.mxu0 0.0
    %3804 = vmatpush1.msra.mxu0 0.0
    %3805 = vmatprep.mubr.f32.mxu0 0.0
    %3806 = vmatmul.mubr.f32.gmra.mrb[0].mxu0 %v3739
    %v3807 = vpop.f32.mrb[0].mxu0
    %v3808 = vadd.f32 0.0, %v3807
    %v3809 = vpop.f32.mrb[0].mxu0
    %3810 = vdwg.mxu0
    %v3811 = vstv %s115
    %v3812 = vmul.f32 %v3811, %v3808
    %v3813 = vadd.f32 %v3731, %v3812
    %3815 = vrot.lane.b32.xlu0 %v3651, 32
    %v3816 = vpop.permute.xlu0 %3815
    %v3817 = vsel %vm239, %v3816, 0
    %3819 = vmatprep.subr.mxu0 0.0
    %3820 = vmatpush1.msra.mxu0 %v3732
    %3821 = vmatprep.subr.mxu0 0.0
    %3822 = vmatpush1.msra.mxu0 %v3733
    %3823 = vmatprep.subr.mxu0 0.0
    %3824 = vmatpush1.msra.mxu0 %v3734
    %3825 = vmatprep.subr.mxu0 0.0
    %3826 = vmatpush1.msra.mxu0 %v3735
    %3827 = vmatprep.subr.mxu0 0.0
    %3828 = vmatpush1.msra.mxu0 0.0
    %3829 = vmatprep.subr.mxu0 0.0
    %3830 = vmatpush1.msra.mxu0 0.0
    %3831 = vmatprep.subr.mxu0 0.0
    %3832 = vmatpush1.msra.mxu0 0.0
    %3833 = vmatprep.subr.mxu0 0.0
    %3834 = vmatpush1.msra.mxu0 0.0
    %3835 = vmatprep.subr.mxu0 0.0
    %3836 = vmatpush1.msra.mxu0 0.0
    %3837 = vmatprep.subr.mxu0 0.0
    %3838 = vmatpush1.msra.mxu0 0.0
    %3839 = vmatprep.subr.mxu0 0.0
    %3840 = vmatpush1.msra.mxu0 0.0
    %3841 = vmatprep.subr.mxu0 0.0
    %3842 = vmatpush1.msra.mxu0 0.0
    %3843 = vmatprep.subr.mxu0 0.0
    %3844 = vmatpush1.msra.mxu0 0.0
    %3845 = vmatprep.subr.mxu0 0.0
    %3846 = vmatpush1.msra.mxu0 0.0
    %3847 = vmatprep.subr.mxu0 0.0
    %3848 = vmatpush1.msra.mxu0 0.0
    %3849 = vmatprep.subr.mxu0 0.0
    %3850 = vmatpush1.msra.mxu0 0.0
    %3851 = vmatprep.subr.mxu0 0.0
    %3852 = vmatpush1.msra.mxu0 0.0
    %3853 = vmatprep.subr.mxu0 0.0
    %3854 = vmatpush1.msra.mxu0 0.0
    %3855 = vmatprep.subr.mxu0 0.0
    %3856 = vmatpush1.msra.mxu0 0.0
    %3857 = vmatprep.subr.mxu0 0.0
    %3858 = vmatpush1.msra.mxu0 0.0
    %3859 = vmatprep.subr.mxu0 0.0
    %3860 = vmatpush1.msra.mxu0 0.0
    %3861 = vmatprep.subr.mxu0 0.0
    %3862 = vmatpush1.msra.mxu0 0.0
    %3863 = vmatprep.subr.mxu0 0.0
    %3864 = vmatpush1.msra.mxu0 0.0
    %3865 = vmatprep.subr.mxu0 0.0
    %3866 = vmatpush1.msra.mxu0 0.0
    %3867 = vmatprep.subr.mxu0 0.0
    %3868 = vmatpush1.msra.mxu0 0.0
    %3869 = vmatprep.subr.mxu0 0.0
    %3870 = vmatpush1.msra.mxu0 0.0
    %3871 = vmatprep.subr.mxu0 0.0
    %3872 = vmatpush1.msra.mxu0 0.0
    %3873 = vmatprep.subr.mxu0 0.0
    %3874 = vmatpush1.msra.mxu0 0.0
    %3875 = vmatprep.subr.mxu0 0.0
    %3876 = vmatpush1.msra.mxu0 0.0
    %3877 = vmatprep.subr.mxu0 0.0
    %3878 = vmatpush1.msra.mxu0 0.0
    %3879 = vmatprep.subr.mxu0 0.0
    %3880 = vmatpush1.msra.mxu0 0.0
    %3881 = vmatprep.subr.mxu0 0.0
    %3882 = vmatpush1.msra.mxu0 0.0
    %3883 = vmatprep.mubr.f32.mxu0 0.0
    %3884 = vmatmul.mubr.f32.gmra.mrb[0].mxu0 %v3817
    %v3885 = vpop.f32.mrb[0].mxu0
    %v3886 = vadd.f32 0.0, %v3885
    %v3887 = vpop.f32.mrb[0].mxu0
    %3888 = vdwg.mxu0
    %v3889 = vstv %s116
    %v3890 = vmul.f32 %v3889, %v3886
    %v3891 = vadd.f32 %v3813, %v3890
    %s3892 = sadd.f32 %s115, %s116
    %v3893 = vld [vmem:[%s18] sm:$0x1]
    %v3894 = vstv %s3892
    %v3895 = vmul.f32 %v3894, %v3893
    %v3897 = vlaneseq
    %v3898 = vshrl.u32 %v3897, 7
    %v3899 = vsub.s32 0, %v3898
    %v3900 = vrot.slane %v3895, %v3899
    %v3902 = vadd.f32 %v3891, %v3900
    %v3903 = vld [vmem:[%s21] sm:$0x1]
    %v3905 = vlaneseq
    %v3906 = vshrl.u32 %v3905, 7
    %v3907 = vsub.s32 0, %v3906
    %v3908 = vrot.slane %v3903, %v3907
    %v3910 = vadd.f32 %v3902, %v3908
    %v3911 = vld [vmem:[%s20] sm:$0xff]
    %v3912 = vld [vmem:[%s20 + $0x8] sm:$0xff]
    %v3913 = vld [vmem:[%s20 + $0x10] sm:$0xff]
    %v3914 = vld [vmem:[%s20 + $0x18] sm:$0xff]
    %3915 = vmatprep.subr.mxu0 0.0
    %3916 = vmatpush1.msra.mxu0 %v3911
    %3917 = vmatprep.subr.mxu0 0.0
    %3918 = vmatpush1.msra.mxu0 %v3912
    %3919 = vmatprep.subr.mxu0 0.0
    %3920 = vmatpush1.msra.mxu0 %v3913
    %3921 = vmatprep.subr.mxu0 0.0
    %3922 = vmatpush1.msra.mxu0 %v3914
    %3923 = vmatprep.subr.mxu0 0.0
    %3924 = vmatpush1.msra.mxu0 0.0
    %3925 = vmatprep.subr.mxu0 0.0
    %3926 = vmatpush1.msra.mxu0 0.0
    %3927 = vmatprep.subr.mxu0 0.0
    %3928 = vmatpush1.msra.mxu0 0.0
    %3929 = vmatprep.subr.mxu0 0.0
    %3930 = vmatpush1.msra.mxu0 0.0
    %3931 = vmatprep.subr.mxu0 0.0
    %3932 = vmatpush1.msra.mxu0 0.0
    %3933 = vmatprep.subr.mxu0 0.0
    %3934 = vmatpush1.msra.mxu0 0.0
    %3935 = vmatprep.subr.mxu0 0.0
    %3936 = vmatpush1.msra.mxu0 0.0
    %3937 = vmatprep.subr.mxu0 0.0
    %3938 = vmatpush1.msra.mxu0 0.0
    %3939 = vmatprep.subr.mxu0 0.0
    %3940 = vmatpush1.msra.mxu0 0.0
    %3941 = vmatprep.subr.mxu0 0.0
    %3942 = vmatpush1.msra.mxu0 0.0
    %3943 = vmatprep.subr.mxu0 0.0
    %3944 = vmatpush1.msra.mxu0 0.0
    %3945 = vmatprep.subr.mxu0 0.0
    %3946 = vmatpush1.msra.mxu0 0.0
    %3947 = vmatprep.subr.mxu0 0.0
    %3948 = vmatpush1.msra.mxu0 0.0
    %3949 = vmatprep.subr.mxu0 0.0
    %3950 = vmatpush1.msra.mxu0 0.0
    %3951 = vmatprep.subr.mxu0 0.0
    %3952 = vmatpush1.msra.mxu0 0.0
    %3953 = vmatprep.subr.mxu0 0.0
    %3954 = vmatpush1.msra.mxu0 0.0
    %3955 = vmatprep.subr.mxu0 0.0
    %3956 = vmatpush1.msra.mxu0 0.0
    %3957 = vmatprep.subr.mxu0 0.0
    %3958 = vmatpush1.msra.mxu0 0.0
    %3959 = vmatprep.subr.mxu0 0.0
    %3960 = vmatpush1.msra.mxu0 0.0
    %3961 = vmatprep.subr.mxu0 0.0
    %3962 = vmatpush1.msra.mxu0 0.0
    %3963 = vmatprep.subr.mxu0 0.0
    %3964 = vmatpush1.msra.mxu0 0.0
    %3965 = vmatprep.subr.mxu0 0.0
    %3966 = vmatpush1.msra.mxu0 0.0
    %3967 = vmatprep.subr.mxu0 0.0
    %3968 = vmatpush1.msra.mxu0 0.0
    %3969 = vmatprep.subr.mxu0 0.0
    %3970 = vmatpush1.msra.mxu0 0.0
    %3971 = vmatprep.subr.mxu0 0.0
    %3972 = vmatpush1.msra.mxu0 0.0
    %3973 = vmatprep.subr.mxu0 0.0
    %3974 = vmatpush1.msra.mxu0 0.0
    %3975 = vmatprep.subr.mxu0 0.0
    %3976 = vmatpush1.msra.mxu0 0.0
    %3977 = vmatprep.subr.mxu0 0.0
    %3978 = vmatpush1.msra.mxu0 0.0
    %3979 = vmatprep.mubr.f32.mxu0 0.0
    %3980 = vmatmul.mubr.f32.gmra.mrb[0].mxu0 %v406
    %v3981 = vpop.f32.mrb[0].mxu0
    %v3982 = vadd.f32 0.0, %v3981
    %v3983 = vpop.f32.mrb[0].mxu0
    %3984 = vdwg.mxu0
    %v3985 = vadd.f32 %v3910, %v3982
    %v3986 = vxor.u32 %v3985, 2147483648
    %v3987 = vmul.f32 %v3986, 1.442695
    %v3988 = vpow.pop %v3987
    %v3989 = vadd.f32 %v3988, 1.0
    %v3990 = vrcp.pop %v3989
    %v3991 = vmul.f32 1.0, %v3990
    %v3992 = vtanh.pop %v3985
    %v3993 = vmul.f32 %v3991, 0.0
    %3995 = vrot.lane.b32.xlu0 %v3992, 64
    %v3996 = vpop.permute.xlu0 %3995
    %v3998 = vmul.f32 %v3991, %v3996
    %4000 = vrot.lane.b32.xlu0 %v3998, 32
    %v4001 = vpop.permute.xlu0 %4000
    %v4003 = vadd.f32 %v3993, %v4001
    %v4004 = vtanh.pop %v4003
    %4006 = vrot.lane.b32.xlu0 %v4004, 64
    %v4007 = vpop.permute.xlu0 %4006
    %v4009 = vmul.f32 %v3991, %v4007
    %v4010 = vadd.f32 %v4009, 0.0
    %4012 = vrot.lane.b32.xlu0 %v4009, 32
    %v4013 = vpop.permute.xlu0 %4012
    %v4014 = vsel %vm239, %v4013, 0
    %4016 = vmatprep.subr.mxu0 0.0
    %4017 = vmatpush1.msra.mxu0 %v3911
    %4018 = vmatprep.subr.mxu0 0.0
    %4019 = vmatpush1.msra.mxu0 %v3912
    %4020 = vmatprep.subr.mxu0 0.0
    %4021 = vmatpush1.msra.mxu0 %v3913
    %4022 = vmatprep.subr.mxu0 0.0
    %4023 = vmatpush1.msra.mxu0 %v3914
    %4024 = vmatprep.subr.mxu0 0.0
    %4025 = vmatpush1.msra.mxu0 0.0
    %4026 = vmatprep.subr.mxu0 0.0
    %4027 = vmatpush1.msra.mxu0 0.0
    %4028 = vmatprep.subr.mxu0 0.0
    %4029 = vmatpush1.msra.mxu0 0.0
    %4030 = vmatprep.subr.mxu0 0.0
    %4031 = vmatpush1.msra.mxu0 0.0
    %4032 = vmatprep.subr.mxu0 0.0
    %4033 = vmatpush1.msra.mxu0 0.0
    %4034 = vmatprep.subr.mxu0 0.0
    %4035 = vmatpush1.msra.mxu0 0.0
    %4036 = vmatprep.subr.mxu0 0.0
    %4037 = vmatpush1.msra.mxu0 0.0
    %4038 = vmatprep.subr.mxu0 0.0
    %4039 = vmatpush1.msra.mxu0 0.0
    %4040 = vmatprep.subr.mxu0 0.0
    %4041 = vmatpush1.msra.mxu0 0.0
    %4042 = vmatprep.subr.mxu0 0.0
    %4043 = vmatpush1.msra.mxu0 0.0
    %4044 = vmatprep.subr.mxu0 0.0
    %4045 = vmatpush1.msra.mxu0 0.0
    %4046 = vmatprep.subr.mxu0 0.0
    %4047 = vmatpush1.msra.mxu0 0.0
    %4048 = vmatprep.subr.mxu0 0.0
    %4049 = vmatpush1.msra.mxu0 0.0
    %4050 = vmatprep.subr.mxu0 0.0
    %4051 = vmatpush1.msra.mxu0 0.0
    %4052 = vmatprep.subr.mxu0 0.0
    %4053 = vmatpush1.msra.mxu0 0.0
    %4054 = vmatprep.subr.mxu0 0.0
    %4055 = vmatpush1.msra.mxu0 0.0
    %4056 = vmatprep.subr.mxu0 0.0
    %4057 = vmatpush1.msra.mxu0 0.0
    %4058 = vmatprep.subr.mxu0 0.0
    %4059 = vmatpush1.msra.mxu0 0.0
    %4060 = vmatprep.subr.mxu0 0.0
    %4061 = vmatpush1.msra.mxu0 0.0
    %4062 = vmatprep.subr.mxu0 0.0
    %4063 = vmatpush1.msra.mxu0 0.0
    %4064 = vmatprep.subr.mxu0 0.0
    %4065 = vmatpush1.msra.mxu0 0.0
    %4066 = vmatprep.subr.mxu0 0.0
    %4067 = vmatpush1.msra.mxu0 0.0
    %4068 = vmatprep.subr.mxu0 0.0
    %4069 = vmatpush1.msra.mxu0 0.0
    %4070 = vmatprep.subr.mxu0 0.0
    %4071 = vmatpush1.msra.mxu0 0.0
    %4072 = vmatprep.subr.mxu0 0.0
    %4073 = vmatpush1.msra.mxu0 0.0
    %4074 = vmatprep.subr.mxu0 0.0
    %4075 = vmatpush1.msra.mxu0 0.0
    %4076 = vmatprep.subr.mxu0 0.0
    %4077 = vmatpush1.msra.mxu0 0.0
    %4078 = vmatprep.subr.mxu0 0.0
    %4079 = vmatpush1.msra.mxu0 0.0
    %4080 = vmatprep.mubr.f32.mxu0 0.0
    %4081 = vmatmul.mubr.f32.gmra.mrb[0].mxu0 %v4014
    %v4082 = vpop.f32.mrb[0].mxu0
    %v4083 = vadd.f32 0.0, %v4082
    %v4084 = vpop.f32.mrb[0].mxu0
    %4085 = vdwg.mxu0
    %v4087 = vrot.slane %v4083, 7
    %v4089 = vadd.f32 %v3910, %v4087
    %v4090 = vxor.u32 %v4089, 2147483648
    %v4091 = vmul.f32 %v4090, 1.442695
    %v4092 = vpow.pop %v4091
    %v4093 = vadd.f32 %v4092, 1.0
    %v4094 = vrcp.pop %v4093
    %v4095 = vmul.f32 1.0, %v4094
    %v4096 = vtanh.pop %v4089
    %v4098 = vrot.slane %v4003, 7
    %v4100 = vmul.f32 %v4095, %v4098
    %4102 = vrot.lane.b32.xlu0 %v4096, 64
    %v4103 = vpop.permute.xlu0 %4102
    %v4105 = vmul.f32 %v4095, %v4103
    %4107 = vrot.lane.b32.xlu0 %v4105, 32
    %v4108 = vpop.permute.xlu0 %4107
    %v4110 = vadd.f32 %v4100, %v4108
    %v4111 = vtanh.pop %v4110
    %4113 = vrot.lane.b32.xlu0 %v4111, 64
    %v4114 = vpop.permute.xlu0 %4113
    %v4116 = vmul.f32 %v4095, %v4114
    %v4118 = vrot.slane %v4116, 1
    %v4120 = vadd.f32 %v4010, %v4118
    %4121 = vrot.lane.b32.xlu0 %v4118, 32
    %v4122 = vpop.permute.xlu0 %4121
    %v4123 = vsel %vm239, %v4122, 0
    %4125 = vmatprep.subr.mxu0 0.0
    %4126 = vmatpush1.msra.mxu0 %v3911
    %4127 = vmatprep.subr.mxu0 0.0
    %4128 = vmatpush1.msra.mxu0 %v3912
    %4129 = vmatprep.subr.mxu0 0.0
    %4130 = vmatpush1.msra.mxu0 %v3913
    %4131 = vmatprep.subr.mxu0 0.0
    %4132 = vmatpush1.msra.mxu0 %v3914
    %4133 = vmatprep.subr.mxu0 0.0
    %4134 = vmatpush1.msra.mxu0 0.0
    %4135 = vmatprep.subr.mxu0 0.0
    %4136 = vmatpush1.msra.mxu0 0.0
    %4137 = vmatprep.subr.mxu0 0.0
    %4138 = vmatpush1.msra.mxu0 0.0
    %4139 = vmatprep.subr.mxu0 0.0
    %4140 = vmatpush1.msra.mxu0 0.0
    %4141 = vmatprep.subr.mxu0 0.0
    %4142 = vmatpush1.msra.mxu0 0.0
    %4143 = vmatprep.subr.mxu0 0.0
    %4144 = vmatpush1.msra.mxu0 0.0
    %4145 = vmatprep.subr.mxu0 0.0
    %4146 = vmatpush1.msra.mxu0 0.0
    %4147 = vmatprep.subr.mxu0 0.0
    %4148 = vmatpush1.msra.mxu0 0.0
    %4149 = vmatprep.subr.mxu0 0.0
    %4150 = vmatpush1.msra.mxu0 0.0
    %4151 = vmatprep.subr.mxu0 0.0
    %4152 = vmatpush1.msra.mxu0 0.0
    %4153 = vmatprep.subr.mxu0 0.0
    %4154 = vmatpush1.msra.mxu0 0.0
    %4155 = vmatprep.subr.mxu0 0.0
    %4156 = vmatpush1.msra.mxu0 0.0
    %4157 = vmatprep.subr.mxu0 0.0
    %4158 = vmatpush1.msra.mxu0 0.0
    %4159 = vmatprep.subr.mxu0 0.0
    %4160 = vmatpush1.msra.mxu0 0.0
    %4161 = vmatprep.subr.mxu0 0.0
    %4162 = vmatpush1.msra.mxu0 0.0
    %4163 = vmatprep.subr.mxu0 0.0
    %4164 = vmatpush1.msra.mxu0 0.0
    %4165 = vmatprep.subr.mxu0 0.0
    %4166 = vmatpush1.msra.mxu0 0.0
    %4167 = vmatprep.subr.mxu0 0.0
    %4168 = vmatpush1.msra.mxu0 0.0
    %4169 = vmatprep.subr.mxu0 0.0
    %4170 = vmatpush1.msra.mxu0 0.0
    %4171 = vmatprep.subr.mxu0 0.0
    %4172 = vmatpush1.msra.mxu0 0.0
    %4173 = vmatprep.subr.mxu0 0.0
    %4174 = vmatpush1.msra.mxu0 0.0
    %4175 = vmatprep.subr.mxu0 0.0
    %4176 = vmatpush1.msra.mxu0 0.0
    %4177 = vmatprep.subr.mxu0 0.0
    %4178 = vmatpush1.msra.mxu0 0.0
    %4179 = vmatprep.subr.mxu0 0.0
    %4180 = vmatpush1.msra.mxu0 0.0
    %4181 = vmatprep.subr.mxu0 0.0
    %4182 = vmatpush1.msra.mxu0 0.0
    %4183 = vmatprep.subr.mxu0 0.0
    %4184 = vmatpush1.msra.mxu0 0.0
    %4185 = vmatprep.subr.mxu0 0.0
    %4186 = vmatpush1.msra.mxu0 0.0
    %4187 = vmatprep.subr.mxu0 0.0
    %4188 = vmatpush1.msra.mxu0 0.0
    %4189 = vmatprep.mubr.f32.mxu0 0.0
    %4190 = vmatmul.mubr.f32.gmra.mrb[0].mxu0 %v4123
    %v4191 = vpop.f32.mrb[0].mxu0
    %v4192 = vadd.f32 0.0, %v4191
    %v4193 = vpop.f32.mrb[0].mxu0
    %4194 = vdwg.mxu0
    %v4196 = vrot.slane %v4192, 6
    %v4198 = vadd.f32 %v3910, %v4196
    %v4199 = vxor.u32 %v4198, 2147483648
    %v4200 = vmul.f32 %v4199, 1.442695
    %v4201 = vpow.pop %v4200
    %v4202 = vadd.f32 %v4201, 1.0
    %v4203 = vrcp.pop %v4202
    %v4204 = vmul.f32 1.0, %v4203
    %v4205 = vtanh.pop %v4198
    %v4207 = vrot.slane %v4110, 7
    %v4209 = vmul.f32 %v4204, %v4207
    %4211 = vrot.lane.b32.xlu0 %v4205, 64
    %v4212 = vpop.permute.xlu0 %4211
    %v4214 = vmul.f32 %v4204, %v4212
    %4216 = vrot.lane.b32.xlu0 %v4214, 32
    %v4217 = vpop.permute.xlu0 %4216
    %v4219 = vadd.f32 %v4209, %v4217
    %v4220 = vtanh.pop %v4219
    %4222 = vrot.lane.b32.xlu0 %v4220, 64
    %v4223 = vpop.permute.xlu0 %4222
    %v4225 = vmul.f32 %v4204, %v4223
    %v4227 = vrot.slane %v4225, 2
    %v4229 = vadd.f32 %v4120, %v4227
    %4230 = vrot.lane.b32.xlu0 %v4227, 32
    %v4231 = vpop.permute.xlu0 %4230
    %v4232 = vsel %vm239, %v4231, 0
    %4234 = vmatprep.subr.mxu0 0.0
    %4235 = vmatpush1.msra.mxu0 %v3911
    %4236 = vmatprep.subr.mxu0 0.0
    %4237 = vmatpush1.msra.mxu0 %v3912
    %4238 = vmatprep.subr.mxu0 0.0
    %4239 = vmatpush1.msra.mxu0 %v3913
    %4240 = vmatprep.subr.mxu0 0.0
    %4241 = vmatpush1.msra.mxu0 %v3914
    %4242 = vmatprep.subr.mxu0 0.0
    %4243 = vmatpush1.msra.mxu0 0.0
    %4244 = vmatprep.subr.mxu0 0.0
    %4245 = vmatpush1.msra.mxu0 0.0
    %4246 = vmatprep.subr.mxu0 0.0
    %4247 = vmatpush1.msra.mxu0 0.0
    %4248 = vmatprep.subr.mxu0 0.0
    %4249 = vmatpush1.msra.mxu0 0.0
    %4250 = vmatprep.subr.mxu0 0.0
    %4251 = vmatpush1.msra.mxu0 0.0
    %4252 = vmatprep.subr.mxu0 0.0
    %4253 = vmatpush1.msra.mxu0 0.0
    %4254 = vmatprep.subr.mxu0 0.0
    %4255 = vmatpush1.msra.mxu0 0.0
    %4256 = vmatprep.subr.mxu0 0.0
    %4257 = vmatpush1.msra.mxu0 0.0
    %4258 = vmatprep.subr.mxu0 0.0
    %4259 = vmatpush1.msra.mxu0 0.0
    %4260 = vmatprep.subr.mxu0 0.0
    %4261 = vmatpush1.msra.mxu0 0.0
    %4262 = vmatprep.subr.mxu0 0.0
    %4263 = vmatpush1.msra.mxu0 0.0
    %4264 = vmatprep.subr.mxu0 0.0
    %4265 = vmatpush1.msra.mxu0 0.0
    %4266 = vmatprep.subr.mxu0 0.0
    %4267 = vmatpush1.msra.mxu0 0.0
    %4268 = vmatprep.subr.mxu0 0.0
    %4269 = vmatpush1.msra.mxu0 0.0
    %4270 = vmatprep.subr.mxu0 0.0
    %4271 = vmatpush1.msra.mxu0 0.0
    %4272 = vmatprep.subr.mxu0 0.0
    %4273 = vmatpush1.msra.mxu0 0.0
    %4274 = vmatprep.subr.mxu0 0.0
    %4275 = vmatpush1.msra.mxu0 0.0
    %4276 = vmatprep.subr.mxu0 0.0
    %4277 = vmatpush1.msra.mxu0 0.0
    %4278 = vmatprep.subr.mxu0 0.0
    %4279 = vmatpush1.msra.mxu0 0.0
    %4280 = vmatprep.subr.mxu0 0.0
    %4281 = vmatpush1.msra.mxu0 0.0
    %4282 = vmatprep.subr.mxu0 0.0
    %4283 = vmatpush1.msra.mxu0 0.0
    %4284 = vmatprep.subr.mxu0 0.0
    %4285 = vmatpush1.msra.mxu0 0.0
    %4286 = vmatprep.subr.mxu0 0.0
    %4287 = vmatpush1.msra.mxu0 0.0
    %4288 = vmatprep.subr.mxu0 0.0
    %4289 = vmatpush1.msra.mxu0 0.0
    %4290 = vmatprep.subr.mxu0 0.0
    %4291 = vmatpush1.msra.mxu0 0.0
    %4292 = vmatprep.subr.mxu0 0.0
    %4293 = vmatpush1.msra.mxu0 0.0
    %4294 = vmatprep.subr.mxu0 0.0
    %4295 = vmatpush1.msra.mxu0 0.0
    %4296 = vmatprep.subr.mxu0 0.0
    %4297 = vmatpush1.msra.mxu0 0.0
    %4298 = vmatprep.mubr.f32.mxu0 0.0
    %4299 = vmatmul.mubr.f32.gmra.mrb[0].mxu0 %v4232
    %v4300 = vpop.f32.mrb[0].mxu0
    %v4301 = vadd.f32 0.0, %v4300
    %v4302 = vpop.f32.mrb[0].mxu0
    %4303 = vdwg.mxu0
    %v4305 = vrot.slane %v4301, 5
    %v4307 = vadd.f32 %v3910, %v4305
    %v4308 = vxor.u32 %v4307, 2147483648
    %v4309 = vmul.f32 %v4308, 1.442695
    %v4310 = vpow.pop %v4309
    %v4311 = vadd.f32 %v4310, 1.0
    %v4312 = vrcp.pop %v4311
    %v4313 = vmul.f32 1.0, %v4312
    %v4314 = vtanh.pop %v4307
    %v4316 = vrot.slane %v4219, 7
    %v4318 = vmul.f32 %v4313, %v4316
    %4320 = vrot.lane.b32.xlu0 %v4314, 64
    %v4321 = vpop.permute.xlu0 %4320
    %v4323 = vmul.f32 %v4313, %v4321
    %4325 = vrot.lane.b32.xlu0 %v4323, 32
    %v4326 = vpop.permute.xlu0 %4325
    %v4328 = vadd.f32 %v4318, %v4326
    %v4329 = vtanh.pop %v4328
    %4331 = vrot.lane.b32.xlu0 %v4329, 64
    %v4332 = vpop.permute.xlu0 %4331
    %v4334 = vmul.f32 %v4313, %v4332
    %v4336 = vrot.slane %v4334, 3
    %v4338 = vadd.f32 %v4229, %v4336
    %4339 = vrot.lane.b32.xlu0 %v4336, 32
    %v4340 = vpop.permute.xlu0 %4339
    %v4341 = vsel %vm239, %v4340, 0
    %4343 = vmatprep.subr.mxu0 0.0
    %4344 = vmatpush1.msra.mxu0 %v3911
    %4345 = vmatprep.subr.mxu0 0.0
    %4346 = vmatpush1.msra.mxu0 %v3912
    %4347 = vmatprep.subr.mxu0 0.0
    %4348 = vmatpush1.msra.mxu0 %v3913
    %4349 = vmatprep.subr.mxu0 0.0
    %4350 = vmatpush1.msra.mxu0 %v3914
    %4351 = vmatprep.subr.mxu0 0.0
    %4352 = vmatpush1.msra.mxu0 0.0
    %4353 = vmatprep.subr.mxu0 0.0
    %4354 = vmatpush1.msra.mxu0 0.0
    %4355 = vmatprep.subr.mxu0 0.0
    %4356 = vmatpush1.msra.mxu0 0.0
    %4357 = vmatprep.subr.mxu0 0.0
    %4358 = vmatpush1.msra.mxu0 0.0
    %4359 = vmatprep.subr.mxu0 0.0
    %4360 = vmatpush1.msra.mxu0 0.0
    %4361 = vmatprep.subr.mxu0 0.0
    %4362 = vmatpush1.msra.mxu0 0.0
    %4363 = vmatprep.subr.mxu0 0.0
    %4364 = vmatpush1.msra.mxu0 0.0
    %4365 = vmatprep.subr.mxu0 0.0
    %4366 = vmatpush1.msra.mxu0 0.0
    %4367 = vmatprep.subr.mxu0 0.0
    %4368 = vmatpush1.msra.mxu0 0.0
    %4369 = vmatprep.subr.mxu0 0.0
    %4370 = vmatpush1.msra.mxu0 0.0
    %4371 = vmatprep.subr.mxu0 0.0
    %4372 = vmatpush1.msra.mxu0 0.0
    %4373 = vmatprep.subr.mxu0 0.0
    %4374 = vmatpush1.msra.mxu0 0.0
    %4375 = vmatprep.subr.mxu0 0.0
    %4376 = vmatpush1.msra.mxu0 0.0
    %4377 = vmatprep.subr.mxu0 0.0
    %4378 = vmatpush1.msra.mxu0 0.0
    %4379 = vmatprep.subr.mxu0 0.0
    %4380 = vmatpush1.msra.mxu0 0.0
    %4381 = vmatprep.subr.mxu0 0.0
    %4382 = vmatpush1.msra.mxu0 0.0
    %4383 = vmatprep.subr.mxu0 0.0
    %4384 = vmatpush1.msra.mxu0 0.0
    %4385 = vmatprep.subr.mxu0 0.0
    %4386 = vmatpush1.msra.mxu0 0.0
    %4387 = vmatprep.subr.mxu0 0.0
    %4388 = vmatpush1.msra.mxu0 0.0
    %4389 = vmatprep.subr.mxu0 0.0
    %4390 = vmatpush1.msra.mxu0 0.0
    %4391 = vmatprep.subr.mxu0 0.0
    %4392 = vmatpush1.msra.mxu0 0.0
    %4393 = vmatprep.subr.mxu0 0.0
    %4394 = vmatpush1.msra.mxu0 0.0
    %4395 = vmatprep.subr.mxu0 0.0
    %4396 = vmatpush1.msra.mxu0 0.0
    %4397 = vmatprep.subr.mxu0 0.0
    %4398 = vmatpush1.msra.mxu0 0.0
    %4399 = vmatprep.subr.mxu0 0.0
    %4400 = vmatpush1.msra.mxu0 0.0
    %4401 = vmatprep.subr.mxu0 0.0
    %4402 = vmatpush1.msra.mxu0 0.0
    %4403 = vmatprep.subr.mxu0 0.0
    %4404 = vmatpush1.msra.mxu0 0.0
    %4405 = vmatprep.subr.mxu0 0.0
    %4406 = vmatpush1.msra.mxu0 0.0
    %4407 = vmatprep.mubr.f32.mxu0 0.0
    %4408 = vmatmul.mubr.f32.gmra.mrb[0].mxu0 %v4341
    %v4409 = vpop.f32.mrb[0].mxu0
    %v4410 = vadd.f32 0.0, %v4409
    %v4411 = vpop.f32.mrb[0].mxu0
    %4412 = vdwg.mxu0
    %v4414 = vrot.slane %v4410, 4
    %v4416 = vadd.f32 %v3910, %v4414
    %v4417 = vxor.u32 %v4416, 2147483648
    %v4418 = vmul.f32 %v4417, 1.442695
    %v4419 = vpow.pop %v4418
    %v4420 = vadd.f32 %v4419, 1.0
    %v4421 = vrcp.pop %v4420
    %v4422 = vmul.f32 1.0, %v4421
    %v4423 = vtanh.pop %v4416
    %v4425 = vrot.slane %v4328, 7
    %v4427 = vmul.f32 %v4422, %v4425
    %4429 = vrot.lane.b32.xlu0 %v4423, 64
    %v4430 = vpop.permute.xlu0 %4429
    %v4432 = vmul.f32 %v4422, %v4430
    %4434 = vrot.lane.b32.xlu0 %v4432, 32
    %v4435 = vpop.permute.xlu0 %4434
    %v4437 = vadd.f32 %v4427, %v4435
    %v4438 = vtanh.pop %v4437
    %4440 = vrot.lane.b32.xlu0 %v4438, 64
    %v4441 = vpop.permute.xlu0 %4440
    %v4443 = vmul.f32 %v4422, %v4441
    %v4445 = vrot.slane %v4443, 4
    %v4447 = vadd.f32 %v4338, %v4445
    %4448 = vrot.lane.b32.xlu0 %v4445, 32
    %v4449 = vpop.permute.xlu0 %4448
    %v4450 = vsel %vm239, %v4449, 0
    %4452 = vmatprep.subr.mxu0 0.0
    %4453 = vmatpush1.msra.mxu0 %v3911
    %4454 = vmatprep.subr.mxu0 0.0
    %4455 = vmatpush1.msra.mxu0 %v3912
    %4456 = vmatprep.subr.mxu0 0.0
    %4457 = vmatpush1.msra.mxu0 %v3913
    %4458 = vmatprep.subr.mxu0 0.0
    %4459 = vmatpush1.msra.mxu0 %v3914
    %4460 = vmatprep.subr.mxu0 0.0
    %4461 = vmatpush1.msra.mxu0 0.0
    %4462 = vmatprep.subr.mxu0 0.0
    %4463 = vmatpush1.msra.mxu0 0.0
    %4464 = vmatprep.subr.mxu0 0.0
    %4465 = vmatpush1.msra.mxu0 0.0
    %4466 = vmatprep.subr.mxu0 0.0
    %4467 = vmatpush1.msra.mxu0 0.0
    %4468 = vmatprep.subr.mxu0 0.0
    %4469 = vmatpush1.msra.mxu0 0.0
    %4470 = vmatprep.subr.mxu0 0.0
    %4471 = vmatpush1.msra.mxu0 0.0
    %4472 = vmatprep.subr.mxu0 0.0
    %4473 = vmatpush1.msra.mxu0 0.0
    %4474 = vmatprep.subr.mxu0 0.0
    %4475 = vmatpush1.msra.mxu0 0.0
    %4476 = vmatprep.subr.mxu0 0.0
    %4477 = vmatpush1.msra.mxu0 0.0
    %4478 = vmatprep.subr.mxu0 0.0
    %4479 = vmatpush1.msra.mxu0 0.0
    %4480 = vmatprep.subr.mxu0 0.0
    %4481 = vmatpush1.msra.mxu0 0.0
    %4482 = vmatprep.subr.mxu0 0.0
    %4483 = vmatpush1.msra.mxu0 0.0
    %4484 = vmatprep.subr.mxu0 0.0
    %4485 = vmatpush1.msra.mxu0 0.0
    %4486 = vmatprep.subr.mxu0 0.0
    %4487 = vmatpush1.msra.mxu0 0.0
    %4488 = vmatprep.subr.mxu0 0.0
    %4489 = vmatpush1.msra.mxu0 0.0
    %4490 = vmatprep.subr.mxu0 0.0
    %4491 = vmatpush1.msra.mxu0 0.0
    %4492 = vmatprep.subr.mxu0 0.0
    %4493 = vmatpush1.msra.mxu0 0.0
    %4494 = vmatprep.subr.mxu0 0.0
    %4495 = vmatpush1.msra.mxu0 0.0
    %4496 = vmatprep.subr.mxu0 0.0
    %4497 = vmatpush1.msra.mxu0 0.0
    %4498 = vmatprep.subr.mxu0 0.0
    %4499 = vmatpush1.msra.mxu0 0.0
    %4500 = vmatprep.subr.mxu0 0.0
    %4501 = vmatpush1.msra.mxu0 0.0
    %4502 = vmatprep.subr.mxu0 0.0
    %4503 = vmatpush1.msra.mxu0 0.0
    %4504 = vmatprep.subr.mxu0 0.0
    %4505 = vmatpush1.msra.mxu0 0.0
    %4506 = vmatprep.subr.mxu0 0.0
    %4507 = vmatpush1.msra.mxu0 0.0
    %4508 = vmatprep.subr.mxu0 0.0
    %4509 = vmatpush1.msra.mxu0 0.0
    %4510 = vmatprep.subr.mxu0 0.0
    %4511 = vmatpush1.msra.mxu0 0.0
    %4512 = vmatprep.subr.mxu0 0.0
    %4513 = vmatpush1.msra.mxu0 0.0
    %4514 = vmatprep.subr.mxu0 0.0
    %4515 = vmatpush1.msra.mxu0 0.0
    %4516 = vmatprep.mubr.f32.mxu0 0.0
    %4517 = vmatmul.mubr.f32.gmra.mrb[0].mxu0 %v4450
    %v4518 = vpop.f32.mrb[0].mxu0
    %v4519 = vadd.f32 0.0, %v4518
    %v4520 = vpop.f32.mrb[0].mxu0
    %4521 = vdwg.mxu0
    %v4523 = vrot.slane %v4519, 3
    %v4525 = vadd.f32 %v3910, %v4523
    %v4526 = vxor.u32 %v4525, 2147483648
    %v4527 = vmul.f32 %v4526, 1.442695
    %v4528 = vpow.pop %v4527
    %v4529 = vadd.f32 %v4528, 1.0
    %v4530 = vrcp.pop %v4529
    %v4531 = vmul.f32 1.0, %v4530
    %v4532 = vtanh.pop %v4525
    %v4534 = vrot.slane %v4437, 7
    %v4536 = vmul.f32 %v4531, %v4534
    %4538 = vrot.lane.b32.xlu0 %v4532, 64
    %v4539 = vpop.permute.xlu0 %4538
    %v4541 = vmul.f32 %v4531, %v4539
    %4543 = vrot.lane.b32.xlu0 %v4541, 32
    %v4544 = vpop.permute.xlu0 %4543
    %v4546 = vadd.f32 %v4536, %v4544
    %v4547 = vtanh.pop %v4546
    %4549 = vrot.lane.b32.xlu0 %v4547, 64
    %v4550 = vpop.permute.xlu0 %4549
    %v4552 = vmul.f32 %v4531, %v4550
    %v4554 = vrot.slane %v4552, 5
    %v4556 = vadd.f32 %v4447, %v4554
    %4557 = vrot.lane.b32.xlu0 %v4554, 32
    %v4558 = vpop.permute.xlu0 %4557
    %v4559 = vsel %vm239, %v4558, 0
    %4561 = vmatprep.subr.mxu0 0.0
    %4562 = vmatpush1.msra.mxu0 %v3911
    %4563 = vmatprep.subr.mxu0 0.0
    %4564 = vmatpush1.msra.mxu0 %v3912
    %4565 = vmatprep.subr.mxu0 0.0
    %4566 = vmatpush1.msra.mxu0 %v3913
    %4567 = vmatprep.subr.mxu0 0.0
    %4568 = vmatpush1.msra.mxu0 %v3914
    %4569 = vmatprep.subr.mxu0 0.0
    %4570 = vmatpush1.msra.mxu0 0.0
    %4571 = vmatprep.subr.mxu0 0.0
    %4572 = vmatpush1.msra.mxu0 0.0
    %4573 = vmatprep.subr.mxu0 0.0
    %4574 = vmatpush1.msra.mxu0 0.0
    %4575 = vmatprep.subr.mxu0 0.0
    %4576 = vmatpush1.msra.mxu0 0.0
    %4577 = vmatprep.subr.mxu0 0.0
    %4578 = vmatpush1.msra.mxu0 0.0
    %4579 = vmatprep.subr.mxu0 0.0
    %4580 = vmatpush1.msra.mxu0 0.0
    %4581 = vmatprep.subr.mxu0 0.0
    %4582 = vmatpush1.msra.mxu0 0.0
    %4583 = vmatprep.subr.mxu0 0.0
    %4584 = vmatpush1.msra.mxu0 0.0
    %4585 = vmatprep.subr.mxu0 0.0
    %4586 = vmatpush1.msra.mxu0 0.0
    %4587 = vmatprep.subr.mxu0 0.0
    %4588 = vmatpush1.msra.mxu0 0.0
    %4589 = vmatprep.subr.mxu0 0.0
    %4590 = vmatpush1.msra.mxu0 0.0
    %4591 = vmatprep.subr.mxu0 0.0
    %4592 = vmatpush1.msra.mxu0 0.0
    %4593 = vmatprep.subr.mxu0 0.0
    %4594 = vmatpush1.msra.mxu0 0.0
    %4595 = vmatprep.subr.mxu0 0.0
    %4596 = vmatpush1.msra.mxu0 0.0
    %4597 = vmatprep.subr.mxu0 0.0
    %4598 = vmatpush1.msra.mxu0 0.0
    %4599 = vmatprep.subr.mxu0 0.0
    %4600 = vmatpush1.msra.mxu0 0.0
    %4601 = vmatprep.subr.mxu0 0.0
    %4602 = vmatpush1.msra.mxu0 0.0
    %4603 = vmatprep.subr.mxu0 0.0
    %4604 = vmatpush1.msra.mxu0 0.0
    %4605 = vmatprep.subr.mxu0 0.0
    %4606 = vmatpush1.msra.mxu0 0.0
    %4607 = vmatprep.subr.mxu0 0.0
    %4608 = vmatpush1.msra.mxu0 0.0
    %4609 = vmatprep.subr.mxu0 0.0
    %4610 = vmatpush1.msra.mxu0 0.0
    %4611 = vmatprep.subr.mxu0 0.0
    %4612 = vmatpush1.msra.mxu0 0.0
    %4613 = vmatprep.subr.mxu0 0.0
    %4614 = vmatpush1.msra.mxu0 0.0
    %4615 = vmatprep.subr.mxu0 0.0
    %4616 = vmatpush1.msra.mxu0 0.0
    %4617 = vmatprep.subr.mxu0 0.0
    %4618 = vmatpush1.msra.mxu0 0.0
    %4619 = vmatprep.subr.mxu0 0.0
    %4620 = vmatpush1.msra.mxu0 0.0
    %4621 = vmatprep.subr.mxu0 0.0
    %4622 = vmatpush1.msra.mxu0 0.0
    %4623 = vmatprep.subr.mxu0 0.0
    %4624 = vmatpush1.msra.mxu0 0.0
    %4625 = vmatprep.mubr.f32.mxu0 0.0
    %4626 = vmatmul.mubr.f32.gmra.mrb[0].mxu0 %v4559
    %v4627 = vpop.f32.mrb[0].mxu0
    %v4628 = vadd.f32 0.0, %v4627
    %v4629 = vpop.f32.mrb[0].mxu0
    %4630 = vdwg.mxu0
    %v4632 = vrot.slane %v4628, 2
    %v4634 = vadd.f32 %v3910, %v4632
    %v4635 = vxor.u32 %v4634, 2147483648
    %v4636 = vmul.f32 %v4635, 1.442695
    %v4637 = vpow.pop %v4636
    %v4638 = vadd.f32 %v4637, 1.0
    %v4639 = vrcp.pop %v4638
    %v4640 = vmul.f32 1.0, %v4639
    %v4641 = vtanh.pop %v4634
    %v4643 = vrot.slane %v4546, 7
    %v4645 = vmul.f32 %v4640, %v4643
    %4647 = vrot.lane.b32.xlu0 %v4641, 64
    %v4648 = vpop.permute.xlu0 %4647
    %v4650 = vmul.f32 %v4640, %v4648
    %4652 = vrot.lane.b32.xlu0 %v4650, 32
    %v4653 = vpop.permute.xlu0 %4652
    %v4655 = vadd.f32 %v4645, %v4653
    %v4656 = vtanh.pop %v4655
    %4658 = vrot.lane.b32.xlu0 %v4656, 64
    %v4659 = vpop.permute.xlu0 %4658
    %v4661 = vmul.f32 %v4640, %v4659
    %v4663 = vrot.slane %v4661, 6
    %v4665 = vadd.f32 %v4556, %v4663
    %4666 = vrot.lane.b32.xlu0 %v4663, 32
    %v4667 = vpop.permute.xlu0 %4666
    %v4668 = vsel %vm239, %v4667, 0
    %4670 = vmatprep.subr.mxu0 0.0
    %4671 = vmatpush1.msra.mxu0 %v3911
    %4672 = vmatprep.subr.mxu0 0.0
    %4673 = vmatpush1.msra.mxu0 %v3912
    %4674 = vmatprep.subr.mxu0 0.0
    %4675 = vmatpush1.msra.mxu0 %v3913
    %4676 = vmatprep.subr.mxu0 0.0
    %4677 = vmatpush1.msra.mxu0 %v3914
    %4678 = vmatprep.subr.mxu0 0.0
    %4679 = vmatpush1.msra.mxu0 0.0
    %4680 = vmatprep.subr.mxu0 0.0
    %4681 = vmatpush1.msra.mxu0 0.0
    %4682 = vmatprep.subr.mxu0 0.0
    %4683 = vmatpush1.msra.mxu0 0.0
    %4684 = vmatprep.subr.mxu0 0.0
    %4685 = vmatpush1.msra.mxu0 0.0
    %4686 = vmatprep.subr.mxu0 0.0
    %4687 = vmatpush1.msra.mxu0 0.0
    %4688 = vmatprep.subr.mxu0 0.0
    %4689 = vmatpush1.msra.mxu0 0.0
    %4690 = vmatprep.subr.mxu0 0.0
    %4691 = vmatpush1.msra.mxu0 0.0
    %4692 = vmatprep.subr.mxu0 0.0
    %4693 = vmatpush1.msra.mxu0 0.0
    %4694 = vmatprep.subr.mxu0 0.0
    %4695 = vmatpush1.msra.mxu0 0.0
    %4696 = vmatprep.subr.mxu0 0.0
    %4697 = vmatpush1.msra.mxu0 0.0
    %4698 = vmatprep.subr.mxu0 0.0
    %4699 = vmatpush1.msra.mxu0 0.0
    %4700 = vmatprep.subr.mxu0 0.0
    %4701 = vmatpush1.msra.mxu0 0.0
    %4702 = vmatprep.subr.mxu0 0.0
    %4703 = vmatpush1.msra.mxu0 0.0
    %4704 = vmatprep.subr.mxu0 0.0
    %4705 = vmatpush1.msra.mxu0 0.0
    %4706 = vmatprep.subr.mxu0 0.0
    %4707 = vmatpush1.msra.mxu0 0.0
    %4708 = vmatprep.subr.mxu0 0.0
    %4709 = vmatpush1.msra.mxu0 0.0
    %4710 = vmatprep.subr.mxu0 0.0
    %4711 = vmatpush1.msra.mxu0 0.0
    %4712 = vmatprep.subr.mxu0 0.0
    %4713 = vmatpush1.msra.mxu0 0.0
    %4714 = vmatprep.subr.mxu0 0.0
    %4715 = vmatpush1.msra.mxu0 0.0
    %4716 = vmatprep.subr.mxu0 0.0
    %4717 = vmatpush1.msra.mxu0 0.0
    %4718 = vmatprep.subr.mxu0 0.0
    %4719 = vmatpush1.msra.mxu0 0.0
    %4720 = vmatprep.subr.mxu0 0.0
    %4721 = vmatpush1.msra.mxu0 0.0
    %4722 = vmatprep.subr.mxu0 0.0
    %4723 = vmatpush1.msra.mxu0 0.0
    %4724 = vmatprep.subr.mxu0 0.0
    %4725 = vmatpush1.msra.mxu0 0.0
    %4726 = vmatprep.subr.mxu0 0.0
    %4727 = vmatpush1.msra.mxu0 0.0
    %4728 = vmatprep.subr.mxu0 0.0
    %4729 = vmatpush1.msra.mxu0 0.0
    %4730 = vmatprep.subr.mxu0 0.0
    %4731 = vmatpush1.msra.mxu0 0.0
    %4732 = vmatprep.subr.mxu0 0.0
    %4733 = vmatpush1.msra.mxu0 0.0
    %4734 = vmatprep.mubr.f32.mxu0 0.0
    %4735 = vmatmul.mubr.f32.gmra.mrb[0].mxu0 %v4668
    %v4736 = vpop.f32.mrb[0].mxu0
    %v4737 = vadd.f32 0.0, %v4736
    %v4738 = vpop.f32.mrb[0].mxu0
    %4739 = vdwg.mxu0
    %v4741 = vrot.slane %v4737, 1
    %v4743 = vadd.f32 %v3910, %v4741
    %v4744 = vxor.u32 %v4743, 2147483648
    %v4745 = vmul.f32 %v4744, 1.442695
    %v4746 = vpow.pop %v4745
    %v4747 = vadd.f32 %v4746, 1.0
    %v4748 = vrcp.pop %v4747
    %v4749 = vmul.f32 1.0, %v4748
    %v4750 = vtanh.pop %v4743
    %v4752 = vrot.slane %v4655, 7
    %v4754 = vmul.f32 %v4749, %v4752
    %4756 = vrot.lane.b32.xlu0 %v4750, 64
    %v4757 = vpop.permute.xlu0 %4756
    %v4759 = vmul.f32 %v4749, %v4757
    %4761 = vrot.lane.b32.xlu0 %v4759, 32
    %v4762 = vpop.permute.xlu0 %4761
    %v4764 = vadd.f32 %v4754, %v4762
    %v4765 = vtanh.pop %v4764
    %4767 = vrot.lane.b32.xlu0 %v4765, 64
    %v4768 = vpop.permute.xlu0 %4767
    %v4770 = vmul.f32 %v4749, %v4768
    %v4772 = vrot.slane %v4770, 7
    %v4774 = vadd.f32 %v4665, %v4772
    %v4775 = vmul.f32 %v4774, 0.125
    %v4776 = vld [vmem:[%s22] sm:$0xff]
    %v4777 = vld [vmem:[%s22 + $0x8] sm:$0xff]
    %v4778 = vld [vmem:[%s22 + $0x10] sm:$0xff]
    %v4779 = vld [vmem:[%s22 + $0x18] sm:$0xff]
    %v4780 = vld [vmem:[%s23] sm:$0x1]
    %4782 = vrot.lane.b32.xlu0 %v4775, 32
    %v4783 = vpop.permute.xlu0 %4782
    %v4784 = vsel %vm239, %v4783, 0
    %4786 = vmatprep.subr.mxu0 0.0
    %4787 = vmatpush1.msra.mxu0 %v4776
    %4788 = vmatprep.subr.mxu0 0.0
    %4789 = vmatpush1.msra.mxu0 %v4777
    %4790 = vmatprep.subr.mxu0 0.0
    %4791 = vmatpush1.msra.mxu0 %v4778
    %4792 = vmatprep.subr.mxu0 0.0
    %4793 = vmatpush1.msra.mxu0 %v4779
    %4794 = vmatprep.subr.mxu0 0.0
    %4795 = vmatpush1.msra.mxu0 0.0
    %4796 = vmatprep.subr.mxu0 0.0
    %4797 = vmatpush1.msra.mxu0 0.0
    %4798 = vmatprep.subr.mxu0 0.0
    %4799 = vmatpush1.msra.mxu0 0.0
    %4800 = vmatprep.subr.mxu0 0.0
    %4801 = vmatpush1.msra.mxu0 0.0
    %4802 = vmatprep.subr.mxu0 0.0
    %4803 = vmatpush1.msra.mxu0 0.0
    %4804 = vmatprep.subr.mxu0 0.0
    %4805 = vmatpush1.msra.mxu0 0.0
    %4806 = vmatprep.subr.mxu0 0.0
    %4807 = vmatpush1.msra.mxu0 0.0
    %4808 = vmatprep.subr.mxu0 0.0
    %4809 = vmatpush1.msra.mxu0 0.0
    %4810 = vmatprep.subr.mxu0 0.0
    %4811 = vmatpush1.msra.mxu0 0.0
    %4812 = vmatprep.subr.mxu0 0.0
    %4813 = vmatpush1.msra.mxu0 0.0
    %4814 = vmatprep.subr.mxu0 0.0
    %4815 = vmatpush1.msra.mxu0 0.0
    %4816 = vmatprep.subr.mxu0 0.0
    %4817 = vmatpush1.msra.mxu0 0.0
    %4818 = vmatprep.subr.mxu0 0.0
    %4819 = vmatpush1.msra.mxu0 0.0
    %4820 = vmatprep.subr.mxu0 0.0
    %4821 = vmatpush1.msra.mxu0 0.0
    %4822 = vmatprep.subr.mxu0 0.0
    %4823 = vmatpush1.msra.mxu0 0.0
    %4824 = vmatprep.subr.mxu0 0.0
    %4825 = vmatpush1.msra.mxu0 0.0
    %4826 = vmatprep.subr.mxu0 0.0
    %4827 = vmatpush1.msra.mxu0 0.0
    %4828 = vmatprep.subr.mxu0 0.0
    %4829 = vmatpush1.msra.mxu0 0.0
    %4830 = vmatprep.subr.mxu0 0.0
    %4831 = vmatpush1.msra.mxu0 0.0
    %4832 = vmatprep.subr.mxu0 0.0
    %4833 = vmatpush1.msra.mxu0 0.0
    %4834 = vmatprep.subr.mxu0 0.0
    %4835 = vmatpush1.msra.mxu0 0.0
    %4836 = vmatprep.subr.mxu0 0.0
    %4837 = vmatpush1.msra.mxu0 0.0
    %4838 = vmatprep.subr.mxu0 0.0
    %4839 = vmatpush1.msra.mxu0 0.0
    %4840 = vmatprep.subr.mxu0 0.0
    %4841 = vmatpush1.msra.mxu0 0.0
    %4842 = vmatprep.subr.mxu0 0.0
    %4843 = vmatpush1.msra.mxu0 0.0
    %4844 = vmatprep.subr.mxu0 0.0
    %4845 = vmatpush1.msra.mxu0 0.0
    %4846 = vmatprep.subr.mxu0 0.0
    %4847 = vmatpush1.msra.mxu0 0.0
    %4848 = vmatprep.subr.mxu0 0.0
    %4849 = vmatpush1.msra.mxu0 0.0
    %4850 = vmatprep.mubr.f32.mxu0 0.0
    %4851 = vmatmul.mubr.f32.gmra.mrb[0].mxu0 %v4784
    %v4852 = vpop.f32.mrb[0].mxu0
    %v4853 = vadd.f32 %v4780, %v4852
    %v4854 = vpop.f32.mrb[0].mxu0
    %4855 = vdwg.mxu0
    %vm4856 = vcmask 32768
    %4857 = vst.msk [vmem:[#allocation8] sm:$0x1] %vm4856, %v4853
    // Predicated region
    $region110: #{elmo_classifier_forward.1} parent=1 // pred_check
      _
    $region111: #{elmo_classifier_forward.1} parent=1 // pred_check_branch
      %4859 = sbr.rel (0) target = $region113
    $region112: #{elmo_classifier_forward.1} parent=1 // pred_region
      %s4861 = ssub.s32 16, 16
      %4862 = vsyncadd [#allocation3], %s4861
      %s4864 = sshll.u32 [#allocation8], 4
      %s4865 = int_to_ptr.vmem [resolvable:$true] %s4864
      %4867 = dma.vmem_to_hbm [thread:$0]  %s4865, 16, %s24, [#allocation3]
    $region113: #{elmo_classifier_forward.1} parent=1 // pred_fallthru
      _
    // Predicated region
    $region114: #{elmo_classifier_forward.1} parent=1 // pred_check
      _
    $region115: #{elmo_classifier_forward.1} parent=1 // pred_check_branch
      %4869 = sbr.rel (0) target = $region117
    $region116: #{elmo_classifier_forward.1} parent=1 // pred_region
      %4870 = dma.done [#allocation3], 16
    $region117: #{elmo_classifier_forward.1} parent=1 // pred_fallthru
      _
    %4871 = vsyncpa [#allocation3], 1
    %4872 = vsyncpa [#allocation4], 1
    %4873 = vsyncpa [#allocation6], 1

</llo_original>
